<compile_context>
chip_gen: v7x
topology: tpu7x:2x2x1
jax: 0.10.0
libtpu: 0.0.40
codegen_flags: <defaults>
</compile_context>

<pallas_src>
import functools

import numpy as np
import jax
import jax.numpy as jnp
from jax import lax
from jax.experimental import pallas as pl
from jax.experimental.pallas import tpu as pltpu

LANE = 128
SUB = 8


def _ceil_to(x, m):
    return ((x + m - 1) // m) * m


# ---------------------------------------------------------------------------
# Offline packing: Conv2d / ConvTranspose2d -> (per-image row-select S_i,
# folded tap/channel matrix M_cat, bias row).  Y = act(bias + rows_cat @ M_cat)
# with rows_cat = concat_i(S_i @ X, axis=1).
# ---------------------------------------------------------------------------
def _pack_layer(w, b, *, H_in, W_in, stride, pad, out_pad, transposed):
    w = np.asarray(w, np.float32)
    b = np.asarray(b, np.float32)
    if transposed:
        Cin, Cout, kh, kw = w.shape            # PyTorch ConvTranspose2d layout
        H_out = (H_in - 1) * stride - 2 * pad + kh + out_pad
        W_out = (W_in - 1) * stride - 2 * pad + kw + out_pad
    else:
        Cout, Cin, kh, kw = w.shape            # PyTorch Conv2d layout
        H_out = (H_in + 2 * pad - kh) // stride + 1
        W_out = (W_in + 2 * pad - kw) // stride + 1

    Hi_p = _ceil_to(H_in, SUB)                 # per-image sublane padding
    Ho_p = _ceil_to(H_out, SUB)
    Ki = _ceil_to(W_in * Cin, LANE)            # lane-dense input width
    Ko = _ceil_to(W_out * Cout, LANE)          # lane-dense output width

    S = np.zeros((kh, Ho_p, Hi_p), np.float32)
    M = np.zeros((kh, Ki, Ko), np.float32)
    for i in range(kh):
        # row-selection for kernel row i (stride / pad / output_padding aware)
        for ho in range(H_out):
            if transposed:
                t = ho + pad - i
                if t % stride == 0 and 0 <= t // stride < H_in:
                    S[i, ho, t // stride] = 1.0
            else:
                h = stride * ho + i - pad
                if 0 <= h < H_in:
                    S[i, ho, h] = 1.0
        # column taps + channel mixing for kernel row i
        for j in range(kw):
            if transposed:
                blk = w[:, :, i, j]                       # [Cin, Cout]
                for wi in range(W_in):
                    wo = wi * stride - pad + j
                    if 0 <= wo < W_out:
                        M[i, wi * Cin:(wi + 1) * Cin,
                             wo * Cout:(wo + 1) * Cout] += blk
            else:
                blk = w[:, :, i, j].T                     # [Cin, Cout]
                for wo in range(W_out):
                    wi = stride * wo + j - pad
                    if 0 <= wi < W_in:
                        M[i, wi * Cin:(wi + 1) * Cin,
                             wo * Cout:(wo + 1) * Cout] += blk

    M_cat = M.reshape(kh * Ki, Ko)             # fold taps into contraction dim

    bias = np.zeros((1, Ko), np.float32)
    for wo in range(W_out):
        bias[0, wo * Cout:(wo + 1) * Cout] = b

    return dict(S=jnp.asarray(S, jnp.bfloat16),        # exact 0/1 in bf16
                M=jnp.asarray(M_cat, jnp.bfloat16),
                bias=jnp.asarray(bias, jnp.float32),
                taps=kh, H_in=H_in, W_in=W_in, Cin=Cin,
                H_out=H_out, W_out=W_out, Cout=Cout,
                Hi_p=Hi_p, Ho_p=Ho_p, Ki=Ki, Ko=Ko)


# ---------------------------------------------------------------------------
# Single fused kernel body (runs once per image / grid step).
# refs = (S1, M1, b1, ..., S6, M6, b6, out)
# ---------------------------------------------------------------------------
def _fused_ae_kernel(x_ref, *refs, taps, acts):
    out_ref = refs[-1]
    n_layers = len(taps)
    h = x_ref[...]                                   # bf16 [Hi_p0, Ki0]
    for layer in range(n_layers):
        kh, act = taps[layer], acts[layer]
        s_ref = refs[3 * layer]
        m_ref = refs[3 * layer + 1]
        b_ref = refs[3 * layer + 2]

        # kh tiny row-select matmuls (exact), concatenated along lanes ...
        rows = [jnp.dot(s_ref[i], h, preferred_element_type=jnp.float32)
                   .astype(jnp.bfloat16)
                for i in range(kh)]
        rows_cat = rows[0] if kh == 1 else jnp.concatenate(rows, axis=1)

        # ... then ONE folded MXU contraction over K = kh*Ki (fp32 accumulate)
        acc = jnp.dot(rows_cat, m_ref[...], preferred_element_type=jnp.float32)
        acc = acc + b_ref[...]                       # fp32 bias
        if act == "relu":
            acc = jnp.maximum(acc, 0.0)
        elif act == "tanh":
            acc = jnp.tanh(acc)

        if layer + 1 < n_layers:
            h = acc.astype(jnp.bfloat16)             # bf16 operands next layer
        else:
            out_ref[...] = acc.astype(out_ref.dtype)


# ---------------------------------------------------------------------------
# Build the forward function (packs weights once, outside the jit)
# ---------------------------------------------------------------------------
_LAYER_CFG = (
    # (name, stride, pad, output_padding, transposed, activation)
    ("conv1",   2, 1, 0, False, "relu"),
    ("conv2",   2, 1, 0, False, "relu"),
    ("conv3",   1, 0, 0, False, "none"),   # encoder ends without activation
    ("deconv1", 1, 0, 0, True,  "relu"),
    ("deconv2", 2, 1, 1, True,  "relu"),
    ("deconv3", 2, 1, 1, True,  "tanh"),
)


def build_forward(params, *, B, H, W, Cin):
    packed = []
    h_in, w_in, c_in = H, W, Cin
    for name, stride, pad, out_pad, transposed, act in _LAYER_CFG:
        p = _pack_layer(params[name + "_w"], params[name + "_b"],
                        H_in=h_in, W_in=w_in, stride=stride, pad=pad,
                        out_pad=out_pad, transposed=transposed)
        assert p["Cin"] == c_in, (name, p["Cin"], c_in)
        p["act"] = act
        packed.append(p)
        h_in, w_in, c_in = p["H_out"], p["W_out"], p["Cout"]

    taps = tuple(p["taps"] for p in packed)
    acts = tuple(p["act"] for p in packed)
    consts = []
    for p in packed:
        consts.extend((p["S"], p["M"], p["bias"]))
    consts = tuple(consts)

    Hp0, Kp0 = packed[0]["Hi_p"], packed[0]["Ki"]
    HpL, KoL = packed[-1]["Ho_p"], packed[-1]["Ko"]
    Hl, Wl, Cl = packed[-1]["H_out"], packed[-1]["W_out"], packed[-1]["Cout"]

    # Constants: whole-array blocks with a constant block index -> fetched
    # once and kept VMEM-resident across the batch grid.
    def _const_spec(arr):
        nd = arr.ndim
        return pl.BlockSpec(arr.shape, lambda b, _nd=nd: (0,) * _nd)

    in_specs = [pl.BlockSpec((Hp0, Kp0), lambda b: (b, 0))]     # per-image x
    in_specs += [_const_spec(c) for c in consts]
    out_spec = pl.BlockSpec((HpL, KoL), lambda b: (b, 0))       # per-image y

    # Advisory cost estimate (lets XLA schedule wrapper glue around the call).
    flops = 0
    for p in packed:
        flops += 2 * p["taps"] * p["Ho_p"] * p["Hi_p"] * p["Ki"]
        flops += 2 * p["Ho_p"] * (p["taps"] * p["Ki"]) * p["Ko"]
    flops *= B
    const_bytes = sum(int(np.prod(c.shape)) * c.dtype.itemsize for c in consts)
    bytes_accessed = const_bytes + B * Hp0 * Kp0 * 2 + B * HpL * KoL * 4
    cost = pl.CostEstimate(flops=int(flops),
                           transcendentals=int(B * HpL * KoL),
                           bytes_accessed=int(bytes_accessed))

    kernel = functools.partial(_fused_ae_kernel, taps=taps, acts=acts)
    fused_call = pl.pallas_call(
        kernel,
        out_shape=jax.ShapeDtypeStruct((B * HpL, KoL), jnp.float32),
        grid=(B,),                               # batch grid: megacore-shardable
        in_specs=in_specs,
        out_specs=out_spec,
        compiler_params=pltpu.CompilerParams(
            dimension_semantics=("parallel",),
            vmem_limit_bytes=32 * 1024 * 1024),
        cost_estimate=cost,
    )

    @jax.jit
    def forward(x):
        b, c, hh, ww = x.shape
        # NCHW -> channels-last rows [B, H, W*C], padded to (8,128) slab, bf16.
        xr = jnp.transpose(x, (0, 2, 3, 1)).reshape(b, hh, ww * c)
        xr = jnp.pad(xr, ((0, 0), (0, Hp0 - hh), (0, Kp0 - ww * c)))
        xr = xr.reshape(b * Hp0, Kp0).astype(jnp.bfloat16)
        y = fused_call(xr, *consts)
        # strip padding; back to NCHW at the module boundary only.
        y = y.reshape(b, HpL, KoL)[:, :Hl, :Wl * Cl]
        y = y.reshape(b, Hl, Wl, Cl)
        return jnp.transpose(y, (0, 3, 1, 2))

    return forward


# ---------------------------------------------------------------------------
# Deterministic parameters (PyTorch layouts)
# ---------------------------------------------------------------------------
def init_params(key):
    def t(k, shape, fan_in):
        return jax.random.normal(k, shape, jnp.float32) / np.sqrt(fan_in)

    ks = jax.random.split(key, 12)
    return {
        # encoder: Conv2d weights [Cout, Cin, kh, kw]
        "conv1_w": t(ks[0], (16, 1, 3, 3), 1 * 3 * 3),
        "conv1_b": t(ks[1], (16,), 1 * 3 * 3),
        "conv2_w": t(ks[2], (32, 16, 3, 3), 16 * 3 * 3),
        "conv2_b": t(ks[3], (32,), 16 * 3 * 3),
        "conv3_w": t(ks[4], (64, 32, 7, 7), 32 * 7 * 7),
        "conv3_b": t(ks[5], (64,), 32 * 7 * 7),
        # decoder: ConvTranspose2d weights [Cin, Cout, kh, kw]
        "deconv1_w": t(ks[6], (64, 32, 7, 7), 64 * 7 * 7),
        "deconv1_b": t(ks[7], (32,), 64 * 7 * 7),
        "deconv2_w": t(ks[8], (32, 16, 3, 3), 32 * 3 * 3),
        "deconv2_b": t(ks[9], (16,), 32 * 3 * 3),
        "deconv3_w": t(ks[10], (16, 1, 3, 3), 16 * 3 * 3),
        "deconv3_b": t(ks[11], (1,), 16 * 3 * 3),
    }


# ---------------------------------------------------------------------------
# Pure-JAX reference with PyTorch Conv2d / ConvTranspose2d semantics
# ---------------------------------------------------------------------------
def _reference_forward(params, x):
    def conv(h, w, b, stride, pad):
        y = lax.conv_general_dilated(
            h, w, window_strides=(stride, stride),
            padding=[(pad, pad), (pad, pad)],
            dimension_numbers=("NCHW", "OIHW", "NCHW"),
            precision=lax.Precision.HIGHEST)
        return y + b[None, :, None, None]

    def deconv(h, w, b, stride, pad, out_pad):
        kh, kw = w.shape[2], w.shape[3]
        wt = jnp.flip(w, (2, 3)).transpose(1, 0, 2, 3)   # -> [Cout, Cin, kh, kw]
        y = lax.conv_general_dilated(
            h, wt, window_strides=(1, 1),
            padding=[(kh - 1 - pad, kh - 1 - pad + out_pad),
                     (kw - 1 - pad, kw - 1 - pad + out_pad)],
            lhs_dilation=(stride, stride),
            dimension_numbers=("NCHW", "OIHW", "NCHW"),
            precision=lax.Precision.HIGHEST)
        return y + b[None, :, None, None]

    h = jax.nn.relu(conv(x, params["conv1_w"], params["conv1_b"], 2, 1))
    h = jax.nn.relu(conv(h, params["conv2_w"], params["conv2_b"], 2, 1))
    h = conv(h, params["conv3_w"], params["conv3_b"], 1, 0)
    h = jax.nn.relu(deconv(h, params["deconv1_w"], params["deconv1_b"], 1, 0, 0))
    h = jax.nn.relu(deconv(h, params["deconv2_w"], params["deconv2_b"], 2, 1, 1))
    h = jnp.tanh(deconv(h, params["deconv3_w"], params["deconv3_b"], 2, 1, 1))
    return h


if __name__ == "__main__":
    key = jax.random.PRNGKey(0)
    k_param, k_x = jax.random.split(key)
    params = init_params(k_param)

    B, C, H, W = 2, 1, 28, 28          # shapes implied by Conv2d(1,16,..)/Conv2d(32,64,7)
    x = jax.random.normal(k_x, (B, C, H, W), jnp.float32)

    forward = build_forward(params, B=B, H=H, W=W, Cin=C)
    out = forward(x)
    jax.block_until_ready(out)

    assert out.shape == (B, C, H, W), out.shape
    assert bool(jnp.all(jnp.isfinite(out)))

    # check against pure-JAX PyTorch-semantics reference (bf16 operands,
    # fp32 accumulation -> well inside 3e-2)
    ref = _reference_forward(params, x)
    np.testing.assert_allclose(np.asarray(out), np.asarray(ref), rtol=3e-2, atol=3e-2)

    print("KERNEL_OK")
</pallas_src>

<mosaic_0001>
module attributes {stable_mosaic.version = 11 : i64} {
  func.func @_fused_ae_kernel(%arg0: i32, %arg1: memref<32x128xbf16, #tpu.memory_space<vmem>>, %arg2: memref<3x16x32xbf16, #tpu.memory_space<vmem>>, %arg3: memref<384x256xbf16, #tpu.memory_space<vmem>>, %arg4: memref<1x256xf32, #tpu.memory_space<vmem>>, %arg5: memref<3x8x16xbf16, #tpu.memory_space<vmem>>, %arg6: memref<768x256xbf16, #tpu.memory_space<vmem>>, %arg7: memref<1x256xf32, #tpu.memory_space<vmem>>, %arg8: memref<7x8x8xbf16, #tpu.memory_space<vmem>>, %arg9: memref<1792x128xbf16, #tpu.memory_space<vmem>>, %arg10: memref<1x128xf32, #tpu.memory_space<vmem>>, %arg11: memref<7x8x8xbf16, #tpu.memory_space<vmem>>, %arg12: memref<896x256xbf16, #tpu.memory_space<vmem>>, %arg13: memref<1x256xf32, #tpu.memory_space<vmem>>, %arg14: memref<3x16x8xbf16, #tpu.memory_space<vmem>>, %arg15: memref<768x256xbf16, #tpu.memory_space<vmem>>, %arg16: memref<1x256xf32, #tpu.memory_space<vmem>>, %arg17: memref<3x32x16xbf16, #tpu.memory_space<vmem>>, %arg18: memref<768x128xbf16, #tpu.memory_space<vmem>>, %arg19: memref<1x128xf32, #tpu.memory_space<vmem>>, %arg20: memref<32x128xf32, #tpu.memory_space<vmem>>) attributes {dimension_semantics = [#tpu.dimension_semantics<parallel>], iteration_bounds = array<i64: 2>, scalar_prefetch = 0 : i64, scratch_operands = 0 : i64, tpu.core_type = #tpu.core_type<tc>, window_params = [{transform_indices = @transform_0, window_bounds = array<i64: 32, 128>}, {pipeline_mode = #tpu.pipeline_mode<synchronous>, transform_indices = @transform_1, window_bounds = array<i64: 3, 16, 32>}, {pipeline_mode = #tpu.pipeline_mode<synchronous>, transform_indices = @transform_2, window_bounds = array<i64: 384, 256>}, {pipeline_mode = #tpu.pipeline_mode<synchronous>, transform_indices = @transform_3, window_bounds = array<i64: 1, 256>}, {pipeline_mode = #tpu.pipeline_mode<synchronous>, transform_indices = @transform_4, window_bounds = array<i64: 3, 8, 16>}, {pipeline_mode = #tpu.pipeline_mode<synchronous>, transform_indices = @transform_5, window_bounds = array<i64: 768, 256>}, {pipeline_mode = #tpu.pipeline_mode<synchronous>, transform_indices = @transform_6, window_bounds = array<i64: 1, 256>}, {pipeline_mode = #tpu.pipeline_mode<synchronous>, transform_indices = @transform_7, window_bounds = array<i64: 7, 8, 8>}, {pipeline_mode = #tpu.pipeline_mode<synchronous>, transform_indices = @transform_8, window_bounds = array<i64: 1792, 128>}, {pipeline_mode = #tpu.pipeline_mode<synchronous>, transform_indices = @transform_9, window_bounds = array<i64: 1, 128>}, {pipeline_mode = #tpu.pipeline_mode<synchronous>, transform_indices = @transform_10, window_bounds = array<i64: 7, 8, 8>}, {pipeline_mode = #tpu.pipeline_mode<synchronous>, transform_indices = @transform_11, window_bounds = array<i64: 896, 256>}, {pipeline_mode = #tpu.pipeline_mode<synchronous>, transform_indices = @transform_12, window_bounds = array<i64: 1, 256>}, {pipeline_mode = #tpu.pipeline_mode<synchronous>, transform_indices = @transform_13, window_bounds = array<i64: 3, 16, 8>}, {pipeline_mode = #tpu.pipeline_mode<synchronous>, transform_indices = @transform_14, window_bounds = array<i64: 768, 256>}, {pipeline_mode = #tpu.pipeline_mode<synchronous>, transform_indices = @transform_15, window_bounds = array<i64: 1, 256>}, {pipeline_mode = #tpu.pipeline_mode<synchronous>, transform_indices = @transform_16, window_bounds = array<i64: 3, 32, 16>}, {pipeline_mode = #tpu.pipeline_mode<synchronous>, transform_indices = @transform_17, window_bounds = array<i64: 768, 128>}, {pipeline_mode = #tpu.pipeline_mode<synchronous>, transform_indices = @transform_18, window_bounds = array<i64: 1, 128>}, {transform_indices = @transform_19, window_bounds = array<i64: 32, 128>}]} {
    %c0 = arith.constant 0 : index
    %c0_0 = arith.constant 0 : index
    %0 = vector.load %arg1[%c0, %c0_0] : memref<32x128xbf16, #tpu.memory_space<vmem>>, vector<32x128xbf16>
    %c0_1 = arith.constant 0 : index
    %c0_2 = arith.constant 0 : index
    %c0_3 = arith.constant 0 : index
    %1 = vector.load %arg2[%c0_1, %c0_2, %c0_3] : memref<3x16x32xbf16, #tpu.memory_space<vmem>>, vector<1x16x32xbf16>
    %2 = vector.shape_cast %1 : vector<1x16x32xbf16> to vector<16x32xbf16>
    %cst = arith.constant dense<0.000000e+00> : vector<16x128xf32>
    %3 = tpu.matmul %2, %0, %cst {dimension_numbers = #tpu.dot_dimension_numbers<[1], [0], [0], [1], [0, 0, 1, 1], [], []>} : vector<16x32xbf16>, vector<32x128xbf16>, vector<16x128xf32> -> vector<16x128xf32>
    %4 = arith.truncf %3 : vector<16x128xf32> to vector<16x128xbf16>
    %c1 = arith.constant 1 : index
    %c0_4 = arith.constant 0 : index
    %c0_5 = arith.constant 0 : index
    %5 = vector.load %arg2[%c1, %c0_4, %c0_5] : memref<3x16x32xbf16, #tpu.memory_space<vmem>>, vector<1x16x32xbf16>
    %6 = vector.shape_cast %5 : vector<1x16x32xbf16> to vector<16x32xbf16>
    %cst_6 = arith.constant dense<0.000000e+00> : vector<16x128xf32>
    %7 = tpu.matmul %6, %0, %cst_6 {dimension_numbers = #tpu.dot_dimension_numbers<[1], [0], [0], [1], [0, 0, 1, 1], [], []>} : vector<16x32xbf16>, vector<32x128xbf16>, vector<16x128xf32> -> vector<16x128xf32>
    %8 = arith.truncf %7 : vector<16x128xf32> to vector<16x128xbf16>
    %c2 = arith.constant 2 : index
    %c0_7 = arith.constant 0 : index
    %c0_8 = arith.constant 0 : index
    %9 = vector.load %arg2[%c2, %c0_7, %c0_8] : memref<3x16x32xbf16, #tpu.memory_space<vmem>>, vector<1x16x32xbf16>
    %10 = vector.shape_cast %9 : vector<1x16x32xbf16> to vector<16x32xbf16>
    %cst_9 = arith.constant dense<0.000000e+00> : vector<16x128xf32>
    %11 = tpu.matmul %10, %0, %cst_9 {dimension_numbers = #tpu.dot_dimension_numbers<[1], [0], [0], [1], [0, 0, 1, 1], [], []>} : vector<16x32xbf16>, vector<32x128xbf16>, vector<16x128xf32> -> vector<16x128xf32>
    %12 = arith.truncf %11 : vector<16x128xf32> to vector<16x128xbf16>
    %13 = tpu.concatenate %4, %8, %12 in 1 : vector<16x128xbf16>, vector<16x128xbf16>, vector<16x128xbf16> -> vector<16x384xbf16>
    %c0_10 = arith.constant 0 : index
    %c0_11 = arith.constant 0 : index
    %14 = vector.load %arg3[%c0_10, %c0_11] : memref<384x256xbf16, #tpu.memory_space<vmem>>, vector<384x256xbf16>
    %cst_12 = arith.constant dense<0.000000e+00> : vector<16x256xf32>
    %15 = tpu.matmul %13, %14, %cst_12 {dimension_numbers = #tpu.dot_dimension_numbers<[1], [0], [0], [1], [0, 0, 1, 1], [], []>} : vector<16x384xbf16>, vector<384x256xbf16>, vector<16x256xf32> -> vector<16x256xf32>
    %c0_13 = arith.constant 0 : index
    %c0_14 = arith.constant 0 : index
    %16 = vector.load %arg4[%c0_13, %c0_14] : memref<1x256xf32, #tpu.memory_space<vmem>>, vector<1x256xf32>
    %17 = vector.broadcast %16 : vector<1x256xf32> to vector<16x256xf32>
    %18 = arith.addf %15, %17 : vector<16x256xf32>
    %cst_15 = arith.constant 0.000000e+00 : f32
    %19 = vector.broadcast %cst_15 : f32 to vector<16x256xf32>
    %20 = arith.maximumf %18, %19 : vector<16x256xf32>
    %21 = arith.truncf %20 : vector<16x256xf32> to vector<16x256xbf16>
    %c0_16 = arith.constant 0 : index
    %c0_17 = arith.constant 0 : index
    %c0_18 = arith.constant 0 : index
    %22 = vector.load %arg5[%c0_16, %c0_17, %c0_18] : memref<3x8x16xbf16, #tpu.memory_space<vmem>>, vector<1x8x16xbf16>
    %23 = vector.shape_cast %22 : vector<1x8x16xbf16> to vector<8x16xbf16>
    %cst_19 = arith.constant dense<0.000000e+00> : vector<8x256xf32>
    %24 = tpu.matmul %23, %21, %cst_19 {dimension_numbers = #tpu.dot_dimension_numbers<[1], [0], [0], [1], [0, 0, 1, 1], [], []>} : vector<8x16xbf16>, vector<16x256xbf16>, vector<8x256xf32> -> vector<8x256xf32>
    %25 = arith.truncf %24 : vector<8x256xf32> to vector<8x256xbf16>
    %c1_20 = arith.constant 1 : index
    %c0_21 = arith.constant 0 : index
    %c0_22 = arith.constant 0 : index
    %26 = vector.load %arg5[%c1_20, %c0_21, %c0_22] : memref<3x8x16xbf16, #tpu.memory_space<vmem>>, vector<1x8x16xbf16>
    %27 = vector.shape_cast %26 : vector<1x8x16xbf16> to vector<8x16xbf16>
    %cst_23 = arith.constant dense<0.000000e+00> : vector<8x256xf32>
    %28 = tpu.matmul %27, %21, %cst_23 {dimension_numbers = #tpu.dot_dimension_numbers<[1], [0], [0], [1], [0, 0, 1, 1], [], []>} : vector<8x16xbf16>, vector<16x256xbf16>, vector<8x256xf32> -> vector<8x256xf32>
    %29 = arith.truncf %28 : vector<8x256xf32> to vector<8x256xbf16>
    %c2_24 = arith.constant 2 : index
    %c0_25 = arith.constant 0 : index
    %c0_26 = arith.constant 0 : index
    %30 = vector.load %arg5[%c2_24, %c0_25, %c0_26] : memref<3x8x16xbf16, #tpu.memory_space<vmem>>, vector<1x8x16xbf16>
    %31 = vector.shape_cast %30 : vector<1x8x16xbf16> to vector<8x16xbf16>
    %cst_27 = arith.constant dense<0.000000e+00> : vector<8x256xf32>
    %32 = tpu.matmul %31, %21, %cst_27 {dimension_numbers = #tpu.dot_dimension_numbers<[1], [0], [0], [1], [0, 0, 1, 1], [], []>} : vector<8x16xbf16>, vector<16x256xbf16>, vector<8x256xf32> -> vector<8x256xf32>
    %33 = arith.truncf %32 : vector<8x256xf32> to vector<8x256xbf16>
    %34 = tpu.concatenate %25, %29, %33 in 1 : vector<8x256xbf16>, vector<8x256xbf16>, vector<8x256xbf16> -> vector<8x768xbf16>
    %c0_28 = arith.constant 0 : index
    %c0_29 = arith.constant 0 : index
    %35 = vector.load %arg6[%c0_28, %c0_29] : memref<768x256xbf16, #tpu.memory_space<vmem>>, vector<768x256xbf16>
    %cst_30 = arith.constant dense<0.000000e+00> : vector<8x256xf32>
    %36 = tpu.matmul %34, %35, %cst_30 {dimension_numbers = #tpu.dot_dimension_numbers<[1], [0], [0], [1], [0, 0, 1, 1], [], []>} : vector<8x768xbf16>, vector<768x256xbf16>, vector<8x256xf32> -> vector<8x256xf32>
    %c0_31 = arith.constant 0 : index
    %c0_32 = arith.constant 0 : index
    %37 = vector.load %arg7[%c0_31, %c0_32] : memref<1x256xf32, #tpu.memory_space<vmem>>, vector<1x256xf32>
    %38 = vector.broadcast %37 : vector<1x256xf32> to vector<8x256xf32>
    %39 = arith.addf %36, %38 : vector<8x256xf32>
    %cst_33 = arith.constant 0.000000e+00 : f32
    %40 = vector.broadcast %cst_33 : f32 to vector<8x256xf32>
    %41 = arith.maximumf %39, %40 : vector<8x256xf32>
    %42 = arith.truncf %41 : vector<8x256xf32> to vector<8x256xbf16>
    %c0_34 = arith.constant 0 : index
    %c0_35 = arith.constant 0 : index
    %c0_36 = arith.constant 0 : index
    %43 = vector.load %arg8[%c0_34, %c0_35, %c0_36] : memref<7x8x8xbf16, #tpu.memory_space<vmem>>, vector<1x8x8xbf16>
    %44 = vector.shape_cast %43 : vector<1x8x8xbf16> to vector<8x8xbf16>
    %cst_37 = arith.constant dense<0.000000e+00> : vector<8x256xf32>
    %45 = tpu.matmul %44, %42, %cst_37 {dimension_numbers = #tpu.dot_dimension_numbers<[1], [0], [0], [1], [0, 0, 1, 1], [], []>} : vector<8x8xbf16>, vector<8x256xbf16>, vector<8x256xf32> -> vector<8x256xf32>
    %46 = arith.truncf %45 : vector<8x256xf32> to vector<8x256xbf16>
    %c1_38 = arith.constant 1 : index
    %c0_39 = arith.constant 0 : index
    %c0_40 = arith.constant 0 : index
    %47 = vector.load %arg8[%c1_38, %c0_39, %c0_40] : memref<7x8x8xbf16, #tpu.memory_space<vmem>>, vector<1x8x8xbf16>
    %48 = vector.shape_cast %47 : vector<1x8x8xbf16> to vector<8x8xbf16>
    %cst_41 = arith.constant dense<0.000000e+00> : vector<8x256xf32>
    %49 = tpu.matmul %48, %42, %cst_41 {dimension_numbers = #tpu.dot_dimension_numbers<[1], [0], [0], [1], [0, 0, 1, 1], [], []>} : vector<8x8xbf16>, vector<8x256xbf16>, vector<8x256xf32> -> vector<8x256xf32>
    %50 = arith.truncf %49 : vector<8x256xf32> to vector<8x256xbf16>
    %c2_42 = arith.constant 2 : index
    %c0_43 = arith.constant 0 : index
    %c0_44 = arith.constant 0 : index
    %51 = vector.load %arg8[%c2_42, %c0_43, %c0_44] : memref<7x8x8xbf16, #tpu.memory_space<vmem>>, vector<1x8x8xbf16>
    %52 = vector.shape_cast %51 : vector<1x8x8xbf16> to vector<8x8xbf16>
    %cst_45 = arith.constant dense<0.000000e+00> : vector<8x256xf32>
    %53 = tpu.matmul %52, %42, %cst_45 {dimension_numbers = #tpu.dot_dimension_numbers<[1], [0], [0], [1], [0, 0, 1, 1], [], []>} : vector<8x8xbf16>, vector<8x256xbf16>, vector<8x256xf32> -> vector<8x256xf32>
    %54 = arith.truncf %53 : vector<8x256xf32> to vector<8x256xbf16>
    %c3 = arith.constant 3 : index
    %c0_46 = arith.constant 0 : index
    %c0_47 = arith.constant 0 : index
    %55 = vector.load %arg8[%c3, %c0_46, %c0_47] : memref<7x8x8xbf16, #tpu.memory_space<vmem>>, vector<1x8x8xbf16>
    %56 = vector.shape_cast %55 : vector<1x8x8xbf16> to vector<8x8xbf16>
    %cst_48 = arith.constant dense<0.000000e+00> : vector<8x256xf32>
    %57 = tpu.matmul %56, %42, %cst_48 {dimension_numbers = #tpu.dot_dimension_numbers<[1], [0], [0], [1], [0, 0, 1, 1], [], []>} : vector<8x8xbf16>, vector<8x256xbf16>, vector<8x256xf32> -> vector<8x256xf32>
    %58 = arith.truncf %57 : vector<8x256xf32> to vector<8x256xbf16>
    %c4 = arith.constant 4 : index
    %c0_49 = arith.constant 0 : index
    %c0_50 = arith.constant 0 : index
    %59 = vector.load %arg8[%c4, %c0_49, %c0_50] : memref<7x8x8xbf16, #tpu.memory_space<vmem>>, vector<1x8x8xbf16>
    %60 = vector.shape_cast %59 : vector<1x8x8xbf16> to vector<8x8xbf16>
    %cst_51 = arith.constant dense<0.000000e+00> : vector<8x256xf32>
    %61 = tpu.matmul %60, %42, %cst_51 {dimension_numbers = #tpu.dot_dimension_numbers<[1], [0], [0], [1], [0, 0, 1, 1], [], []>} : vector<8x8xbf16>, vector<8x256xbf16>, vector<8x256xf32> -> vector<8x256xf32>
    %62 = arith.truncf %61 : vector<8x256xf32> to vector<8x256xbf16>
    %c5 = arith.constant 5 : index
    %c0_52 = arith.constant 0 : index
    %c0_53 = arith.constant 0 : index
    %63 = vector.load %arg8[%c5, %c0_52, %c0_53] : memref<7x8x8xbf16, #tpu.memory_space<vmem>>, vector<1x8x8xbf16>
    %64 = vector.shape_cast %63 : vector<1x8x8xbf16> to vector<8x8xbf16>
    %cst_54 = arith.constant dense<0.000000e+00> : vector<8x256xf32>
    %65 = tpu.matmul %64, %42, %cst_54 {dimension_numbers = #tpu.dot_dimension_numbers<[1], [0], [0], [1], [0, 0, 1, 1], [], []>} : vector<8x8xbf16>, vector<8x256xbf16>, vector<8x256xf32> -> vector<8x256xf32>
    %66 = arith.truncf %65 : vector<8x256xf32> to vector<8x256xbf16>
    %c6 = arith.constant 6 : index
    %c0_55 = arith.constant 0 : index
    %c0_56 = arith.constant 0 : index
    %67 = vector.load %arg8[%c6, %c0_55, %c0_56] : memref<7x8x8xbf16, #tpu.memory_space<vmem>>, vector<1x8x8xbf16>
    %68 = vector.shape_cast %67 : vector<1x8x8xbf16> to vector<8x8xbf16>
    %cst_57 = arith.constant dense<0.000000e+00> : vector<8x256xf32>
    %69 = tpu.matmul %68, %42, %cst_57 {dimension_numbers = #tpu.dot_dimension_numbers<[1], [0], [0], [1], [0, 0, 1, 1], [], []>} : vector<8x8xbf16>, vector<8x256xbf16>, vector<8x256xf32> -> vector<8x256xf32>
    %70 = arith.truncf %69 : vector<8x256xf32> to vector<8x256xbf16>
    %71 = tpu.concatenate %46, %50, %54, %58, %62, %66, %70 in 1 : vector<8x256xbf16>, vector<8x256xbf16>, vector<8x256xbf16>, vector<8x256xbf16>, vector<8x256xbf16>, vector<8x256xbf16>, vector<8x256xbf16> -> vector<8x1792xbf16>
    %c0_58 = arith.constant 0 : index
    %c0_59 = arith.constant 0 : index
    %72 = vector.load %arg9[%c0_58, %c0_59] : memref<1792x128xbf16, #tpu.memory_space<vmem>>, vector<1792x128xbf16>
    %cst_60 = arith.constant dense<0.000000e+00> : vector<8x128xf32>
    %73 = tpu.matmul %71, %72, %cst_60 {dimension_numbers = #tpu.dot_dimension_numbers<[1], [0], [0], [1], [0, 0, 1, 1], [], []>} : vector<8x1792xbf16>, vector<1792x128xbf16>, vector<8x128xf32> -> vector<8x128xf32>
    %c0_61 = arith.constant 0 : index
    %c0_62 = arith.constant 0 : index
    %74 = vector.load %arg10[%c0_61, %c0_62] : memref<1x128xf32, #tpu.memory_space<vmem>>, vector<1x128xf32>
    %75 = vector.broadcast %74 : vector<1x128xf32> to vector<8x128xf32>
    %76 = arith.addf %73, %75 : vector<8x128xf32>
    %77 = arith.truncf %76 : vector<8x128xf32> to vector<8x128xbf16>
    %c0_63 = arith.constant 0 : index
    %c0_64 = arith.constant 0 : index
    %c0_65 = arith.constant 0 : index
    %78 = vector.load %arg11[%c0_63, %c0_64, %c0_65] : memref<7x8x8xbf16, #tpu.memory_space<vmem>>, vector<1x8x8xbf16>
    %79 = vector.shape_cast %78 : vector<1x8x8xbf16> to vector<8x8xbf16>
    %cst_66 = arith.constant dense<0.000000e+00> : vector<8x128xf32>
    %80 = tpu.matmul %79, %77, %cst_66 {dimension_numbers = #tpu.dot_dimension_numbers<[1], [0], [0], [1], [0, 0, 1, 1], [], []>} : vector<8x8xbf16>, vector<8x128xbf16>, vector<8x128xf32> -> vector<8x128xf32>
    %81 = arith.truncf %80 : vector<8x128xf32> to vector<8x128xbf16>
    %c1_67 = arith.constant 1 : index
    %c0_68 = arith.constant 0 : index
    %c0_69 = arith.constant 0 : index
    %82 = vector.load %arg11[%c1_67, %c0_68, %c0_69] : memref<7x8x8xbf16, #tpu.memory_space<vmem>>, vector<1x8x8xbf16>
    %83 = vector.shape_cast %82 : vector<1x8x8xbf16> to vector<8x8xbf16>
    %cst_70 = arith.constant dense<0.000000e+00> : vector<8x128xf32>
    %84 = tpu.matmul %83, %77, %cst_70 {dimension_numbers = #tpu.dot_dimension_numbers<[1], [0], [0], [1], [0, 0, 1, 1], [], []>} : vector<8x8xbf16>, vector<8x128xbf16>, vector<8x128xf32> -> vector<8x128xf32>
    %85 = arith.truncf %84 : vector<8x128xf32> to vector<8x128xbf16>
    %c2_71 = arith.constant 2 : index
    %c0_72 = arith.constant 0 : index
    %c0_73 = arith.constant 0 : index
    %86 = vector.load %arg11[%c2_71, %c0_72, %c0_73] : memref<7x8x8xbf16, #tpu.memory_space<vmem>>, vector<1x8x8xbf16>
    %87 = vector.shape_cast %86 : vector<1x8x8xbf16> to vector<8x8xbf16>
    %cst_74 = arith.constant dense<0.000000e+00> : vector<8x128xf32>
    %88 = tpu.matmul %87, %77, %cst_74 {dimension_numbers = #tpu.dot_dimension_numbers<[1], [0], [0], [1], [0, 0, 1, 1], [], []>} : vector<8x8xbf16>, vector<8x128xbf16>, vector<8x128xf32> -> vector<8x128xf32>
    %89 = arith.truncf %88 : vector<8x128xf32> to vector<8x128xbf16>
    %c3_75 = arith.constant 3 : index
    %c0_76 = arith.constant 0 : index
    %c0_77 = arith.constant 0 : index
    %90 = vector.load %arg11[%c3_75, %c0_76, %c0_77] : memref<7x8x8xbf16, #tpu.memory_space<vmem>>, vector<1x8x8xbf16>
    %91 = vector.shape_cast %90 : vector<1x8x8xbf16> to vector<8x8xbf16>
    %cst_78 = arith.constant dense<0.000000e+00> : vector<8x128xf32>
    %92 = tpu.matmul %91, %77, %cst_78 {dimension_numbers = #tpu.dot_dimension_numbers<[1], [0], [0], [1], [0, 0, 1, 1], [], []>} : vector<8x8xbf16>, vector<8x128xbf16>, vector<8x128xf32> -> vector<8x128xf32>
    %93 = arith.truncf %92 : vector<8x128xf32> to vector<8x128xbf16>
    %c4_79 = arith.constant 4 : index
    %c0_80 = arith.constant 0 : index
    %c0_81 = arith.constant 0 : index
    %94 = vector.load %arg11[%c4_79, %c0_80, %c0_81] : memref<7x8x8xbf16, #tpu.memory_space<vmem>>, vector<1x8x8xbf16>
    %95 = vector.shape_cast %94 : vector<1x8x8xbf16> to vector<8x8xbf16>
    %cst_82 = arith.constant dense<0.000000e+00> : vector<8x128xf32>
    %96 = tpu.matmul %95, %77, %cst_82 {dimension_numbers = #tpu.dot_dimension_numbers<[1], [0], [0], [1], [0, 0, 1, 1], [], []>} : vector<8x8xbf16>, vector<8x128xbf16>, vector<8x128xf32> -> vector<8x128xf32>
    %97 = arith.truncf %96 : vector<8x128xf32> to vector<8x128xbf16>
    %c5_83 = arith.constant 5 : index
    %c0_84 = arith.constant 0 : index
    %c0_85 = arith.constant 0 : index
    %98 = vector.load %arg11[%c5_83, %c0_84, %c0_85] : memref<7x8x8xbf16, #tpu.memory_space<vmem>>, vector<1x8x8xbf16>
    %99 = vector.shape_cast %98 : vector<1x8x8xbf16> to vector<8x8xbf16>
    %cst_86 = arith.constant dense<0.000000e+00> : vector<8x128xf32>
    %100 = tpu.matmul %99, %77, %cst_86 {dimension_numbers = #tpu.dot_dimension_numbers<[1], [0], [0], [1], [0, 0, 1, 1], [], []>} : vector<8x8xbf16>, vector<8x128xbf16>, vector<8x128xf32> -> vector<8x128xf32>
    %101 = arith.truncf %100 : vector<8x128xf32> to vector<8x128xbf16>
    %c6_87 = arith.constant 6 : index
    %c0_88 = arith.constant 0 : index
    %c0_89 = arith.constant 0 : index
    %102 = vector.load %arg11[%c6_87, %c0_88, %c0_89] : memref<7x8x8xbf16, #tpu.memory_space<vmem>>, vector<1x8x8xbf16>
    %103 = vector.shape_cast %102 : vector<1x8x8xbf16> to vector<8x8xbf16>
    %cst_90 = arith.constant dense<0.000000e+00> : vector<8x128xf32>
    %104 = tpu.matmul %103, %77, %cst_90 {dimension_numbers = #tpu.dot_dimension_numbers<[1], [0], [0], [1], [0, 0, 1, 1], [], []>} : vector<8x8xbf16>, vector<8x128xbf16>, vector<8x128xf32> -> vector<8x128xf32>
    %105 = arith.truncf %104 : vector<8x128xf32> to vector<8x128xbf16>
    %106 = tpu.concatenate %81, %85, %89, %93, %97, %101, %105 in 1 : vector<8x128xbf16>, vector<8x128xbf16>, vector<8x128xbf16>, vector<8x128xbf16>, vector<8x128xbf16>, vector<8x128xbf16>, vector<8x128xbf16> -> vector<8x896xbf16>
    %c0_91 = arith.constant 0 : index
    %c0_92 = arith.constant 0 : index
    %107 = vector.load %arg12[%c0_91, %c0_92] : memref<896x256xbf16, #tpu.memory_space<vmem>>, vector<896x256xbf16>
    %cst_93 = arith.constant dense<0.000000e+00> : vector<8x256xf32>
    %108 = tpu.matmul %106, %107, %cst_93 {dimension_numbers = #tpu.dot_dimension_numbers<[1], [0], [0], [1], [0, 0, 1, 1], [], []>} : vector<8x896xbf16>, vector<896x256xbf16>, vector<8x256xf32> -> vector<8x256xf32>
    %c0_94 = arith.constant 0 : index
    %c0_95 = arith.constant 0 : index
    %109 = vector.load %arg13[%c0_94, %c0_95] : memref<1x256xf32, #tpu.memory_space<vmem>>, vector<1x256xf32>
    %110 = vector.broadcast %109 : vector<1x256xf32> to vector<8x256xf32>
    %111 = arith.addf %108, %110 : vector<8x256xf32>
    %cst_96 = arith.constant 0.000000e+00 : f32
    %112 = vector.broadcast %cst_96 : f32 to vector<8x256xf32>
    %113 = arith.maximumf %111, %112 : vector<8x256xf32>
    %114 = arith.truncf %113 : vector<8x256xf32> to vector<8x256xbf16>
    %c0_97 = arith.constant 0 : index
    %c0_98 = arith.constant 0 : index
    %c0_99 = arith.constant 0 : index
    %115 = vector.load %arg14[%c0_97, %c0_98, %c0_99] : memref<3x16x8xbf16, #tpu.memory_space<vmem>>, vector<1x16x8xbf16>
    %116 = vector.shape_cast %115 : vector<1x16x8xbf16> to vector<16x8xbf16>
    %cst_100 = arith.constant dense<0.000000e+00> : vector<16x256xf32>
    %117 = tpu.matmul %116, %114, %cst_100 {dimension_numbers = #tpu.dot_dimension_numbers<[1], [0], [0], [1], [0, 0, 1, 1], [], []>} : vector<16x8xbf16>, vector<8x256xbf16>, vector<16x256xf32> -> vector<16x256xf32>
    %118 = arith.truncf %117 : vector<16x256xf32> to vector<16x256xbf16>
    %c1_101 = arith.constant 1 : index
    %c0_102 = arith.constant 0 : index
    %c0_103 = arith.constant 0 : index
    %119 = vector.load %arg14[%c1_101, %c0_102, %c0_103] : memref<3x16x8xbf16, #tpu.memory_space<vmem>>, vector<1x16x8xbf16>
    %120 = vector.shape_cast %119 : vector<1x16x8xbf16> to vector<16x8xbf16>
    %cst_104 = arith.constant dense<0.000000e+00> : vector<16x256xf32>
    %121 = tpu.matmul %120, %114, %cst_104 {dimension_numbers = #tpu.dot_dimension_numbers<[1], [0], [0], [1], [0, 0, 1, 1], [], []>} : vector<16x8xbf16>, vector<8x256xbf16>, vector<16x256xf32> -> vector<16x256xf32>
    %122 = arith.truncf %121 : vector<16x256xf32> to vector<16x256xbf16>
    %c2_105 = arith.constant 2 : index
    %c0_106 = arith.constant 0 : index
    %c0_107 = arith.constant 0 : index
    %123 = vector.load %arg14[%c2_105, %c0_106, %c0_107] : memref<3x16x8xbf16, #tpu.memory_space<vmem>>, vector<1x16x8xbf16>
    %124 = vector.shape_cast %123 : vector<1x16x8xbf16> to vector<16x8xbf16>
    %cst_108 = arith.constant dense<0.000000e+00> : vector<16x256xf32>
    %125 = tpu.matmul %124, %114, %cst_108 {dimension_numbers = #tpu.dot_dimension_numbers<[1], [0], [0], [1], [0, 0, 1, 1], [], []>} : vector<16x8xbf16>, vector<8x256xbf16>, vector<16x256xf32> -> vector<16x256xf32>
    %126 = arith.truncf %125 : vector<16x256xf32> to vector<16x256xbf16>
    %127 = tpu.concatenate %118, %122, %126 in 1 : vector<16x256xbf16>, vector<16x256xbf16>, vector<16x256xbf16> -> vector<16x768xbf16>
    %c0_109 = arith.constant 0 : index
    %c0_110 = arith.constant 0 : index
    %128 = vector.load %arg15[%c0_109, %c0_110] : memref<768x256xbf16, #tpu.memory_space<vmem>>, vector<768x256xbf16>
    %cst_111 = arith.constant dense<0.000000e+00> : vector<16x256xf32>
    %129 = tpu.matmul %127, %128, %cst_111 {dimension_numbers = #tpu.dot_dimension_numbers<[1], [0], [0], [1], [0, 0, 1, 1], [], []>} : vector<16x768xbf16>, vector<768x256xbf16>, vector<16x256xf32> -> vector<16x256xf32>
    %c0_112 = arith.constant 0 : index
    %c0_113 = arith.constant 0 : index
    %130 = vector.load %arg16[%c0_112, %c0_113] : memref<1x256xf32, #tpu.memory_space<vmem>>, vector<1x256xf32>
    %131 = vector.broadcast %130 : vector<1x256xf32> to vector<16x256xf32>
    %132 = arith.addf %129, %131 : vector<16x256xf32>
    %cst_114 = arith.constant 0.000000e+00 : f32
    %133 = vector.broadcast %cst_114 : f32 to vector<16x256xf32>
    %134 = arith.maximumf %132, %133 : vector<16x256xf32>
    %135 = arith.truncf %134 : vector<16x256xf32> to vector<16x256xbf16>
    %c0_115 = arith.constant 0 : index
    %c0_116 = arith.constant 0 : index
    %c0_117 = arith.constant 0 : index
    %136 = vector.load %arg17[%c0_115, %c0_116, %c0_117] : memref<3x32x16xbf16, #tpu.memory_space<vmem>>, vector<1x32x16xbf16>
    %137 = vector.shape_cast %136 : vector<1x32x16xbf16> to vector<32x16xbf16>
    %cst_118 = arith.constant dense<0.000000e+00> : vector<32x256xf32>
    %138 = tpu.matmul %137, %135, %cst_118 {dimension_numbers = #tpu.dot_dimension_numbers<[1], [0], [0], [1], [0, 0, 1, 1], [], []>} : vector<32x16xbf16>, vector<16x256xbf16>, vector<32x256xf32> -> vector<32x256xf32>
    %139 = arith.truncf %138 : vector<32x256xf32> to vector<32x256xbf16>
    %c1_119 = arith.constant 1 : index
    %c0_120 = arith.constant 0 : index
    %c0_121 = arith.constant 0 : index
    %140 = vector.load %arg17[%c1_119, %c0_120, %c0_121] : memref<3x32x16xbf16, #tpu.memory_space<vmem>>, vector<1x32x16xbf16>
    %141 = vector.shape_cast %140 : vector<1x32x16xbf16> to vector<32x16xbf16>
    %cst_122 = arith.constant dense<0.000000e+00> : vector<32x256xf32>
    %142 = tpu.matmul %141, %135, %cst_122 {dimension_numbers = #tpu.dot_dimension_numbers<[1], [0], [0], [1], [0, 0, 1, 1], [], []>} : vector<32x16xbf16>, vector<16x256xbf16>, vector<32x256xf32> -> vector<32x256xf32>
    %143 = arith.truncf %142 : vector<32x256xf32> to vector<32x256xbf16>
    %c2_123 = arith.constant 2 : index
    %c0_124 = arith.constant 0 : index
    %c0_125 = arith.constant 0 : index
    %144 = vector.load %arg17[%c2_123, %c0_124, %c0_125] : memref<3x32x16xbf16, #tpu.memory_space<vmem>>, vector<1x32x16xbf16>
    %145 = vector.shape_cast %144 : vector<1x32x16xbf16> to vector<32x16xbf16>
    %cst_126 = arith.constant dense<0.000000e+00> : vector<32x256xf32>
    %146 = tpu.matmul %145, %135, %cst_126 {dimension_numbers = #tpu.dot_dimension_numbers<[1], [0], [0], [1], [0, 0, 1, 1], [], []>} : vector<32x16xbf16>, vector<16x256xbf16>, vector<32x256xf32> -> vector<32x256xf32>
    %147 = arith.truncf %146 : vector<32x256xf32> to vector<32x256xbf16>
    %148 = tpu.concatenate %139, %143, %147 in 1 : vector<32x256xbf16>, vector<32x256xbf16>, vector<32x256xbf16> -> vector<32x768xbf16>
    %c0_127 = arith.constant 0 : index
    %c0_128 = arith.constant 0 : index
    %149 = vector.load %arg18[%c0_127, %c0_128] : memref<768x128xbf16, #tpu.memory_space<vmem>>, vector<768x128xbf16>
    %cst_129 = arith.constant dense<0.000000e+00> : vector<32x128xf32>
    %150 = tpu.matmul %148, %149, %cst_129 {dimension_numbers = #tpu.dot_dimension_numbers<[1], [0], [0], [1], [0, 0, 1, 1], [], []>} : vector<32x768xbf16>, vector<768x128xbf16>, vector<32x128xf32> -> vector<32x128xf32>
    %c0_130 = arith.constant 0 : index
    %c0_131 = arith.constant 0 : index
    %151 = vector.load %arg19[%c0_130, %c0_131] : memref<1x128xf32, #tpu.memory_space<vmem>>, vector<1x128xf32>
    %152 = vector.broadcast %151 : vector<1x128xf32> to vector<32x128xf32>
    %153 = arith.addf %150, %152 : vector<32x128xf32>
    %154 = math.tanh %153 : vector<32x128xf32>
    %c0_132 = arith.constant 0 : index
    %c0_133 = arith.constant 0 : index
    %155 = vector.load %arg20[%c0_132, %c0_133] : memref<32x128xf32, #tpu.memory_space<vmem>>, vector<32x128xf32>
    tpu.vector_store %arg20[%c0_132, %c0_133], %154 {strides = array<i32>} : memref<32x128xf32, #tpu.memory_space<vmem>>, vector<32x128xf32>,
    return
  }
  func.func @transform_0(%arg0: i32) -> (i32, i32) {
    %c0_i32 = arith.constant 0 : i32
    %c0_i32_0 = arith.constant 0 : i32
    return %arg0, %c0_i32 : i32, i32
  }
  func.func @transform_1(%arg0: i32) -> (i32, i32, i32) {
    %c0_i32 = arith.constant 0 : i32
    %c0_i32_0 = arith.constant 0 : i32
    %c0_i32_1 = arith.constant 0 : i32
    %c0_i32_2 = arith.constant 0 : i32
    return %c0_i32, %c0_i32_0, %c0_i32_1 : i32, i32, i32
  }
  func.func @transform_2(%arg0: i32) -> (i32, i32) {
    %c0_i32 = arith.constant 0 : i32
    %c0_i32_0 = arith.constant 0 : i32
    %c0_i32_1 = arith.constant 0 : i32
    return %c0_i32, %c0_i32_0 : i32, i32
  }
  func.func @transform_3(%arg0: i32) -> (i32, i32) {
    %c0_i32 = arith.constant 0 : i32
    %c0_i32_0 = arith.constant 0 : i32
    %c0_i32_1 = arith.constant 0 : i32
    return %c0_i32, %c0_i32_0 : i32, i32
  }
  func.func @transform_4(%arg0: i32) -> (i32, i32, i32) {
    %c0_i32 = arith.constant 0 : i32
    %c0_i32_0 = arith.constant 0 : i32
    %c0_i32_1 = arith.constant 0 : i32
    %c0_i32_2 = arith.constant 0 : i32
    return %c0_i32, %c0_i32_0, %c0_i32_1 : i32, i32, i32
  }
  func.func @transform_5(%arg0: i32) -> (i32, i32) {
    %c0_i32 = arith.constant 0 : i32
    %c0_i32_0 = arith.constant 0 : i32
    %c0_i32_1 = arith.constant 0 : i32
    return %c0_i32, %c0_i32_0 : i32, i32
  }
  func.func @transform_6(%arg0: i32) -> (i32, i32) {
    %c0_i32 = arith.constant 0 : i32
    %c0_i32_0 = arith.constant 0 : i32
    %c0_i32_1 = arith.constant 0 : i32
    return %c0_i32, %c0_i32_0 : i32, i32
  }
  func.func @transform_7(%arg0: i32) -> (i32, i32, i32) {
    %c0_i32 = arith.constant 0 : i32
    %c0_i32_0 = arith.constant 0 : i32
    %c0_i32_1 = arith.constant 0 : i32
    %c0_i32_2 = arith.constant 0 : i32
    return %c0_i32, %c0_i32_0, %c0_i32_1 : i32, i32, i32
  }
  func.func @transform_8(%arg0: i32) -> (i32, i32) {
    %c0_i32 = arith.constant 0 : i32
    %c0_i32_0 = arith.constant 0 : i32
    %c0_i32_1 = arith.constant 0 : i32
    return %c0_i32, %c0_i32_0 : i32, i32
  }
  func.func @transform_9(%arg0: i32) -> (i32, i32) {
    %c0_i32 = arith.constant 0 : i32
    %c0_i32_0 = arith.constant 0 : i32
    %c0_i32_1 = arith.constant 0 : i32
    return %c0_i32, %c0_i32_0 : i32, i32
  }
  func.func @transform_10(%arg0: i32) -> (i32, i32, i32) {
    %c0_i32 = arith.constant 0 : i32
    %c0_i32_0 = arith.constant 0 : i32
    %c0_i32_1 = arith.constant 0 : i32
    %c0_i32_2 = arith.constant 0 : i32
    return %c0_i32, %c0_i32_0, %c0_i32_1 : i32, i32, i32
  }
  func.func @transform_11(%arg0: i32) -> (i32, i32) {
    %c0_i32 = arith.constant 0 : i32
    %c0_i32_0 = arith.constant 0 : i32
    %c0_i32_1 = arith.constant 0 : i32
    return %c0_i32, %c0_i32_0 : i32, i32
  }
  func.func @transform_12(%arg0: i32) -> (i32, i32) {
    %c0_i32 = arith.constant 0 : i32
    %c0_i32_0 = arith.constant 0 : i32
    %c0_i32_1 = arith.constant 0 : i32
    return %c0_i32, %c0_i32_0 : i32, i32
  }
  func.func @transform_13(%arg0: i32) -> (i32, i32, i32) {
    %c0_i32 = arith.constant 0 : i32
    %c0_i32_0 = arith.constant 0 : i32
    %c0_i32_1 = arith.constant 0 : i32
    %c0_i32_2 = arith.constant 0 : i32
    return %c0_i32, %c0_i32_0, %c0_i32_1 : i32, i32, i32
  }
  func.func @transform_14(%arg0: i32) -> (i32, i32) {
    %c0_i32 = arith.constant 0 : i32
    %c0_i32_0 = arith.constant 0 : i32
    %c0_i32_1 = arith.constant 0 : i32
    return %c0_i32, %c0_i32_0 : i32, i32
  }
  func.func @transform_15(%arg0: i32) -> (i32, i32) {
    %c0_i32 = arith.constant 0 : i32
    %c0_i32_0 = arith.constant 0 : i32
    %c0_i32_1 = arith.constant 0 : i32
    return %c0_i32, %c0_i32_0 : i32, i32
  }
  func.func @transform_16(%arg0: i32) -> (i32, i32, i32) {
    %c0_i32 = arith.constant 0 : i32
    %c0_i32_0 = arith.constant 0 : i32
    %c0_i32_1 = arith.constant 0 : i32
    %c0_i32_2 = arith.constant 0 : i32
    return %c0_i32, %c0_i32_0, %c0_i32_1 : i32, i32, i32
  }
  func.func @transform_17(%arg0: i32) -> (i32, i32) {
    %c0_i32 = arith.constant 0 : i32
    %c0_i32_0 = arith.constant 0 : i32
    %c0_i32_1 = arith.constant 0 : i32
    return %c0_i32, %c0_i32_0 : i32, i32
  }
  func.func @transform_18(%arg0: i32) -> (i32, i32) {
    %c0_i32 = arith.constant 0 : i32
    %c0_i32_0 = arith.constant 0 : i32
    %c0_i32_1 = arith.constant 0 : i32
    return %c0_i32, %c0_i32_0 : i32, i32
  }
  func.func @transform_19(%arg0: i32) -> (i32, i32) {
    %c0_i32 = arith.constant 0 : i32
    %c0_i32_0 = arith.constant 0 : i32
    return %arg0, %c0_i32 : i32, i32
  }
}

</mosaic_0001>

<llo_original>
// kernel: forward.1
$region0: #{forward.1}
  #allocation0 [shape = 'u32[]', space=smem, size = 0x4, offset = 0x4, fixed_abs, tag = 'smem constant byte address 0x4 - core index']
  #allocation1 [shape = 'u32[144,128]{1,0:T(1,128)}', space=vmem, size = 0x12000, scoped, tag = 'internal scratch']
  %s0 = inlined_call_operand.vmem [shape: bf16[64,128], index: 0, kind: input, shape index: {}]
  %s1 = inlined_call_operand.vmem [shape: bf16[3,16,32], index: 1, kind: input, shape index: {}]
  %s2 = inlined_call_operand.vmem [shape: bf16[384,256], index: 2, kind: input, shape index: {}]
  %s3 = inlined_call_operand.vmem [shape: f32[1,256], index: 3, kind: input, shape index: {}]
  %s4 = inlined_call_operand.vmem [shape: bf16[3,8,16], index: 4, kind: input, shape index: {}]
  %s5 = inlined_call_operand.vmem [shape: bf16[768,256], index: 5, kind: input, shape index: {}]
  %s6 = inlined_call_operand.vmem [shape: f32[1,256], index: 6, kind: input, shape index: {}]
  %s7 = inlined_call_operand.vmem [shape: bf16[7,8,8], index: 7, kind: input, shape index: {}]
  %s8 = inlined_call_operand.vmem [shape: bf16[1792,128], index: 8, kind: input, shape index: {}]
  %s9 = inlined_call_operand.vmem [shape: f32[1,128], index: 9, kind: input, shape index: {}]
  %s10 = inlined_call_operand.vmem [shape: bf16[7,8,8], index: 10, kind: input, shape index: {}]
  %s11 = inlined_call_operand.vmem [shape: bf16[896,256], index: 11, kind: input, shape index: {}]
  %s12 = inlined_call_operand.vmem [shape: f32[1,256], index: 12, kind: input, shape index: {}]
  %s13 = inlined_call_operand.vmem [shape: bf16[3,16,8], index: 13, kind: input, shape index: {}]
  %s14 = inlined_call_operand.vmem [shape: bf16[768,256], index: 14, kind: input, shape index: {}]
  %s15 = inlined_call_operand.vmem [shape: f32[1,256], index: 15, kind: input, shape index: {}]
  %s16 = inlined_call_operand.vmem [shape: bf16[3,32,16], index: 16, kind: input, shape index: {}]
  %s17 = inlined_call_operand.vmem [shape: bf16[768,128], index: 17, kind: input, shape index: {}]
  %s18 = inlined_call_operand.vmem [shape: f32[1,128], index: 18, kind: input, shape index: {}]
  %s19 = inlined_call_operand.vmem [shape: f32[64,128], index: 19, kind: output, shape index: {}]
  %s20 = sld [smem:[#allocation0]]
  $region109: #{forward.1} parent=0
    _
  %s22 = ssub.s32 1, %s20
  %s23 = scalar_select 0, %s22, %s20
  loop: start=0, step=1, limit=4
  $region2: #{forward.1} parent=0 // loop_pre_header
    _
  $region3: #{forward.1} parent=0 // loop_header
    %s25 = sphi 0, %s29
    %p26 = scmp.ge.s32.totalorder %s25, 4
    %s35 = sphi 0, %s37
    %s38 = sphi 0, %s35
    %s39 = sphi 0, %s38
    %s55 = sphi 0, %s39
    %s59 = sphi 0, %s59
    %s61 = sphi 0, %s59
    %s62 = sphi 0, %s61
    %s76 = sphi 0, %s62
    %s80 = sphi 0, %s80
    %s82 = sphi 0, %s80
    %s83 = sphi 0, %s82
    %s97 = sphi 0, %s83
    %s101 = sphi 0, %s101
    %s103 = sphi 0, %s101
    %s104 = sphi 0, %s103
    %s118 = sphi 0, %s104
    %s122 = sphi 0, %s122
    %s124 = sphi 0, %s122
    %s125 = sphi 0, %s124
    %s139 = sphi 0, %s125
    %s143 = sphi 0, %s143
    %s145 = sphi 0, %s143
    %s146 = sphi 0, %s145
    %s160 = sphi 0, %s146
    %s164 = sphi 0, %s164
    %s166 = sphi 0, %s164
    %s167 = sphi 0, %s166
    %s181 = sphi 0, %s167
    %s185 = sphi 0, %s185
    %s187 = sphi 0, %s185
    %s188 = sphi 0, %s187
    %s202 = sphi 0, %s188
    %s206 = sphi 0, %s206
    %s208 = sphi 0, %s206
    %s209 = sphi 0, %s208
    %s223 = sphi 0, %s209
    %s227 = sphi 0, %s227
    %s229 = sphi 0, %s227
    %s230 = sphi 0, %s229
    %s244 = sphi 0, %s230
    %s248 = sphi 0, %s248
    %s250 = sphi 0, %s248
    %s251 = sphi 0, %s250
    %s265 = sphi 0, %s251
    %s269 = sphi 0, %s269
    %s271 = sphi 0, %s269
    %s272 = sphi 0, %s271
    %s286 = sphi 0, %s272
    %s290 = sphi 0, %s290
    %s292 = sphi 0, %s290
    %s293 = sphi 0, %s292
    %s307 = sphi 0, %s293
    %s311 = sphi 0, %s311
    %s313 = sphi 0, %s311
    %s314 = sphi 0, %s313
    %s328 = sphi 0, %s314
    %s332 = sphi 0, %s332
    %s334 = sphi 0, %s332
    %s335 = sphi 0, %s334
    %s349 = sphi 0, %s335
    %s353 = sphi 0, %s353
    %s355 = sphi 0, %s353
    %s356 = sphi 0, %s355
    %s370 = sphi 0, %s356
    %s374 = sphi 0, %s374
    %s376 = sphi 0, %s374
    %s377 = sphi 0, %s376
    %s391 = sphi 0, %s377
    %s395 = sphi 0, %s395
    %s397 = sphi 0, %s395
    %s398 = sphi 0, %s397
    %s412 = sphi 0, %s398
    %s416 = sphi 0, %s416
    %s418 = sphi 0, %s416
    %s419 = sphi 0, %s418
    %s433 = sphi 0, %s419
    %s439 = sphi 0, %s441
    %s442 = sphi 0, %s439
    %s443 = sphi 0, %s442
    %s459 = sphi 0, %s443
  $region4: #{forward.1} parent=0 // loop_header_branch
    %28 = sbr.rel (%p26) target = $region8
  $region5: #{forward.1} parent=0 // loop_body
    %s30 = ssub.s32 %s25, 1
    %s31 = ssub.s32 %s25, 2
    %s32 = sadd.s32 %s25, 1
    %s33 = ssub.s32 %s25, %s32
    %p34 = scmp.eq.s32.totalorder %s33, 0
    %s36 = sadd.s32 %s35, 1
    %s37 = scalar_select %p34, %s35, %s36
    %p40 = pneg %p34
    %p41 = scmp.eq.s32.totalorder %s25, 1
    %p42 = por %p40, %p41
    %p43 = scmp.ne.s32.totalorder %s35, %s38
    %p44 = scmp.eq.s32.totalorder %s25, 0
    %p45 = por %p43, %p44
    %p46 = scmp.ne.s32.totalorder %s35, %s38
    %p47 = scmp.eq.s32.totalorder %s30, 1
    %p48 = por %p46, %p47
    %p49 = scmp.ne.s32.totalorder %s38, %s39
    %p50 = scmp.eq.s32.totalorder %s30, 0
    %p51 = por %p49, %p50
    %p52 = scmp.ne.s32.totalorder %s38, %s39
    %p53 = scmp.eq.s32.totalorder %s31, 1
    %p54 = por %p52, %p53
    %p56 = scmp.ne.s32.totalorder %s39, %s55
    %p57 = scmp.eq.s32.totalorder %s31, 0
    %p58 = por %p56, %p57
    %s60 = sadd.s32 %s59, 1
    %p63 = scmp.eq.s32.totalorder %s25, 1
    %p64 = scmp.ne.s32.totalorder %s59, %s61
    %p65 = scmp.eq.s32.totalorder %s25, 0
    %p66 = por %p64, %p65
    %p67 = scmp.ne.s32.totalorder %s59, %s61
    %p68 = scmp.eq.s32.totalorder %s30, 1
    %p69 = por %p67, %p68
    %p70 = scmp.ne.s32.totalorder %s61, %s62
    %p71 = scmp.eq.s32.totalorder %s30, 0
    %p72 = por %p70, %p71
    %p73 = scmp.ne.s32.totalorder %s61, %s62
    %p74 = scmp.eq.s32.totalorder %s31, 1
    %p75 = por %p73, %p74
    %p77 = scmp.ne.s32.totalorder %s62, %s76
    %p78 = scmp.eq.s32.totalorder %s31, 0
    %p79 = por %p77, %p78
    %s81 = sadd.s32 %s80, 1
    %p84 = scmp.eq.s32.totalorder %s25, 1
    %p85 = scmp.ne.s32.totalorder %s80, %s82
    %p86 = scmp.eq.s32.totalorder %s25, 0
    %p87 = por %p85, %p86
    %p88 = scmp.ne.s32.totalorder %s80, %s82
    %p89 = scmp.eq.s32.totalorder %s30, 1
    %p90 = por %p88, %p89
    %p91 = scmp.ne.s32.totalorder %s82, %s83
    %p92 = scmp.eq.s32.totalorder %s30, 0
    %p93 = por %p91, %p92
    %p94 = scmp.ne.s32.totalorder %s82, %s83
    %p95 = scmp.eq.s32.totalorder %s31, 1
    %p96 = por %p94, %p95
    %p98 = scmp.ne.s32.totalorder %s83, %s97
    %p99 = scmp.eq.s32.totalorder %s31, 0
    %p100 = por %p98, %p99
    %s102 = sadd.s32 %s101, 1
    %p105 = scmp.eq.s32.totalorder %s25, 1
    %p106 = scmp.ne.s32.totalorder %s101, %s103
    %p107 = scmp.eq.s32.totalorder %s25, 0
    %p108 = por %p106, %p107
    %p109 = scmp.ne.s32.totalorder %s101, %s103
    %p110 = scmp.eq.s32.totalorder %s30, 1
    %p111 = por %p109, %p110
    %p112 = scmp.ne.s32.totalorder %s103, %s104
    %p113 = scmp.eq.s32.totalorder %s30, 0
    %p114 = por %p112, %p113
    %p115 = scmp.ne.s32.totalorder %s103, %s104
    %p116 = scmp.eq.s32.totalorder %s31, 1
    %p117 = por %p115, %p116
    %p119 = scmp.ne.s32.totalorder %s104, %s118
    %p120 = scmp.eq.s32.totalorder %s31, 0
    %p121 = por %p119, %p120
    %s123 = sadd.s32 %s122, 1
    %p126 = scmp.eq.s32.totalorder %s25, 1
    %p127 = scmp.ne.s32.totalorder %s122, %s124
    %p128 = scmp.eq.s32.totalorder %s25, 0
    %p129 = por %p127, %p128
    %p130 = scmp.ne.s32.totalorder %s122, %s124
    %p131 = scmp.eq.s32.totalorder %s30, 1
    %p132 = por %p130, %p131
    %p133 = scmp.ne.s32.totalorder %s124, %s125
    %p134 = scmp.eq.s32.totalorder %s30, 0
    %p135 = por %p133, %p134
    %p136 = scmp.ne.s32.totalorder %s124, %s125
    %p137 = scmp.eq.s32.totalorder %s31, 1
    %p138 = por %p136, %p137
    %p140 = scmp.ne.s32.totalorder %s125, %s139
    %p141 = scmp.eq.s32.totalorder %s31, 0
    %p142 = por %p140, %p141
    %s144 = sadd.s32 %s143, 1
    %p147 = scmp.eq.s32.totalorder %s25, 1
    %p148 = scmp.ne.s32.totalorder %s143, %s145
    %p149 = scmp.eq.s32.totalorder %s25, 0
    %p150 = por %p148, %p149
    %p151 = scmp.ne.s32.totalorder %s143, %s145
    %p152 = scmp.eq.s32.totalorder %s30, 1
    %p153 = por %p151, %p152
    %p154 = scmp.ne.s32.totalorder %s145, %s146
    %p155 = scmp.eq.s32.totalorder %s30, 0
    %p156 = por %p154, %p155
    %p157 = scmp.ne.s32.totalorder %s145, %s146
    %p158 = scmp.eq.s32.totalorder %s31, 1
    %p159 = por %p157, %p158
    %p161 = scmp.ne.s32.totalorder %s146, %s160
    %p162 = scmp.eq.s32.totalorder %s31, 0
    %p163 = por %p161, %p162
    %s165 = sadd.s32 %s164, 1
    %p168 = scmp.eq.s32.totalorder %s25, 1
    %p169 = scmp.ne.s32.totalorder %s164, %s166
    %p170 = scmp.eq.s32.totalorder %s25, 0
    %p171 = por %p169, %p170
    %p172 = scmp.ne.s32.totalorder %s164, %s166
    %p173 = scmp.eq.s32.totalorder %s30, 1
    %p174 = por %p172, %p173
    %p175 = scmp.ne.s32.totalorder %s166, %s167
    %p176 = scmp.eq.s32.totalorder %s30, 0
    %p177 = por %p175, %p176
    %p178 = scmp.ne.s32.totalorder %s166, %s167
    %p179 = scmp.eq.s32.totalorder %s31, 1
    %p180 = por %p178, %p179
    %p182 = scmp.ne.s32.totalorder %s167, %s181
    %p183 = scmp.eq.s32.totalorder %s31, 0
    %p184 = por %p182, %p183
    %s186 = sadd.s32 %s185, 1
    %p189 = scmp.eq.s32.totalorder %s25, 1
    %p190 = scmp.ne.s32.totalorder %s185, %s187
    %p191 = scmp.eq.s32.totalorder %s25, 0
    %p192 = por %p190, %p191
    %p193 = scmp.ne.s32.totalorder %s185, %s187
    %p194 = scmp.eq.s32.totalorder %s30, 1
    %p195 = por %p193, %p194
    %p196 = scmp.ne.s32.totalorder %s187, %s188
    %p197 = scmp.eq.s32.totalorder %s30, 0
    %p198 = por %p196, %p197
    %p199 = scmp.ne.s32.totalorder %s187, %s188
    %p200 = scmp.eq.s32.totalorder %s31, 1
    %p201 = por %p199, %p200
    %p203 = scmp.ne.s32.totalorder %s188, %s202
    %p204 = scmp.eq.s32.totalorder %s31, 0
    %p205 = por %p203, %p204
    %s207 = sadd.s32 %s206, 1
    %p210 = scmp.eq.s32.totalorder %s25, 1
    %p211 = scmp.ne.s32.totalorder %s206, %s208
    %p212 = scmp.eq.s32.totalorder %s25, 0
    %p213 = por %p211, %p212
    %p214 = scmp.ne.s32.totalorder %s206, %s208
    %p215 = scmp.eq.s32.totalorder %s30, 1
    %p216 = por %p214, %p215
    %p217 = scmp.ne.s32.totalorder %s208, %s209
    %p218 = scmp.eq.s32.totalorder %s30, 0
    %p219 = por %p217, %p218
    %p220 = scmp.ne.s32.totalorder %s208, %s209
    %p221 = scmp.eq.s32.totalorder %s31, 1
    %p222 = por %p220, %p221
    %p224 = scmp.ne.s32.totalorder %s209, %s223
    %p225 = scmp.eq.s32.totalorder %s31, 0
    %p226 = por %p224, %p225
    %s228 = sadd.s32 %s227, 1
    %p231 = scmp.eq.s32.totalorder %s25, 1
    %p232 = scmp.ne.s32.totalorder %s227, %s229
    %p233 = scmp.eq.s32.totalorder %s25, 0
    %p234 = por %p232, %p233
    %p235 = scmp.ne.s32.totalorder %s227, %s229
    %p236 = scmp.eq.s32.totalorder %s30, 1
    %p237 = por %p235, %p236
    %p238 = scmp.ne.s32.totalorder %s229, %s230
    %p239 = scmp.eq.s32.totalorder %s30, 0
    %p240 = por %p238, %p239
    %p241 = scmp.ne.s32.totalorder %s229, %s230
    %p242 = scmp.eq.s32.totalorder %s31, 1
    %p243 = por %p241, %p242
    %p245 = scmp.ne.s32.totalorder %s230, %s244
    %p246 = scmp.eq.s32.totalorder %s31, 0
    %p247 = por %p245, %p246
    %s249 = sadd.s32 %s248, 1
    %p252 = scmp.eq.s32.totalorder %s25, 1
    %p253 = scmp.ne.s32.totalorder %s248, %s250
    %p254 = scmp.eq.s32.totalorder %s25, 0
    %p255 = por %p253, %p254
    %p256 = scmp.ne.s32.totalorder %s248, %s250
    %p257 = scmp.eq.s32.totalorder %s30, 1
    %p258 = por %p256, %p257
    %p259 = scmp.ne.s32.totalorder %s250, %s251
    %p260 = scmp.eq.s32.totalorder %s30, 0
    %p261 = por %p259, %p260
    %p262 = scmp.ne.s32.totalorder %s250, %s251
    %p263 = scmp.eq.s32.totalorder %s31, 1
    %p264 = por %p262, %p263
    %p266 = scmp.ne.s32.totalorder %s251, %s265
    %p267 = scmp.eq.s32.totalorder %s31, 0
    %p268 = por %p266, %p267
    %s270 = sadd.s32 %s269, 1
    %p273 = scmp.eq.s32.totalorder %s25, 1
    %p274 = scmp.ne.s32.totalorder %s269, %s271
    %p275 = scmp.eq.s32.totalorder %s25, 0
    %p276 = por %p274, %p275
    %p277 = scmp.ne.s32.totalorder %s269, %s271
    %p278 = scmp.eq.s32.totalorder %s30, 1
    %p279 = por %p277, %p278
    %p280 = scmp.ne.s32.totalorder %s271, %s272
    %p281 = scmp.eq.s32.totalorder %s30, 0
    %p282 = por %p280, %p281
    %p283 = scmp.ne.s32.totalorder %s271, %s272
    %p284 = scmp.eq.s32.totalorder %s31, 1
    %p285 = por %p283, %p284
    %p287 = scmp.ne.s32.totalorder %s272, %s286
    %p288 = scmp.eq.s32.totalorder %s31, 0
    %p289 = por %p287, %p288
    %s291 = sadd.s32 %s290, 1
    %p294 = scmp.eq.s32.totalorder %s25, 1
    %p295 = scmp.ne.s32.totalorder %s290, %s292
    %p296 = scmp.eq.s32.totalorder %s25, 0
    %p297 = por %p295, %p296
    %p298 = scmp.ne.s32.totalorder %s290, %s292
    %p299 = scmp.eq.s32.totalorder %s30, 1
    %p300 = por %p298, %p299
    %p301 = scmp.ne.s32.totalorder %s292, %s293
    %p302 = scmp.eq.s32.totalorder %s30, 0
    %p303 = por %p301, %p302
    %p304 = scmp.ne.s32.totalorder %s292, %s293
    %p305 = scmp.eq.s32.totalorder %s31, 1
    %p306 = por %p304, %p305
    %p308 = scmp.ne.s32.totalorder %s293, %s307
    %p309 = scmp.eq.s32.totalorder %s31, 0
    %p310 = por %p308, %p309
    %s312 = sadd.s32 %s311, 1
    %p315 = scmp.eq.s32.totalorder %s25, 1
    %p316 = scmp.ne.s32.totalorder %s311, %s313
    %p317 = scmp.eq.s32.totalorder %s25, 0
    %p318 = por %p316, %p317
    %p319 = scmp.ne.s32.totalorder %s311, %s313
    %p320 = scmp.eq.s32.totalorder %s30, 1
    %p321 = por %p319, %p320
    %p322 = scmp.ne.s32.totalorder %s313, %s314
    %p323 = scmp.eq.s32.totalorder %s30, 0
    %p324 = por %p322, %p323
    %p325 = scmp.ne.s32.totalorder %s313, %s314
    %p326 = scmp.eq.s32.totalorder %s31, 1
    %p327 = por %p325, %p326
    %p329 = scmp.ne.s32.totalorder %s314, %s328
    %p330 = scmp.eq.s32.totalorder %s31, 0
    %p331 = por %p329, %p330
    %s333 = sadd.s32 %s332, 1
    %p336 = scmp.eq.s32.totalorder %s25, 1
    %p337 = scmp.ne.s32.totalorder %s332, %s334
    %p338 = scmp.eq.s32.totalorder %s25, 0
    %p339 = por %p337, %p338
    %p340 = scmp.ne.s32.totalorder %s332, %s334
    %p341 = scmp.eq.s32.totalorder %s30, 1
    %p342 = por %p340, %p341
    %p343 = scmp.ne.s32.totalorder %s334, %s335
    %p344 = scmp.eq.s32.totalorder %s30, 0
    %p345 = por %p343, %p344
    %p346 = scmp.ne.s32.totalorder %s334, %s335
    %p347 = scmp.eq.s32.totalorder %s31, 1
    %p348 = por %p346, %p347
    %p350 = scmp.ne.s32.totalorder %s335, %s349
    %p351 = scmp.eq.s32.totalorder %s31, 0
    %p352 = por %p350, %p351
    %s354 = sadd.s32 %s353, 1
    %p357 = scmp.eq.s32.totalorder %s25, 1
    %p358 = scmp.ne.s32.totalorder %s353, %s355
    %p359 = scmp.eq.s32.totalorder %s25, 0
    %p360 = por %p358, %p359
    %p361 = scmp.ne.s32.totalorder %s353, %s355
    %p362 = scmp.eq.s32.totalorder %s30, 1
    %p363 = por %p361, %p362
    %p364 = scmp.ne.s32.totalorder %s355, %s356
    %p365 = scmp.eq.s32.totalorder %s30, 0
    %p366 = por %p364, %p365
    %p367 = scmp.ne.s32.totalorder %s355, %s356
    %p368 = scmp.eq.s32.totalorder %s31, 1
    %p369 = por %p367, %p368
    %p371 = scmp.ne.s32.totalorder %s356, %s370
    %p372 = scmp.eq.s32.totalorder %s31, 0
    %p373 = por %p371, %p372
    %s375 = sadd.s32 %s374, 1
    %p378 = scmp.eq.s32.totalorder %s25, 1
    %p379 = scmp.ne.s32.totalorder %s374, %s376
    %p380 = scmp.eq.s32.totalorder %s25, 0
    %p381 = por %p379, %p380
    %p382 = scmp.ne.s32.totalorder %s374, %s376
    %p383 = scmp.eq.s32.totalorder %s30, 1
    %p384 = por %p382, %p383
    %p385 = scmp.ne.s32.totalorder %s376, %s377
    %p386 = scmp.eq.s32.totalorder %s30, 0
    %p387 = por %p385, %p386
    %p388 = scmp.ne.s32.totalorder %s376, %s377
    %p389 = scmp.eq.s32.totalorder %s31, 1
    %p390 = por %p388, %p389
    %p392 = scmp.ne.s32.totalorder %s377, %s391
    %p393 = scmp.eq.s32.totalorder %s31, 0
    %p394 = por %p392, %p393
    %s396 = sadd.s32 %s395, 1
    %p399 = scmp.eq.s32.totalorder %s25, 1
    %p400 = scmp.ne.s32.totalorder %s395, %s397
    %p401 = scmp.eq.s32.totalorder %s25, 0
    %p402 = por %p400, %p401
    %p403 = scmp.ne.s32.totalorder %s395, %s397
    %p404 = scmp.eq.s32.totalorder %s30, 1
    %p405 = por %p403, %p404
    %p406 = scmp.ne.s32.totalorder %s397, %s398
    %p407 = scmp.eq.s32.totalorder %s30, 0
    %p408 = por %p406, %p407
    %p409 = scmp.ne.s32.totalorder %s397, %s398
    %p410 = scmp.eq.s32.totalorder %s31, 1
    %p411 = por %p409, %p410
    %p413 = scmp.ne.s32.totalorder %s398, %s412
    %p414 = scmp.eq.s32.totalorder %s31, 0
    %p415 = por %p413, %p414
    %s417 = sadd.s32 %s416, 1
    %p420 = scmp.eq.s32.totalorder %s25, 1
    %p421 = scmp.ne.s32.totalorder %s416, %s418
    %p422 = scmp.eq.s32.totalorder %s25, 0
    %p423 = por %p421, %p422
    %p424 = scmp.ne.s32.totalorder %s416, %s418
    %p425 = scmp.eq.s32.totalorder %s30, 1
    %p426 = por %p424, %p425
    %p427 = scmp.ne.s32.totalorder %s418, %s419
    %p428 = scmp.eq.s32.totalorder %s30, 0
    %p429 = por %p427, %p428
    %p430 = scmp.ne.s32.totalorder %s418, %s419
    %p431 = scmp.eq.s32.totalorder %s31, 1
    %p432 = por %p430, %p431
    %p434 = scmp.ne.s32.totalorder %s419, %s433
    %p435 = scmp.eq.s32.totalorder %s31, 0
    %p436 = por %p434, %p435
    %s437 = ssub.s32 %s25, %s32
    %p438 = scmp.eq.s32.totalorder %s437, 0
    %s440 = sadd.s32 %s439, 1
    %s441 = scalar_select %p438, %s439, %s440
    %p444 = pneg %p438
    %p445 = scmp.eq.s32.totalorder %s25, 1
    %p446 = por %p444, %p445
    %p447 = scmp.ne.s32.totalorder %s439, %s442
    %p448 = scmp.eq.s32.totalorder %s25, 0
    %p449 = por %p447, %p448
    %p450 = scmp.ne.s32.totalorder %s439, %s442
    %p451 = scmp.eq.s32.totalorder %s30, 1
    %p452 = por %p450, %p451
    %p453 = scmp.ne.s32.totalorder %s442, %s443
    %p454 = scmp.eq.s32.totalorder %s30, 0
    %p455 = por %p453, %p454
    %p456 = scmp.ne.s32.totalorder %s442, %s443
    %p457 = scmp.eq.s32.totalorder %s31, 1
    %p458 = por %p456, %p457
    %p460 = scmp.ne.s32.totalorder %s443, %s459
    %p461 = scmp.eq.s32.totalorder %s31, 0
    %p462 = por %p460, %p461
    %p463 = scmp.le.s32.totalorder 1, %s25
    %p464 = scmp.lt.s32.totalorder %s25, 3
    %p465 = pnand %p463, %p464
    %p466 = pneg %p465
    // Predicated region
    $region9: #{forward.1} parent=5 // pred_check
      _
    $region10: #{forward.1} parent=5 // pred_check_branch
      %468 = sbr.rel (%p465) target = $region12
    $region11: #{forward.1} parent=5 // pred_region
      %s469 = ssub.s32 %s25, 1
      // Predicated region
      $region13: #{forward.1} parent=11 // pred_check
        %p470 = pneg %p72
      $region14: #{forward.1} parent=11 // pred_check_branch
        %472 = sbr.rel (%p470) target = $region16
      $region15: #{forward.1} parent=11 // pred_region
        _
      $region16: #{forward.1} parent=11 // pred_fallthru
        _
      // Predicated region
      $region17: #{forward.1} parent=11 // pred_check
        %p473 = pneg %p93
      $region18: #{forward.1} parent=11 // pred_check_branch
        %475 = sbr.rel (%p473) target = $region20
      $region19: #{forward.1} parent=11 // pred_region
        _
      $region20: #{forward.1} parent=11 // pred_fallthru
        _
      // Predicated region
      $region21: #{forward.1} parent=11 // pred_check
        %p476 = pneg %p114
      $region22: #{forward.1} parent=11 // pred_check_branch
        %478 = sbr.rel (%p476) target = $region24
      $region23: #{forward.1} parent=11 // pred_region
        _
      $region24: #{forward.1} parent=11 // pred_fallthru
        _
      // Predicated region
      $region25: #{forward.1} parent=11 // pred_check
        %p479 = pneg %p135
      $region26: #{forward.1} parent=11 // pred_check_branch
        %481 = sbr.rel (%p479) target = $region28
      $region27: #{forward.1} parent=11 // pred_region
        _
      $region28: #{forward.1} parent=11 // pred_fallthru
        _
      // Predicated region
      $region29: #{forward.1} parent=11 // pred_check
        %p482 = pneg %p156
      $region30: #{forward.1} parent=11 // pred_check_branch
        %484 = sbr.rel (%p482) target = $region32
      $region31: #{forward.1} parent=11 // pred_region
        _
      $region32: #{forward.1} parent=11 // pred_fallthru
        _
      // Predicated region
      $region33: #{forward.1} parent=11 // pred_check
        %p485 = pneg %p177
      $region34: #{forward.1} parent=11 // pred_check_branch
        %487 = sbr.rel (%p485) target = $region36
      $region35: #{forward.1} parent=11 // pred_region
        _
      $region36: #{forward.1} parent=11 // pred_fallthru
        _
      // Predicated region
      $region37: #{forward.1} parent=11 // pred_check
        %p488 = pneg %p198
      $region38: #{forward.1} parent=11 // pred_check_branch
        %490 = sbr.rel (%p488) target = $region40
      $region39: #{forward.1} parent=11 // pred_region
        _
      $region40: #{forward.1} parent=11 // pred_fallthru
        _
      // Predicated region
      $region41: #{forward.1} parent=11 // pred_check
        %p491 = pneg %p219
      $region42: #{forward.1} parent=11 // pred_check_branch
        %493 = sbr.rel (%p491) target = $region44
      $region43: #{forward.1} parent=11 // pred_region
        _
      $region44: #{forward.1} parent=11 // pred_fallthru
        _
      // Predicated region
      $region45: #{forward.1} parent=11 // pred_check
        %p494 = pneg %p240
      $region46: #{forward.1} parent=11 // pred_check_branch
        %496 = sbr.rel (%p494) target = $region48
      $region47: #{forward.1} parent=11 // pred_region
        _
      $region48: #{forward.1} parent=11 // pred_fallthru
        _
      // Predicated region
      $region49: #{forward.1} parent=11 // pred_check
        %p497 = pneg %p261
      $region50: #{forward.1} parent=11 // pred_check_branch
        %499 = sbr.rel (%p497) target = $region52
      $region51: #{forward.1} parent=11 // pred_region
        _
      $region52: #{forward.1} parent=11 // pred_fallthru
        _
      // Predicated region
      $region53: #{forward.1} parent=11 // pred_check
        %p500 = pneg %p282
      $region54: #{forward.1} parent=11 // pred_check_branch
        %502 = sbr.rel (%p500) target = $region56
      $region55: #{forward.1} parent=11 // pred_region
        _
      $region56: #{forward.1} parent=11 // pred_fallthru
        _
      // Predicated region
      $region57: #{forward.1} parent=11 // pred_check
        %p503 = pneg %p303
      $region58: #{forward.1} parent=11 // pred_check_branch
        %505 = sbr.rel (%p503) target = $region60
      $region59: #{forward.1} parent=11 // pred_region
        _
      $region60: #{forward.1} parent=11 // pred_fallthru
        _
      // Predicated region
      $region61: #{forward.1} parent=11 // pred_check
        %p506 = pneg %p324
      $region62: #{forward.1} parent=11 // pred_check_branch
        %508 = sbr.rel (%p506) target = $region64
      $region63: #{forward.1} parent=11 // pred_region
        _
      $region64: #{forward.1} parent=11 // pred_fallthru
        _
      // Predicated region
      $region65: #{forward.1} parent=11 // pred_check
        %p509 = pneg %p345
      $region66: #{forward.1} parent=11 // pred_check_branch
        %511 = sbr.rel (%p509) target = $region68
      $region67: #{forward.1} parent=11 // pred_region
        _
      $region68: #{forward.1} parent=11 // pred_fallthru
        _
      // Predicated region
      $region69: #{forward.1} parent=11 // pred_check
        %p512 = pneg %p366
      $region70: #{forward.1} parent=11 // pred_check_branch
        %514 = sbr.rel (%p512) target = $region72
      $region71: #{forward.1} parent=11 // pred_region
        _
      $region72: #{forward.1} parent=11 // pred_fallthru
        _
      // Predicated region
      $region73: #{forward.1} parent=11 // pred_check
        %p515 = pneg %p387
      $region74: #{forward.1} parent=11 // pred_check_branch
        %517 = sbr.rel (%p515) target = $region76
      $region75: #{forward.1} parent=11 // pred_region
        _
      $region76: #{forward.1} parent=11 // pred_fallthru
        _
      // Predicated region
      $region77: #{forward.1} parent=11 // pred_check
        %p518 = pneg %p408
      $region78: #{forward.1} parent=11 // pred_check_branch
        %520 = sbr.rel (%p518) target = $region80
      $region79: #{forward.1} parent=11 // pred_region
        _
      $region80: #{forward.1} parent=11 // pred_fallthru
        _
      // Predicated region
      $region81: #{forward.1} parent=11 // pred_check
        %p521 = pneg %p429
      $region82: #{forward.1} parent=11 // pred_check_branch
        %523 = sbr.rel (%p521) target = $region84
      $region83: #{forward.1} parent=11 // pred_region
        _
      $region84: #{forward.1} parent=11 // pred_fallthru
        _
    $region12: #{forward.1} parent=5 // pred_fallthru
      _
    %p524 = scmp.lt.s32.totalorder %s25, 2
    // Predicated region
    $region85: #{forward.1} parent=5 // pred_check
      %p525 = pneg %p524
    $region86: #{forward.1} parent=5 // pred_check_branch
      %527 = sbr.rel (%p525) target = $region88
    $region87: #{forward.1} parent=5 // pred_region
      // Predicated region
      $region89: #{forward.1} parent=87 // pred_check
        %p528 = pneg %p45
      $region90: #{forward.1} parent=87 // pred_check_branch
        %530 = sbr.rel (%p528) target = $region92
      $region91: #{forward.1} parent=87 // pred_region
        %s531 = smul.u32 4, %s25
        %p532 = scmp.lt.s32.totalorder %s531, 7
        %s533 = scalar_select %p532, %s531, 7
        %s534 = smul.addr %s533, 4
        %s535 = scalar_lea.vmem %s0, %s534
        %s536 = smul.u32 4, %s25
      $region92: #{forward.1} parent=87 // pred_fallthru
        _
    $region88: #{forward.1} parent=5 // pred_fallthru
      _
    %p537 = scmp.le.s32.totalorder 1, %s25
    %p538 = scmp.lt.s32.totalorder %s25, 3
    %p539 = pnand %p537, %p538
    %p540 = pneg %p539
    // Predicated region
    $region93: #{forward.1} parent=5 // pred_check
      _
    $region94: #{forward.1} parent=5 // pred_check_branch
      %542 = sbr.rel (%p539) target = $region96
    $region95: #{forward.1} parent=5 // pred_region
      %s543 = ssub.s32 %s25, 1
      %s544 = smul.u32 4, %s30
      %p545 = scmp.lt.s32.totalorder %s544, 7
      %s546 = scalar_select %p545, %s544, 7
      %s547 = smul.addr %s546, 4
      %s548 = scalar_lea.vmem %s0, %s547
      %p549 = pneg %p51
      %p550 = pneg %p48
      %p551 = pneg %p72
      %p552 = pneg %p69
      %p553 = pneg %p93
      %p554 = pneg %p90
      %p555 = pneg %p114
      %p556 = pneg %p111
      %p557 = pneg %p135
      %p558 = pneg %p132
      %p559 = pneg %p156
      %p560 = pneg %p153
      %p561 = pneg %p177
      %p562 = pneg %p174
      %p563 = pneg %p198
      %p564 = pneg %p195
      %p565 = pneg %p219
      %p566 = pneg %p216
      %p567 = pneg %p240
      %p568 = pneg %p237
      %p569 = pneg %p261
      %p570 = pneg %p258
      %p571 = pneg %p282
      %p572 = pneg %p279
      %p573 = pneg %p303
      %p574 = pneg %p300
      %p575 = pneg %p324
      %p576 = pneg %p321
      %p577 = pneg %p345
      %p578 = pneg %p342
      %p579 = pneg %p366
      %p580 = pneg %p363
      %p581 = pneg %p387
      %p582 = pneg %p384
      %p583 = pneg %p408
      %p584 = pneg %p405
      %p585 = pneg %p429
      %p586 = pneg %p426
      %p587 = pneg %p455
      %p588 = pneg %p452
      %s589 = smul.u32 4, %s30
      %p590 = scmp.lt.s32.totalorder %s589, 7
      %s591 = scalar_select %p590, %s589, 7
      %s592 = smul.addr %s591, 8
      %s593 = scalar_lea.vmem %s19, %s592
      %s594 = smul.u32 4, %s30
      %p595 = scmp.lt.s32.totalorder %s594, 7
      %s596 = scalar_select %p595, %s594, 7
      %s597 = smul.addr %s596, 4
      %s598 = scalar_lea.vmem %s0, %s597
      %s599 = smul.u32 4, %s30
      %s600 = smul.u32 4, %s30
      %p601 = scmp.lt.s32.totalorder %s600, 7
      %s602 = scalar_select %p601, %s600, 7
      %s603 = smul.addr %s602, 8
      %s604 = scalar_lea.vmem %s19, %s603
      %s605 = smul.u32 4, %s30
      %v607 = vld [vmem:[%s598] sm:$0xf]
      %v608 = vld [vmem:[%s598 + $0x4] sm:$0xf]
      %v609 = vld [vmem:[%s598 + $0x8] sm:$0xf]
      %v610 = vld [vmem:[%s598 + $0xc] sm:$0xf]
      %v611 = vld [vmem:[%s1] sm:$0xf]
      %v612 = vld [vmem:[%s1 + $0x4] sm:$0xf]
      %v615 = vunpack.c.l.b16 %v611
      %v616 = vunpack.c.l.b16 %v612
      %v617 = vpack.c.b16 %v616, %v615
      %v622 = vunpack.c.l.b16 %v607
      %v623 = vunpack.c.l.b16 %v608
      %v624 = vunpack.c.l.b16 %v609
      %v625 = vunpack.c.l.b16 %v610
      %v626 = vpack.c.b16 %v623, %v622
      %v627 = vpack.c.b16 %v625, %v624
      %vm630 = vcmask 261120
      %v632 = vsel %vm630, %v617, 0
      %634 = vmatprep.subr.bf16.mxu0 0
      %635 = vmatpush1.bf16.msra.mxu0 %v626
      %636 = vmatprep.subr.bf16.mxu0 0
      %637 = vmatpush1.bf16.msra.mxu0 %v627
      %638 = vmatprep.subr.bf16.mxu0 0
      %639 = vmatpush1.bf16.msra.mxu0 0
      %640 = vmatprep.subr.bf16.mxu0 0
      %641 = vmatpush1.bf16.msra.mxu0 0
      %642 = vmatprep.subr.bf16.mxu0 0
      %643 = vmatpush1.bf16.msra.mxu0 0
      %644 = vmatprep.subr.bf16.mxu0 0
      %645 = vmatpush1.bf16.msra.mxu0 0
      %646 = vmatprep.subr.bf16.mxu0 0
      %647 = vmatpush1.bf16.msra.mxu0 0
      %648 = vmatprep.subr.bf16.mxu0 0
      %649 = vmatpush1.bf16.msra.mxu0 0
      %650 = vmatprep.subr.bf16.mxu0 0
      %651 = vmatpush1.bf16.msra.mxu0 0
      %652 = vmatprep.subr.bf16.mxu0 0
      %653 = vmatpush1.bf16.msra.mxu0 0
      %654 = vmatprep.subr.bf16.mxu0 0
      %655 = vmatpush1.bf16.msra.mxu0 0
      %656 = vmatprep.subr.bf16.mxu0 0
      %657 = vmatpush1.bf16.msra.mxu0 0
      %658 = vmatprep.subr.bf16.mxu0 0
      %659 = vmatpush1.bf16.msra.mxu0 0
      %660 = vmatprep.subr.bf16.mxu0 0
      %661 = vmatpush1.bf16.msra.mxu0 0
      %662 = vmatprep.subr.bf16.mxu0 0
      %663 = vmatpush1.bf16.msra.mxu0 0
      %664 = vmatprep.subr.bf16.mxu0 0
      %665 = vmatpush1.bf16.msra.mxu0 0
      %666 = vmatprep.mubr.bf16.mxu0 0
      %667 = vmatmul.mubr.bf16.gmra.mrb[0].mxu0 %v632
      %v668 = vpop.f32.mrb[0].mxu0
      %v669 = vadd.f32 0.0, %v668
      %v670 = vpop.f32.mrb[0].mxu0
      %v671 = vpop.f32.mrb[0].mxu0
      %v672 = vadd.f32 0.0, %v671
      %v673 = vpop.f32.mrb[0].mxu0
      %674 = vdwg.mxu0
      %v675 = vpack.c.bf16 %v672, %v669
      %s676 = scalar_lea.vmem %s1, 8
      %v677 = vld [vmem:[%s676] sm:$0xf]
      %v678 = vld [vmem:[%s676 + $0x4] sm:$0xf]
      %v681 = vunpack.c.l.b16 %v677
      %v682 = vunpack.c.l.b16 %v678
      %v683 = vpack.c.b16 %v682, %v681
      %v685 = vsel %vm630, %v683, 0
      %687 = vmatprep.subr.bf16.mxu0 0
      %688 = vmatpush1.bf16.msra.mxu0 %v626
      %689 = vmatprep.subr.bf16.mxu0 0
      %690 = vmatpush1.bf16.msra.mxu0 %v627
      %691 = vmatprep.subr.bf16.mxu0 0
      %692 = vmatpush1.bf16.msra.mxu0 0
      %693 = vmatprep.subr.bf16.mxu0 0
      %694 = vmatpush1.bf16.msra.mxu0 0
      %695 = vmatprep.subr.bf16.mxu0 0
      %696 = vmatpush1.bf16.msra.mxu0 0
      %697 = vmatprep.subr.bf16.mxu0 0
      %698 = vmatpush1.bf16.msra.mxu0 0
      %699 = vmatprep.subr.bf16.mxu0 0
      %700 = vmatpush1.bf16.msra.mxu0 0
      %701 = vmatprep.subr.bf16.mxu0 0
      %702 = vmatpush1.bf16.msra.mxu0 0
      %703 = vmatprep.subr.bf16.mxu0 0
      %704 = vmatpush1.bf16.msra.mxu0 0
      %705 = vmatprep.subr.bf16.mxu0 0
      %706 = vmatpush1.bf16.msra.mxu0 0
      %707 = vmatprep.subr.bf16.mxu0 0
      %708 = vmatpush1.bf16.msra.mxu0 0
      %709 = vmatprep.subr.bf16.mxu0 0
      %710 = vmatpush1.bf16.msra.mxu0 0
      %711 = vmatprep.subr.bf16.mxu0 0
      %712 = vmatpush1.bf16.msra.mxu0 0
      %713 = vmatprep.subr.bf16.mxu0 0
      %714 = vmatpush1.bf16.msra.mxu0 0
      %715 = vmatprep.subr.bf16.mxu0 0
      %716 = vmatpush1.bf16.msra.mxu0 0
      %717 = vmatprep.subr.bf16.mxu0 0
      %718 = vmatpush1.bf16.msra.mxu0 0
      %719 = vmatprep.mubr.bf16.mxu0 0
      %720 = vmatmul.mubr.bf16.gmra.mrb[0].mxu0 %v685
      %v721 = vpop.f32.mrb[0].mxu0
      %v722 = vadd.f32 0.0, %v721
      %v723 = vpop.f32.mrb[0].mxu0
      %v724 = vpop.f32.mrb[0].mxu0
      %v725 = vadd.f32 0.0, %v724
      %v726 = vpop.f32.mrb[0].mxu0
      %727 = vdwg.mxu0
      %v728 = vpack.c.bf16 %v725, %v722
      %s729 = scalar_lea.vmem %s1, 16
      %v730 = vld [vmem:[%s729] sm:$0xf]
      %v731 = vld [vmem:[%s729 + $0x4] sm:$0xf]
      %v734 = vunpack.c.l.b16 %v730
      %v735 = vunpack.c.l.b16 %v731
      %v736 = vpack.c.b16 %v735, %v734
      %v738 = vsel %vm630, %v736, 0
      %740 = vmatprep.subr.bf16.mxu0 0
      %741 = vmatpush1.bf16.msra.mxu0 %v626
      %742 = vmatprep.subr.bf16.mxu0 0
      %743 = vmatpush1.bf16.msra.mxu0 %v627
      %744 = vmatprep.subr.bf16.mxu0 0
      %745 = vmatpush1.bf16.msra.mxu0 0
      %746 = vmatprep.subr.bf16.mxu0 0
      %747 = vmatpush1.bf16.msra.mxu0 0
      %748 = vmatprep.subr.bf16.mxu0 0
      %749 = vmatpush1.bf16.msra.mxu0 0
      %750 = vmatprep.subr.bf16.mxu0 0
      %751 = vmatpush1.bf16.msra.mxu0 0
      %752 = vmatprep.subr.bf16.mxu0 0
      %753 = vmatpush1.bf16.msra.mxu0 0
      %754 = vmatprep.subr.bf16.mxu0 0
      %755 = vmatpush1.bf16.msra.mxu0 0
      %756 = vmatprep.subr.bf16.mxu0 0
      %757 = vmatpush1.bf16.msra.mxu0 0
      %758 = vmatprep.subr.bf16.mxu0 0
      %759 = vmatpush1.bf16.msra.mxu0 0
      %760 = vmatprep.subr.bf16.mxu0 0
      %761 = vmatpush1.bf16.msra.mxu0 0
      %762 = vmatprep.subr.bf16.mxu0 0
      %763 = vmatpush1.bf16.msra.mxu0 0
      %764 = vmatprep.subr.bf16.mxu0 0
      %765 = vmatpush1.bf16.msra.mxu0 0
      %766 = vmatprep.subr.bf16.mxu0 0
      %767 = vmatpush1.bf16.msra.mxu0 0
      %768 = vmatprep.subr.bf16.mxu0 0
      %769 = vmatpush1.bf16.msra.mxu0 0
      %770 = vmatprep.subr.bf16.mxu0 0
      %771 = vmatpush1.bf16.msra.mxu0 0
      %772 = vmatprep.mubr.bf16.mxu0 0
      %773 = vmatmul.mubr.bf16.gmra.mrb[0].mxu0 %v738
      %v774 = vpop.f32.mrb[0].mxu0
      %v775 = vadd.f32 0.0, %v774
      %v776 = vpop.f32.mrb[0].mxu0
      %v777 = vpop.f32.mrb[0].mxu0
      %v778 = vadd.f32 0.0, %v777
      %v779 = vpop.f32.mrb[0].mxu0
      %780 = vdwg.mxu0
      %v781 = vpack.c.bf16 %v778, %v775
      %v782 = vld [vmem:[%s2] sm:$0xff]
      %v783 = vld [vmem:[%s2 + $0x8] sm:$0xff]
      %v784 = vld [vmem:[%s2 + $0x10] sm:$0xff]
      %v785 = vld [vmem:[%s2 + $0x18] sm:$0xff]
      %v786 = vld [vmem:[%s2 + $0x20] sm:$0xff]
      %v787 = vld [vmem:[%s2 + $0x28] sm:$0xff]
      %v788 = vld [vmem:[%s2 + $0x30] sm:$0xff]
      %v789 = vld [vmem:[%s2 + $0x38] sm:$0xff]
      %v790 = vld [vmem:[%s2 + $0x40] sm:$0xff]
      %v791 = vld [vmem:[%s2 + $0x48] sm:$0xff]
      %v792 = vld [vmem:[%s2 + $0x50] sm:$0xff]
      %v793 = vld [vmem:[%s2 + $0x58] sm:$0xff]
      %v794 = vld [vmem:[%s2 + $0x60] sm:$0xff]
      %v795 = vld [vmem:[%s2 + $0x68] sm:$0xff]
      %v796 = vld [vmem:[%s2 + $0x70] sm:$0xff]
      %v797 = vld [vmem:[%s2 + $0x78] sm:$0xff]
      %v798 = vld [vmem:[%s2 + $0x80] sm:$0xff]
      %v799 = vld [vmem:[%s2 + $0x88] sm:$0xff]
      %v800 = vld [vmem:[%s2 + $0x90] sm:$0xff]
      %v801 = vld [vmem:[%s2 + $0x98] sm:$0xff]
      %v802 = vld [vmem:[%s2 + $0xa0] sm:$0xff]
      %v803 = vld [vmem:[%s2 + $0xa8] sm:$0xff]
      %v804 = vld [vmem:[%s2 + $0xb0] sm:$0xff]
      %v805 = vld [vmem:[%s2 + $0xb8] sm:$0xff]
      %v806 = vld [vmem:[%s2 + $0xc0] sm:$0xff]
      %v807 = vld [vmem:[%s2 + $0xc8] sm:$0xff]
      %v808 = vld [vmem:[%s2 + $0xd0] sm:$0xff]
      %v809 = vld [vmem:[%s2 + $0xd8] sm:$0xff]
      %v810 = vld [vmem:[%s2 + $0xe0] sm:$0xff]
      %v811 = vld [vmem:[%s2 + $0xe8] sm:$0xff]
      %v812 = vld [vmem:[%s2 + $0xf0] sm:$0xff]
      %v813 = vld [vmem:[%s2 + $0xf8] sm:$0xff]
      %v814 = vld [vmem:[%s2 + $0x100] sm:$0xff]
      %v815 = vld [vmem:[%s2 + $0x108] sm:$0xff]
      %v816 = vld [vmem:[%s2 + $0x110] sm:$0xff]
      %v817 = vld [vmem:[%s2 + $0x118] sm:$0xff]
      %v818 = vld [vmem:[%s2 + $0x120] sm:$0xff]
      %v819 = vld [vmem:[%s2 + $0x128] sm:$0xff]
      %v820 = vld [vmem:[%s2 + $0x130] sm:$0xff]
      %v821 = vld [vmem:[%s2 + $0x138] sm:$0xff]
      %v822 = vld [vmem:[%s2 + $0x140] sm:$0xff]
      %v823 = vld [vmem:[%s2 + $0x148] sm:$0xff]
      %v824 = vld [vmem:[%s2 + $0x150] sm:$0xff]
      %v825 = vld [vmem:[%s2 + $0x158] sm:$0xff]
      %v826 = vld [vmem:[%s2 + $0x160] sm:$0xff]
      %v827 = vld [vmem:[%s2 + $0x168] sm:$0xff]
      %v828 = vld [vmem:[%s2 + $0x170] sm:$0xff]
      %v829 = vld [vmem:[%s2 + $0x178] sm:$0xff]
      %v830 = vld [vmem:[%s3] sm:$0x3]
      %v832 = vlaneseq
      %v833 = vshrl.u32 %v832, 7
      %v834 = vsub.s32 0, %v833
      %v835 = vrot.slane %v830, %v834
      %v836 = vlaneseq
      %v837 = vshrl.u32 %v836, 7
      %v838 = vsub.s32 1, %v837
      %v839 = vrot.slane %v830, %v838
      %v890 = vunpack.c.l.b16 %v782
      %v891 = vunpack.c.h.b16 %v782
      %v892 = vunpack.c.l.b16 %v783
      %v893 = vunpack.c.h.b16 %v783
      %v894 = vunpack.c.l.b16 %v784
      %v895 = vunpack.c.h.b16 %v784
      %v896 = vunpack.c.l.b16 %v785
      %v897 = vunpack.c.h.b16 %v785
      %v898 = vunpack.c.l.b16 %v786
      %v899 = vunpack.c.h.b16 %v786
      %v900 = vunpack.c.l.b16 %v787
      %v901 = vunpack.c.h.b16 %v787
      %v902 = vunpack.c.l.b16 %v788
      %v903 = vunpack.c.h.b16 %v788
      %v904 = vunpack.c.l.b16 %v789
      %v905 = vunpack.c.h.b16 %v789
      %v906 = vunpack.c.l.b16 %v790
      %v907 = vunpack.c.h.b16 %v790
      %v908 = vunpack.c.l.b16 %v791
      %v909 = vunpack.c.h.b16 %v791
      %v910 = vunpack.c.l.b16 %v792
      %v911 = vunpack.c.h.b16 %v792
      %v912 = vunpack.c.l.b16 %v793
      %v913 = vunpack.c.h.b16 %v793
      %v914 = vunpack.c.l.b16 %v794
      %v915 = vunpack.c.h.b16 %v794
      %v916 = vunpack.c.l.b16 %v795
      %v917 = vunpack.c.h.b16 %v795
      %v918 = vunpack.c.l.b16 %v796
      %v919 = vunpack.c.h.b16 %v796
      %v920 = vunpack.c.l.b16 %v797
      %v921 = vunpack.c.h.b16 %v797
      %v922 = vunpack.c.l.b16 %v798
      %v923 = vunpack.c.h.b16 %v798
      %v924 = vunpack.c.l.b16 %v799
      %v925 = vunpack.c.h.b16 %v799
      %v926 = vunpack.c.l.b16 %v800
      %v927 = vunpack.c.h.b16 %v800
      %v928 = vunpack.c.l.b16 %v801
      %v929 = vunpack.c.h.b16 %v801
      %v930 = vunpack.c.l.b16 %v802
      %v931 = vunpack.c.h.b16 %v802
      %v932 = vunpack.c.l.b16 %v803
      %v933 = vunpack.c.h.b16 %v803
      %v934 = vunpack.c.l.b16 %v804
      %v935 = vunpack.c.h.b16 %v804
      %v936 = vunpack.c.l.b16 %v805
      %v937 = vunpack.c.h.b16 %v805
      %v938 = vunpack.c.l.b16 %v806
      %v939 = vunpack.c.h.b16 %v806
      %v940 = vunpack.c.l.b16 %v807
      %v941 = vunpack.c.h.b16 %v807
      %v942 = vunpack.c.l.b16 %v808
      %v943 = vunpack.c.h.b16 %v808
      %v944 = vunpack.c.l.b16 %v809
      %v945 = vunpack.c.h.b16 %v809
      %v946 = vunpack.c.l.b16 %v810
      %v947 = vunpack.c.h.b16 %v810
      %v948 = vunpack.c.l.b16 %v811
      %v949 = vunpack.c.h.b16 %v811
      %v950 = vunpack.c.l.b16 %v812
      %v951 = vunpack.c.h.b16 %v812
      %v952 = vunpack.c.l.b16 %v813
      %v953 = vunpack.c.h.b16 %v813
      %v954 = vunpack.c.l.b16 %v814
      %v955 = vunpack.c.h.b16 %v814
      %v956 = vunpack.c.l.b16 %v815
      %v957 = vunpack.c.h.b16 %v815
      %v958 = vunpack.c.l.b16 %v816
      %v959 = vunpack.c.h.b16 %v816
      %v960 = vunpack.c.l.b16 %v817
      %v961 = vunpack.c.h.b16 %v817
      %v962 = vunpack.c.l.b16 %v818
      %v963 = vunpack.c.h.b16 %v818
      %v964 = vunpack.c.l.b16 %v819
      %v965 = vunpack.c.h.b16 %v819
      %v966 = vunpack.c.l.b16 %v820
      %v967 = vunpack.c.h.b16 %v820
      %v968 = vunpack.c.l.b16 %v821
      %v969 = vunpack.c.h.b16 %v821
      %v970 = vunpack.c.l.b16 %v822
      %v971 = vunpack.c.h.b16 %v822
      %v972 = vunpack.c.l.b16 %v823
      %v973 = vunpack.c.h.b16 %v823
      %v974 = vunpack.c.l.b16 %v824
      %v975 = vunpack.c.h.b16 %v824
      %v976 = vunpack.c.l.b16 %v825
      %v977 = vunpack.c.h.b16 %v825
      %v978 = vunpack.c.l.b16 %v826
      %v979 = vunpack.c.h.b16 %v826
      %v980 = vunpack.c.l.b16 %v827
      %v981 = vunpack.c.h.b16 %v827
      %v982 = vunpack.c.l.b16 %v828
      %v983 = vunpack.c.h.b16 %v828
      %v984 = vunpack.c.l.b16 %v829
      %v985 = vunpack.c.h.b16 %v829
      %v986 = vpack.c.b16 %v892, %v890
      %v987 = vpack.c.b16 %v893, %v891
      %v988 = vpack.c.b16 %v896, %v894
      %v989 = vpack.c.b16 %v897, %v895
      %v990 = vpack.c.b16 %v900, %v898
      %v991 = vpack.c.b16 %v901, %v899
      %v992 = vpack.c.b16 %v904, %v902
      %v993 = vpack.c.b16 %v905, %v903
      %v994 = vpack.c.b16 %v908, %v906
      %v995 = vpack.c.b16 %v909, %v907
      %v996 = vpack.c.b16 %v912, %v910
      %v997 = vpack.c.b16 %v913, %v911
      %v998 = vpack.c.b16 %v916, %v914
      %v999 = vpack.c.b16 %v917, %v915
      %v1000 = vpack.c.b16 %v920, %v918
      %v1001 = vpack.c.b16 %v921, %v919
      %v1002 = vpack.c.b16 %v924, %v922
      %v1003 = vpack.c.b16 %v925, %v923
      %v1004 = vpack.c.b16 %v928, %v926
      %v1005 = vpack.c.b16 %v929, %v927
      %v1006 = vpack.c.b16 %v932, %v930
      %v1007 = vpack.c.b16 %v933, %v931
      %v1008 = vpack.c.b16 %v936, %v934
      %v1009 = vpack.c.b16 %v937, %v935
      %v1010 = vpack.c.b16 %v940, %v938
      %v1011 = vpack.c.b16 %v941, %v939
      %v1012 = vpack.c.b16 %v944, %v942
      %v1013 = vpack.c.b16 %v945, %v943
      %v1014 = vpack.c.b16 %v948, %v946
      %v1015 = vpack.c.b16 %v949, %v947
      %v1016 = vpack.c.b16 %v952, %v950
      %v1017 = vpack.c.b16 %v953, %v951
      %v1018 = vpack.c.b16 %v956, %v954
      %v1019 = vpack.c.b16 %v957, %v955
      %v1020 = vpack.c.b16 %v960, %v958
      %v1021 = vpack.c.b16 %v961, %v959
      %v1022 = vpack.c.b16 %v964, %v962
      %v1023 = vpack.c.b16 %v965, %v963
      %v1024 = vpack.c.b16 %v968, %v966
      %v1025 = vpack.c.b16 %v969, %v967
      %v1026 = vpack.c.b16 %v972, %v970
      %v1027 = vpack.c.b16 %v973, %v971
      %v1028 = vpack.c.b16 %v976, %v974
      %v1029 = vpack.c.b16 %v977, %v975
      %v1030 = vpack.c.b16 %v980, %v978
      %v1031 = vpack.c.b16 %v981, %v979
      %v1032 = vpack.c.b16 %v984, %v982
      %v1033 = vpack.c.b16 %v985, %v983
      %1082 = vmatprep.subr.bf16.mxu0 %v987
      %1083 = vmatpush1.bf16.msra.mxu0 %v986
      %1084 = vmatprep.subr.bf16.mxu0 %v989
      %1085 = vmatpush1.bf16.msra.mxu0 %v988
      %1086 = vmatprep.subr.bf16.mxu0 %v991
      %1087 = vmatpush1.bf16.msra.mxu0 %v990
      %1088 = vmatprep.subr.bf16.mxu0 %v993
      %1089 = vmatpush1.bf16.msra.mxu0 %v992
      %1090 = vmatprep.subr.bf16.mxu0 %v995
      %1091 = vmatpush1.bf16.msra.mxu0 %v994
      %1092 = vmatprep.subr.bf16.mxu0 %v997
      %1093 = vmatpush1.bf16.msra.mxu0 %v996
      %1094 = vmatprep.subr.bf16.mxu0 %v999
      %1095 = vmatpush1.bf16.msra.mxu0 %v998
      %1096 = vmatprep.subr.bf16.mxu0 %v1001
      %1097 = vmatpush1.bf16.msra.mxu0 %v1000
      %1098 = vmatprep.subr.bf16.mxu0 %v1003
      %1099 = vmatpush1.bf16.msra.mxu0 %v1002
      %1100 = vmatprep.subr.bf16.mxu0 %v1005
      %1101 = vmatpush1.bf16.msra.mxu0 %v1004
      %1102 = vmatprep.subr.bf16.mxu0 %v1007
      %1103 = vmatpush1.bf16.msra.mxu0 %v1006
      %1104 = vmatprep.subr.bf16.mxu0 %v1009
      %1105 = vmatpush1.bf16.msra.mxu0 %v1008
      %1106 = vmatprep.subr.bf16.mxu0 %v1011
      %1107 = vmatpush1.bf16.msra.mxu0 %v1010
      %1108 = vmatprep.subr.bf16.mxu0 %v1013
      %1109 = vmatpush1.bf16.msra.mxu0 %v1012
      %1110 = vmatprep.subr.bf16.mxu0 %v1015
      %1111 = vmatpush1.bf16.msra.mxu0 %v1014
      %1112 = vmatprep.subr.bf16.mxu0 %v1017
      %1113 = vmatpush1.bf16.msra.mxu0 %v1016
      %1114 = vmatprep.mubr.bf16.mxu0 %v728
      %1115 = vmatmul.mubr.bf16.gmra.mrb[0].mxu0 %v675
      %v1116 = vpop.f32.mrb[0].mxu0
      %v1117 = vadd.f32 %v835, %v1116
      %v1118 = vpop.f32.mrb[0].mxu0
      %v1119 = vadd.f32 %v839, %v1118
      %v1120 = vpop.f32.mrb[0].mxu0
      %v1121 = vadd.f32 %v835, %v1120
      %v1122 = vpop.f32.mrb[0].mxu0
      %v1123 = vadd.f32 %v839, %v1122
      %1124 = vdwg.mxu0
      %1125 = vmatprep.subr.bf16.mxu0 %v1019
      %1126 = vmatpush1.bf16.msra.mxu0 %v1018
      %1127 = vmatprep.subr.bf16.mxu0 %v1021
      %1128 = vmatpush1.bf16.msra.mxu0 %v1020
      %1129 = vmatprep.subr.bf16.mxu0 %v1023
      %1130 = vmatpush1.bf16.msra.mxu0 %v1022
      %1131 = vmatprep.subr.bf16.mxu0 %v1025
      %1132 = vmatpush1.bf16.msra.mxu0 %v1024
      %1133 = vmatprep.subr.bf16.mxu0 %v1027
      %1134 = vmatpush1.bf16.msra.mxu0 %v1026
      %1135 = vmatprep.subr.bf16.mxu0 %v1029
      %1136 = vmatpush1.bf16.msra.mxu0 %v1028
      %1137 = vmatprep.subr.bf16.mxu0 %v1031
      %1138 = vmatpush1.bf16.msra.mxu0 %v1030
      %1139 = vmatprep.subr.bf16.mxu0 %v1033
      %1140 = vmatpush1.bf16.msra.mxu0 %v1032
      %1141 = vmatprep.subr.bf16.mxu0 0
      %1142 = vmatpush1.bf16.msra.mxu0 0
      %1143 = vmatprep.subr.bf16.mxu0 0
      %1144 = vmatpush1.bf16.msra.mxu0 0
      %1145 = vmatprep.subr.bf16.mxu0 0
      %1146 = vmatpush1.bf16.msra.mxu0 0
      %1147 = vmatprep.subr.bf16.mxu0 0
      %1148 = vmatpush1.bf16.msra.mxu0 0
      %1149 = vmatprep.subr.bf16.mxu0 0
      %1150 = vmatpush1.bf16.msra.mxu0 0
      %1151 = vmatprep.subr.bf16.mxu0 0
      %1152 = vmatpush1.bf16.msra.mxu0 0
      %1153 = vmatprep.subr.bf16.mxu0 0
      %1154 = vmatpush1.bf16.msra.mxu0 0
      %1155 = vmatprep.subr.bf16.mxu0 0
      %1156 = vmatpush1.bf16.msra.mxu0 0
      %1157 = vmatprep.mubr.bf16.mxu0 0
      %1158 = vmatmul.mubr.bf16.gmra.mrb[0].mxu0 %v781
      %v1159 = vpop.f32.mrb[0].mxu0
      %v1160 = vadd.f32 %v1117, %v1159
      %v1161 = vpop.f32.mrb[0].mxu0
      %v1162 = vadd.f32 %v1119, %v1161
      %v1163 = vpop.f32.mrb[0].mxu0
      %v1164 = vadd.f32 %v1121, %v1163
      %v1165 = vpop.f32.mrb[0].mxu0
      %v1166 = vadd.f32 %v1123, %v1165
      %1167 = vdwg.mxu0
      %v1168 = vmax.f32 %v1160, 0.0
      %v1169 = vmax.f32 %v1162, 0.0
      %v1170 = vmax.f32 %v1164, 0.0
      %v1171 = vmax.f32 %v1166, 0.0
      %v1172 = vpack.c.bf16 %v1170, %v1168
      %v1173 = vpack.c.bf16 %v1171, %v1169
      %v1174 = vld [vmem:[%s4] sm:$0xf]
      %vm1175 = vcmask 130048
      %v1177 = vsel %vm1175, %v1174, 0
      %1179 = vmatprep.subr.bf16.mxu0 %v1173
      %1180 = vmatpush1.bf16.msra.mxu0 %v1172
      %1181 = vmatprep.subr.bf16.mxu0 0
      %1182 = vmatpush1.bf16.msra.mxu0 0
      %1183 = vmatprep.subr.bf16.mxu0 0
      %1184 = vmatpush1.bf16.msra.mxu0 0
      %1185 = vmatprep.subr.bf16.mxu0 0
      %1186 = vmatpush1.bf16.msra.mxu0 0
      %1187 = vmatprep.subr.bf16.mxu0 0
      %1188 = vmatpush1.bf16.msra.mxu0 0
      %1189 = vmatprep.subr.bf16.mxu0 0
      %1190 = vmatpush1.bf16.msra.mxu0 0
      %1191 = vmatprep.subr.bf16.mxu0 0
      %1192 = vmatpush1.bf16.msra.mxu0 0
      %1193 = vmatprep.subr.bf16.mxu0 0
      %1194 = vmatpush1.bf16.msra.mxu0 0
      %1195 = vmatprep.subr.bf16.mxu0 0
      %1196 = vmatpush1.bf16.msra.mxu0 0
      %1197 = vmatprep.subr.bf16.mxu0 0
      %1198 = vmatpush1.bf16.msra.mxu0 0
      %1199 = vmatprep.subr.bf16.mxu0 0
      %1200 = vmatpush1.bf16.msra.mxu0 0
      %1201 = vmatprep.subr.bf16.mxu0 0
      %1202 = vmatpush1.bf16.msra.mxu0 0
      %1203 = vmatprep.subr.bf16.mxu0 0
      %1204 = vmatpush1.bf16.msra.mxu0 0
      %1205 = vmatprep.subr.bf16.mxu0 0
      %1206 = vmatpush1.bf16.msra.mxu0 0
      %1207 = vmatprep.subr.bf16.mxu0 0
      %1208 = vmatpush1.bf16.msra.mxu0 0
      %1209 = vmatprep.subr.bf16.mxu0 0
      %1210 = vmatpush1.bf16.msra.mxu0 0
      %1211 = vmatprep.mubr.bf16.mxu0 0
      %1212 = vmatmul.mubr.bf16.gmra.mrb[0].mxu0 %v1177
      %v1213 = vpop.f32.mrb[0].mxu0
      %v1214 = vadd.f32 0.0, %v1213
      %v1215 = vpop.f32.mrb[0].mxu0
      %v1216 = vadd.f32 0.0, %v1215
      %v1217 = vpop.f32.mrb[0].mxu0
      %v1218 = vpop.f32.mrb[0].mxu0
      %1219 = vdwg.mxu0
      %v1220 = vpack.c.bf16 %v1214, %v1214
      %v1221 = vpack.c.bf16 %v1216, %v1216
      %s1222 = scalar_lea.vmem %s4, 4
      %v1223 = vld [vmem:[%s1222] sm:$0xf]
      %v1225 = vsel %vm1175, %v1223, 0
      %1227 = vmatprep.subr.bf16.mxu0 %v1173
      %1228 = vmatpush1.bf16.msra.mxu0 %v1172
      %1229 = vmatprep.subr.bf16.mxu0 0
      %1230 = vmatpush1.bf16.msra.mxu0 0
      %1231 = vmatprep.subr.bf16.mxu0 0
      %1232 = vmatpush1.bf16.msra.mxu0 0
      %1233 = vmatprep.subr.bf16.mxu0 0
      %1234 = vmatpush1.bf16.msra.mxu0 0
      %1235 = vmatprep.subr.bf16.mxu0 0
      %1236 = vmatpush1.bf16.msra.mxu0 0
      %1237 = vmatprep.subr.bf16.mxu0 0
      %1238 = vmatpush1.bf16.msra.mxu0 0
      %1239 = vmatprep.subr.bf16.mxu0 0
      %1240 = vmatpush1.bf16.msra.mxu0 0
      %1241 = vmatprep.subr.bf16.mxu0 0
      %1242 = vmatpush1.bf16.msra.mxu0 0
      %1243 = vmatprep.subr.bf16.mxu0 0
      %1244 = vmatpush1.bf16.msra.mxu0 0
      %1245 = vmatprep.subr.bf16.mxu0 0
      %1246 = vmatpush1.bf16.msra.mxu0 0
      %1247 = vmatprep.subr.bf16.mxu0 0
      %1248 = vmatpush1.bf16.msra.mxu0 0
      %1249 = vmatprep.subr.bf16.mxu0 0
      %1250 = vmatpush1.bf16.msra.mxu0 0
      %1251 = vmatprep.subr.bf16.mxu0 0
      %1252 = vmatpush1.bf16.msra.mxu0 0
      %1253 = vmatprep.subr.bf16.mxu0 0
      %1254 = vmatpush1.bf16.msra.mxu0 0
      %1255 = vmatprep.subr.bf16.mxu0 0
      %1256 = vmatpush1.bf16.msra.mxu0 0
      %1257 = vmatprep.subr.bf16.mxu0 0
      %1258 = vmatpush1.bf16.msra.mxu0 0
      %1259 = vmatprep.mubr.bf16.mxu0 0
      %1260 = vmatmul.mubr.bf16.gmra.mrb[0].mxu0 %v1225
      %v1261 = vpop.f32.mrb[0].mxu0
      %v1262 = vadd.f32 0.0, %v1261
      %v1263 = vpop.f32.mrb[0].mxu0
      %v1264 = vadd.f32 0.0, %v1263
      %v1265 = vpop.f32.mrb[0].mxu0
      %v1266 = vpop.f32.mrb[0].mxu0
      %1267 = vdwg.mxu0
      %v1268 = vpack.c.bf16 %v1262, %v1262
      %v1269 = vpack.c.bf16 %v1264, %v1264
      %s1270 = scalar_lea.vmem %s4, 8
      %v1271 = vld [vmem:[%s1270] sm:$0xf]
      %v1273 = vsel %vm1175, %v1271, 0
      %1275 = vmatprep.subr.bf16.mxu0 %v1173
      %1276 = vmatpush1.bf16.msra.mxu0 %v1172
      %1277 = vmatprep.subr.bf16.mxu0 0
      %1278 = vmatpush1.bf16.msra.mxu0 0
      %1279 = vmatprep.subr.bf16.mxu0 0
      %1280 = vmatpush1.bf16.msra.mxu0 0
      %1281 = vmatprep.subr.bf16.mxu0 0
      %1282 = vmatpush1.bf16.msra.mxu0 0
      %1283 = vmatprep.subr.bf16.mxu0 0
      %1284 = vmatpush1.bf16.msra.mxu0 0
      %1285 = vmatprep.subr.bf16.mxu0 0
      %1286 = vmatpush1.bf16.msra.mxu0 0
      %1287 = vmatprep.subr.bf16.mxu0 0
      %1288 = vmatpush1.bf16.msra.mxu0 0
      %1289 = vmatprep.subr.bf16.mxu0 0
      %1290 = vmatpush1.bf16.msra.mxu0 0
      %1291 = vmatprep.subr.bf16.mxu0 0
      %1292 = vmatpush1.bf16.msra.mxu0 0
      %1293 = vmatprep.subr.bf16.mxu0 0
      %1294 = vmatpush1.bf16.msra.mxu0 0
      %1295 = vmatprep.subr.bf16.mxu0 0
      %1296 = vmatpush1.bf16.msra.mxu0 0
      %1297 = vmatprep.subr.bf16.mxu0 0
      %1298 = vmatpush1.bf16.msra.mxu0 0
      %1299 = vmatprep.subr.bf16.mxu0 0
      %1300 = vmatpush1.bf16.msra.mxu0 0
      %1301 = vmatprep.subr.bf16.mxu0 0
      %1302 = vmatpush1.bf16.msra.mxu0 0
      %1303 = vmatprep.subr.bf16.mxu0 0
      %1304 = vmatpush1.bf16.msra.mxu0 0
      %1305 = vmatprep.subr.bf16.mxu0 0
      %1306 = vmatpush1.bf16.msra.mxu0 0
      %1307 = vmatprep.mubr.bf16.mxu0 0
      %1308 = vmatmul.mubr.bf16.gmra.mrb[0].mxu0 %v1273
      %v1309 = vpop.f32.mrb[0].mxu0
      %v1310 = vadd.f32 0.0, %v1309
      %v1311 = vpop.f32.mrb[0].mxu0
      %v1312 = vadd.f32 0.0, %v1311
      %v1313 = vpop.f32.mrb[0].mxu0
      %v1314 = vpop.f32.mrb[0].mxu0
      %1315 = vdwg.mxu0
      %v1316 = vpack.c.bf16 %v1310, %v1310
      %v1317 = vpack.c.bf16 %v1312, %v1312
      %v1318 = vld [vmem:[%s5] sm:$0xff]
      %v1319 = vld [vmem:[%s5 + $0x8] sm:$0xff]
      %v1320 = vld [vmem:[%s5 + $0x10] sm:$0xff]
      %v1321 = vld [vmem:[%s5 + $0x18] sm:$0xff]
      %v1322 = vld [vmem:[%s5 + $0x20] sm:$0xff]
      %v1323 = vld [vmem:[%s5 + $0x28] sm:$0xff]
      %v1324 = vld [vmem:[%s5 + $0x30] sm:$0xff]
      %v1325 = vld [vmem:[%s5 + $0x38] sm:$0xff]
      %v1326 = vld [vmem:[%s5 + $0x40] sm:$0xff]
      %v1327 = vld [vmem:[%s5 + $0x48] sm:$0xff]
      %v1328 = vld [vmem:[%s5 + $0x50] sm:$0xff]
      %v1329 = vld [vmem:[%s5 + $0x58] sm:$0xff]
      %v1330 = vld [vmem:[%s5 + $0x60] sm:$0xff]
      %v1331 = vld [vmem:[%s5 + $0x68] sm:$0xff]
      %v1332 = vld [vmem:[%s5 + $0x70] sm:$0xff]
      %v1333 = vld [vmem:[%s5 + $0x78] sm:$0xff]
      %v1334 = vld [vmem:[%s5 + $0x80] sm:$0xff]
      %v1335 = vld [vmem:[%s5 + $0x88] sm:$0xff]
      %v1336 = vld [vmem:[%s5 + $0x90] sm:$0xff]
      %v1337 = vld [vmem:[%s5 + $0x98] sm:$0xff]
      %v1338 = vld [vmem:[%s5 + $0xa0] sm:$0xff]
      %v1339 = vld [vmem:[%s5 + $0xa8] sm:$0xff]
      %v1340 = vld [vmem:[%s5 + $0xb0] sm:$0xff]
      %v1341 = vld [vmem:[%s5 + $0xb8] sm:$0xff]
      %v1342 = vld [vmem:[%s5 + $0xc0] sm:$0xff]
      %v1343 = vld [vmem:[%s5 + $0xc8] sm:$0xff]
      %v1344 = vld [vmem:[%s5 + $0xd0] sm:$0xff]
      %v1345 = vld [vmem:[%s5 + $0xd8] sm:$0xff]
      %v1346 = vld [vmem:[%s5 + $0xe0] sm:$0xff]
      %v1347 = vld [vmem:[%s5 + $0xe8] sm:$0xff]
      %v1348 = vld [vmem:[%s5 + $0xf0] sm:$0xff]
      %v1349 = vld [vmem:[%s5 + $0xf8] sm:$0xff]
      %v1350 = vld [vmem:[%s5 + $0x100] sm:$0xff]
      %v1351 = vld [vmem:[%s5 + $0x108] sm:$0xff]
      %v1352 = vld [vmem:[%s5 + $0x110] sm:$0xff]
      %v1353 = vld [vmem:[%s5 + $0x118] sm:$0xff]
      %v1354 = vld [vmem:[%s5 + $0x120] sm:$0xff]
      %v1355 = vld [vmem:[%s5 + $0x128] sm:$0xff]
      %v1356 = vld [vmem:[%s5 + $0x130] sm:$0xff]
      %v1357 = vld [vmem:[%s5 + $0x138] sm:$0xff]
      %v1358 = vld [vmem:[%s5 + $0x140] sm:$0xff]
      %v1359 = vld [vmem:[%s5 + $0x148] sm:$0xff]
      %v1360 = vld [vmem:[%s5 + $0x150] sm:$0xff]
      %v1361 = vld [vmem:[%s5 + $0x158] sm:$0xff]
      %v1362 = vld [vmem:[%s5 + $0x160] sm:$0xff]
      %v1363 = vld [vmem:[%s5 + $0x168] sm:$0xff]
      %v1364 = vld [vmem:[%s5 + $0x170] sm:$0xff]
      %v1365 = vld [vmem:[%s5 + $0x178] sm:$0xff]
      %v1366 = vld [vmem:[%s5 + $0x180] sm:$0xff]
      %v1367 = vld [vmem:[%s5 + $0x188] sm:$0xff]
      %v1368 = vld [vmem:[%s5 + $0x190] sm:$0xff]
      %v1369 = vld [vmem:[%s5 + $0x198] sm:$0xff]
      %v1370 = vld [vmem:[%s5 + $0x1a0] sm:$0xff]
      %v1371 = vld [vmem:[%s5 + $0x1a8] sm:$0xff]
      %v1372 = vld [vmem:[%s5 + $0x1b0] sm:$0xff]
      %v1373 = vld [vmem:[%s5 + $0x1b8] sm:$0xff]
      %v1374 = vld [vmem:[%s5 + $0x1c0] sm:$0xff]
      %v1375 = vld [vmem:[%s5 + $0x1c8] sm:$0xff]
      %v1376 = vld [vmem:[%s5 + $0x1d0] sm:$0xff]
      %v1377 = vld [vmem:[%s5 + $0x1d8] sm:$0xff]
      %v1378 = vld [vmem:[%s5 + $0x1e0] sm:$0xff]
      %v1379 = vld [vmem:[%s5 + $0x1e8] sm:$0xff]
      %v1380 = vld [vmem:[%s5 + $0x1f0] sm:$0xff]
      %v1381 = vld [vmem:[%s5 + $0x1f8] sm:$0xff]
      %v1382 = vld [vmem:[%s5 + $0x200] sm:$0xff]
      %v1383 = vld [vmem:[%s5 + $0x208] sm:$0xff]
      %v1384 = vld [vmem:[%s5 + $0x210] sm:$0xff]
      %v1385 = vld [vmem:[%s5 + $0x218] sm:$0xff]
      %v1386 = vld [vmem:[%s5 + $0x220] sm:$0xff]
      %v1387 = vld [vmem:[%s5 + $0x228] sm:$0xff]
      %v1388 = vld [vmem:[%s5 + $0x230] sm:$0xff]
      %v1389 = vld [vmem:[%s5 + $0x238] sm:$0xff]
      %v1390 = vld [vmem:[%s5 + $0x240] sm:$0xff]
      %v1391 = vld [vmem:[%s5 + $0x248] sm:$0xff]
      %v1392 = vld [vmem:[%s5 + $0x250] sm:$0xff]
      %v1393 = vld [vmem:[%s5 + $0x258] sm:$0xff]
      %v1394 = vld [vmem:[%s5 + $0x260] sm:$0xff]
      %v1395 = vld [vmem:[%s5 + $0x268] sm:$0xff]
      %v1396 = vld [vmem:[%s5 + $0x270] sm:$0xff]
      %v1397 = vld [vmem:[%s5 + $0x278] sm:$0xff]
      %v1398 = vld [vmem:[%s5 + $0x280] sm:$0xff]
      %v1399 = vld [vmem:[%s5 + $0x288] sm:$0xff]
      %v1400 = vld [vmem:[%s5 + $0x290] sm:$0xff]
      %v1401 = vld [vmem:[%s5 + $0x298] sm:$0xff]
      %v1402 = vld [vmem:[%s5 + $0x2a0] sm:$0xff]
      %v1403 = vld [vmem:[%s5 + $0x2a8] sm:$0xff]
      %v1404 = vld [vmem:[%s5 + $0x2b0] sm:$0xff]
      %v1405 = vld [vmem:[%s5 + $0x2b8] sm:$0xff]
      %v1406 = vld [vmem:[%s5 + $0x2c0] sm:$0xff]
      %v1407 = vld [vmem:[%s5 + $0x2c8] sm:$0xff]
      %v1408 = vld [vmem:[%s5 + $0x2d0] sm:$0xff]
      %v1409 = vld [vmem:[%s5 + $0x2d8] sm:$0xff]
      %v1410 = vld [vmem:[%s5 + $0x2e0] sm:$0xff]
      %v1411 = vld [vmem:[%s5 + $0x2e8] sm:$0xff]
      %v1412 = vld [vmem:[%s5 + $0x2f0] sm:$0xff]
      %v1413 = vld [vmem:[%s5 + $0x2f8] sm:$0xff]
      %v1414 = vld [vmem:[%s6] sm:$0x3]
      %v1416 = vlaneseq
      %v1417 = vshrl.u32 %v1416, 7
      %v1418 = vsub.s32 0, %v1417
      %v1419 = vrot.slane %v1414, %v1418
      %v1420 = vlaneseq
      %v1421 = vshrl.u32 %v1420, 7
      %v1422 = vsub.s32 1, %v1421
      %v1423 = vrot.slane %v1414, %v1422
      %v1522 = vunpack.c.l.b16 %v1318
      %v1523 = vunpack.c.h.b16 %v1318
      %v1524 = vunpack.c.l.b16 %v1319
      %v1525 = vunpack.c.h.b16 %v1319
      %v1526 = vunpack.c.l.b16 %v1320
      %v1527 = vunpack.c.h.b16 %v1320
      %v1528 = vunpack.c.l.b16 %v1321
      %v1529 = vunpack.c.h.b16 %v1321
      %v1530 = vunpack.c.l.b16 %v1322
      %v1531 = vunpack.c.h.b16 %v1322
      %v1532 = vunpack.c.l.b16 %v1323
      %v1533 = vunpack.c.h.b16 %v1323
      %v1534 = vunpack.c.l.b16 %v1324
      %v1535 = vunpack.c.h.b16 %v1324
      %v1536 = vunpack.c.l.b16 %v1325
      %v1537 = vunpack.c.h.b16 %v1325
      %v1538 = vunpack.c.l.b16 %v1326
      %v1539 = vunpack.c.h.b16 %v1326
      %v1540 = vunpack.c.l.b16 %v1327
      %v1541 = vunpack.c.h.b16 %v1327
      %v1542 = vunpack.c.l.b16 %v1328
      %v1543 = vunpack.c.h.b16 %v1328
      %v1544 = vunpack.c.l.b16 %v1329
      %v1545 = vunpack.c.h.b16 %v1329
      %v1546 = vunpack.c.l.b16 %v1330
      %v1547 = vunpack.c.h.b16 %v1330
      %v1548 = vunpack.c.l.b16 %v1331
      %v1549 = vunpack.c.h.b16 %v1331
      %v1550 = vunpack.c.l.b16 %v1332
      %v1551 = vunpack.c.h.b16 %v1332
      %v1552 = vunpack.c.l.b16 %v1333
      %v1553 = vunpack.c.h.b16 %v1333
      %v1554 = vunpack.c.l.b16 %v1334
      %v1555 = vunpack.c.h.b16 %v1334
      %v1556 = vunpack.c.l.b16 %v1335
      %v1557 = vunpack.c.h.b16 %v1335
      %v1558 = vunpack.c.l.b16 %v1336
      %v1559 = vunpack.c.h.b16 %v1336
      %v1560 = vunpack.c.l.b16 %v1337
      %v1561 = vunpack.c.h.b16 %v1337
      %v1562 = vunpack.c.l.b16 %v1338
      %v1563 = vunpack.c.h.b16 %v1338
      %v1564 = vunpack.c.l.b16 %v1339
      %v1565 = vunpack.c.h.b16 %v1339
      %v1566 = vunpack.c.l.b16 %v1340
      %v1567 = vunpack.c.h.b16 %v1340
      %v1568 = vunpack.c.l.b16 %v1341
      %v1569 = vunpack.c.h.b16 %v1341
      %v1570 = vunpack.c.l.b16 %v1342
      %v1571 = vunpack.c.h.b16 %v1342
      %v1572 = vunpack.c.l.b16 %v1343
      %v1573 = vunpack.c.h.b16 %v1343
      %v1574 = vunpack.c.l.b16 %v1344
      %v1575 = vunpack.c.h.b16 %v1344
      %v1576 = vunpack.c.l.b16 %v1345
      %v1577 = vunpack.c.h.b16 %v1345
      %v1578 = vunpack.c.l.b16 %v1346
      %v1579 = vunpack.c.h.b16 %v1346
      %v1580 = vunpack.c.l.b16 %v1347
      %v1581 = vunpack.c.h.b16 %v1347
      %v1582 = vunpack.c.l.b16 %v1348
      %v1583 = vunpack.c.h.b16 %v1348
      %v1584 = vunpack.c.l.b16 %v1349
      %v1585 = vunpack.c.h.b16 %v1349
      %v1586 = vunpack.c.l.b16 %v1350
      %v1587 = vunpack.c.h.b16 %v1350
      %v1588 = vunpack.c.l.b16 %v1351
      %v1589 = vunpack.c.h.b16 %v1351
      %v1590 = vunpack.c.l.b16 %v1352
      %v1591 = vunpack.c.h.b16 %v1352
      %v1592 = vunpack.c.l.b16 %v1353
      %v1593 = vunpack.c.h.b16 %v1353
      %v1594 = vunpack.c.l.b16 %v1354
      %v1595 = vunpack.c.h.b16 %v1354
      %v1596 = vunpack.c.l.b16 %v1355
      %v1597 = vunpack.c.h.b16 %v1355
      %v1598 = vunpack.c.l.b16 %v1356
      %v1599 = vunpack.c.h.b16 %v1356
      %v1600 = vunpack.c.l.b16 %v1357
      %v1601 = vunpack.c.h.b16 %v1357
      %v1602 = vunpack.c.l.b16 %v1358
      %v1603 = vunpack.c.h.b16 %v1358
      %v1604 = vunpack.c.l.b16 %v1359
      %v1605 = vunpack.c.h.b16 %v1359
      %v1606 = vunpack.c.l.b16 %v1360
      %v1607 = vunpack.c.h.b16 %v1360
      %v1608 = vunpack.c.l.b16 %v1361
      %v1609 = vunpack.c.h.b16 %v1361
      %v1610 = vunpack.c.l.b16 %v1362
      %v1611 = vunpack.c.h.b16 %v1362
      %v1612 = vunpack.c.l.b16 %v1363
      %v1613 = vunpack.c.h.b16 %v1363
      %v1614 = vunpack.c.l.b16 %v1364
      %v1615 = vunpack.c.h.b16 %v1364
      %v1616 = vunpack.c.l.b16 %v1365
      %v1617 = vunpack.c.h.b16 %v1365
      %v1618 = vunpack.c.l.b16 %v1366
      %v1619 = vunpack.c.h.b16 %v1366
      %v1620 = vunpack.c.l.b16 %v1367
      %v1621 = vunpack.c.h.b16 %v1367
      %v1622 = vunpack.c.l.b16 %v1368
      %v1623 = vunpack.c.h.b16 %v1368
      %v1624 = vunpack.c.l.b16 %v1369
      %v1625 = vunpack.c.h.b16 %v1369
      %v1626 = vunpack.c.l.b16 %v1370
      %v1627 = vunpack.c.h.b16 %v1370
      %v1628 = vunpack.c.l.b16 %v1371
      %v1629 = vunpack.c.h.b16 %v1371
      %v1630 = vunpack.c.l.b16 %v1372
      %v1631 = vunpack.c.h.b16 %v1372
      %v1632 = vunpack.c.l.b16 %v1373
      %v1633 = vunpack.c.h.b16 %v1373
      %v1634 = vunpack.c.l.b16 %v1374
      %v1635 = vunpack.c.h.b16 %v1374
      %v1636 = vunpack.c.l.b16 %v1375
      %v1637 = vunpack.c.h.b16 %v1375
      %v1638 = vunpack.c.l.b16 %v1376
      %v1639 = vunpack.c.h.b16 %v1376
      %v1640 = vunpack.c.l.b16 %v1377
      %v1641 = vunpack.c.h.b16 %v1377
      %v1642 = vunpack.c.l.b16 %v1378
      %v1643 = vunpack.c.h.b16 %v1378
      %v1644 = vunpack.c.l.b16 %v1379
      %v1645 = vunpack.c.h.b16 %v1379
      %v1646 = vunpack.c.l.b16 %v1380
      %v1647 = vunpack.c.h.b16 %v1380
      %v1648 = vunpack.c.l.b16 %v1381
      %v1649 = vunpack.c.h.b16 %v1381
      %v1650 = vunpack.c.l.b16 %v1382
      %v1651 = vunpack.c.h.b16 %v1382
      %v1652 = vunpack.c.l.b16 %v1383
      %v1653 = vunpack.c.h.b16 %v1383
      %v1654 = vunpack.c.l.b16 %v1384
      %v1655 = vunpack.c.h.b16 %v1384
      %v1656 = vunpack.c.l.b16 %v1385
      %v1657 = vunpack.c.h.b16 %v1385
      %v1658 = vunpack.c.l.b16 %v1386
      %v1659 = vunpack.c.h.b16 %v1386
      %v1660 = vunpack.c.l.b16 %v1387
      %v1661 = vunpack.c.h.b16 %v1387
      %v1662 = vunpack.c.l.b16 %v1388
      %v1663 = vunpack.c.h.b16 %v1388
      %v1664 = vunpack.c.l.b16 %v1389
      %v1665 = vunpack.c.h.b16 %v1389
      %v1666 = vunpack.c.l.b16 %v1390
      %v1667 = vunpack.c.h.b16 %v1390
      %v1668 = vunpack.c.l.b16 %v1391
      %v1669 = vunpack.c.h.b16 %v1391
      %v1670 = vunpack.c.l.b16 %v1392
      %v1671 = vunpack.c.h.b16 %v1392
      %v1672 = vunpack.c.l.b16 %v1393
      %v1673 = vunpack.c.h.b16 %v1393
      %v1674 = vunpack.c.l.b16 %v1394
      %v1675 = vunpack.c.h.b16 %v1394
      %v1676 = vunpack.c.l.b16 %v1395
      %v1677 = vunpack.c.h.b16 %v1395
      %v1678 = vunpack.c.l.b16 %v1396
      %v1679 = vunpack.c.h.b16 %v1396
      %v1680 = vunpack.c.l.b16 %v1397
      %v1681 = vunpack.c.h.b16 %v1397
      %v1682 = vunpack.c.l.b16 %v1398
      %v1683 = vunpack.c.h.b16 %v1398
      %v1684 = vunpack.c.l.b16 %v1399
      %v1685 = vunpack.c.h.b16 %v1399
      %v1686 = vunpack.c.l.b16 %v1400
      %v1687 = vunpack.c.h.b16 %v1400
      %v1688 = vunpack.c.l.b16 %v1401
      %v1689 = vunpack.c.h.b16 %v1401
      %v1690 = vunpack.c.l.b16 %v1402
      %v1691 = vunpack.c.h.b16 %v1402
      %v1692 = vunpack.c.l.b16 %v1403
      %v1693 = vunpack.c.h.b16 %v1403
      %v1694 = vunpack.c.l.b16 %v1404
      %v1695 = vunpack.c.h.b16 %v1404
      %v1696 = vunpack.c.l.b16 %v1405
      %v1697 = vunpack.c.h.b16 %v1405
      %v1698 = vunpack.c.l.b16 %v1406
      %v1699 = vunpack.c.h.b16 %v1406
      %v1700 = vunpack.c.l.b16 %v1407
      %v1701 = vunpack.c.h.b16 %v1407
      %v1702 = vunpack.c.l.b16 %v1408
      %v1703 = vunpack.c.h.b16 %v1408
      %v1704 = vunpack.c.l.b16 %v1409
      %v1705 = vunpack.c.h.b16 %v1409
      %v1706 = vunpack.c.l.b16 %v1410
      %v1707 = vunpack.c.h.b16 %v1410
      %v1708 = vunpack.c.l.b16 %v1411
      %v1709 = vunpack.c.h.b16 %v1411
      %v1710 = vunpack.c.l.b16 %v1412
      %v1711 = vunpack.c.h.b16 %v1412
      %v1712 = vunpack.c.l.b16 %v1413
      %v1713 = vunpack.c.h.b16 %v1413
      %v1714 = vpack.c.b16 %v1524, %v1522
      %v1715 = vpack.c.b16 %v1525, %v1523
      %v1716 = vpack.c.b16 %v1528, %v1526
      %v1717 = vpack.c.b16 %v1529, %v1527
      %v1718 = vpack.c.b16 %v1532, %v1530
      %v1719 = vpack.c.b16 %v1533, %v1531
      %v1720 = vpack.c.b16 %v1536, %v1534
      %v1721 = vpack.c.b16 %v1537, %v1535
      %v1722 = vpack.c.b16 %v1540, %v1538
      %v1723 = vpack.c.b16 %v1541, %v1539
      %v1724 = vpack.c.b16 %v1544, %v1542
      %v1725 = vpack.c.b16 %v1545, %v1543
      %v1726 = vpack.c.b16 %v1548, %v1546
      %v1727 = vpack.c.b16 %v1549, %v1547
      %v1728 = vpack.c.b16 %v1552, %v1550
      %v1729 = vpack.c.b16 %v1553, %v1551
      %v1730 = vpack.c.b16 %v1556, %v1554
      %v1731 = vpack.c.b16 %v1557, %v1555
      %v1732 = vpack.c.b16 %v1560, %v1558
      %v1733 = vpack.c.b16 %v1561, %v1559
      %v1734 = vpack.c.b16 %v1564, %v1562
      %v1735 = vpack.c.b16 %v1565, %v1563
      %v1736 = vpack.c.b16 %v1568, %v1566
      %v1737 = vpack.c.b16 %v1569, %v1567
      %v1738 = vpack.c.b16 %v1572, %v1570
      %v1739 = vpack.c.b16 %v1573, %v1571
      %v1740 = vpack.c.b16 %v1576, %v1574
      %v1741 = vpack.c.b16 %v1577, %v1575
      %v1742 = vpack.c.b16 %v1580, %v1578
      %v1743 = vpack.c.b16 %v1581, %v1579
      %v1744 = vpack.c.b16 %v1584, %v1582
      %v1745 = vpack.c.b16 %v1585, %v1583
      %v1746 = vpack.c.b16 %v1588, %v1586
      %v1747 = vpack.c.b16 %v1589, %v1587
      %v1748 = vpack.c.b16 %v1592, %v1590
      %v1749 = vpack.c.b16 %v1593, %v1591
      %v1750 = vpack.c.b16 %v1596, %v1594
      %v1751 = vpack.c.b16 %v1597, %v1595
      %v1752 = vpack.c.b16 %v1600, %v1598
      %v1753 = vpack.c.b16 %v1601, %v1599
      %v1754 = vpack.c.b16 %v1604, %v1602
      %v1755 = vpack.c.b16 %v1605, %v1603
      %v1756 = vpack.c.b16 %v1608, %v1606
      %v1757 = vpack.c.b16 %v1609, %v1607
      %v1758 = vpack.c.b16 %v1612, %v1610
      %v1759 = vpack.c.b16 %v1613, %v1611
      %v1760 = vpack.c.b16 %v1616, %v1614
      %v1761 = vpack.c.b16 %v1617, %v1615
      %v1762 = vpack.c.b16 %v1620, %v1618
      %v1763 = vpack.c.b16 %v1621, %v1619
      %v1764 = vpack.c.b16 %v1624, %v1622
      %v1765 = vpack.c.b16 %v1625, %v1623
      %v1766 = vpack.c.b16 %v1628, %v1626
      %v1767 = vpack.c.b16 %v1629, %v1627
      %v1768 = vpack.c.b16 %v1632, %v1630
      %v1769 = vpack.c.b16 %v1633, %v1631
      %v1770 = vpack.c.b16 %v1636, %v1634
      %v1771 = vpack.c.b16 %v1637, %v1635
      %v1772 = vpack.c.b16 %v1640, %v1638
      %v1773 = vpack.c.b16 %v1641, %v1639
      %v1774 = vpack.c.b16 %v1644, %v1642
      %v1775 = vpack.c.b16 %v1645, %v1643
      %v1776 = vpack.c.b16 %v1648, %v1646
      %v1777 = vpack.c.b16 %v1649, %v1647
      %v1778 = vpack.c.b16 %v1652, %v1650
      %v1779 = vpack.c.b16 %v1653, %v1651
      %v1780 = vpack.c.b16 %v1656, %v1654
      %v1781 = vpack.c.b16 %v1657, %v1655
      %v1782 = vpack.c.b16 %v1660, %v1658
      %v1783 = vpack.c.b16 %v1661, %v1659
      %v1784 = vpack.c.b16 %v1664, %v1662
      %v1785 = vpack.c.b16 %v1665, %v1663
      %v1786 = vpack.c.b16 %v1668, %v1666
      %v1787 = vpack.c.b16 %v1669, %v1667
      %v1788 = vpack.c.b16 %v1672, %v1670
      %v1789 = vpack.c.b16 %v1673, %v1671
      %v1790 = vpack.c.b16 %v1676, %v1674
      %v1791 = vpack.c.b16 %v1677, %v1675
      %v1792 = vpack.c.b16 %v1680, %v1678
      %v1793 = vpack.c.b16 %v1681, %v1679
      %v1794 = vpack.c.b16 %v1684, %v1682
      %v1795 = vpack.c.b16 %v1685, %v1683
      %v1796 = vpack.c.b16 %v1688, %v1686
      %v1797 = vpack.c.b16 %v1689, %v1687
      %v1798 = vpack.c.b16 %v1692, %v1690
      %v1799 = vpack.c.b16 %v1693, %v1691
      %v1800 = vpack.c.b16 %v1696, %v1694
      %v1801 = vpack.c.b16 %v1697, %v1695
      %v1802 = vpack.c.b16 %v1700, %v1698
      %v1803 = vpack.c.b16 %v1701, %v1699
      %v1804 = vpack.c.b16 %v1704, %v1702
      %v1805 = vpack.c.b16 %v1705, %v1703
      %v1806 = vpack.c.b16 %v1708, %v1706
      %v1807 = vpack.c.b16 %v1709, %v1707
      %v1808 = vpack.c.b16 %v1712, %v1710
      %v1809 = vpack.c.b16 %v1713, %v1711
      %1906 = vmatprep.subr.bf16.mxu0 %v1715
      %1907 = vmatpush1.bf16.msra.mxu0 %v1714
      %1908 = vmatprep.subr.bf16.mxu0 %v1717
      %1909 = vmatpush1.bf16.msra.mxu0 %v1716
      %1910 = vmatprep.subr.bf16.mxu0 %v1719
      %1911 = vmatpush1.bf16.msra.mxu0 %v1718
      %1912 = vmatprep.subr.bf16.mxu0 %v1721
      %1913 = vmatpush1.bf16.msra.mxu0 %v1720
      %1914 = vmatprep.subr.bf16.mxu0 %v1723
      %1915 = vmatpush1.bf16.msra.mxu0 %v1722
      %1916 = vmatprep.subr.bf16.mxu0 %v1725
      %1917 = vmatpush1.bf16.msra.mxu0 %v1724
      %1918 = vmatprep.subr.bf16.mxu0 %v1727
      %1919 = vmatpush1.bf16.msra.mxu0 %v1726
      %1920 = vmatprep.subr.bf16.mxu0 %v1729
      %1921 = vmatpush1.bf16.msra.mxu0 %v1728
      %1922 = vmatprep.subr.bf16.mxu0 %v1731
      %1923 = vmatpush1.bf16.msra.mxu0 %v1730
      %1924 = vmatprep.subr.bf16.mxu0 %v1733
      %1925 = vmatpush1.bf16.msra.mxu0 %v1732
      %1926 = vmatprep.subr.bf16.mxu0 %v1735
      %1927 = vmatpush1.bf16.msra.mxu0 %v1734
      %1928 = vmatprep.subr.bf16.mxu0 %v1737
      %1929 = vmatpush1.bf16.msra.mxu0 %v1736
      %1930 = vmatprep.subr.bf16.mxu0 %v1739
      %1931 = vmatpush1.bf16.msra.mxu0 %v1738
      %1932 = vmatprep.subr.bf16.mxu0 %v1741
      %1933 = vmatpush1.bf16.msra.mxu0 %v1740
      %1934 = vmatprep.subr.bf16.mxu0 %v1743
      %1935 = vmatpush1.bf16.msra.mxu0 %v1742
      %1936 = vmatprep.subr.bf16.mxu0 %v1745
      %1937 = vmatpush1.bf16.msra.mxu0 %v1744
      %1938 = vmatprep.mubr.bf16.mxu0 %v1221
      %1939 = vmatmul.mubr.bf16.gmra.mrb[0].mxu0 %v1220
      %v1940 = vpop.f32.mrb[0].mxu0
      %v1941 = vadd.f32 %v1419, %v1940
      %v1942 = vpop.f32.mrb[0].mxu0
      %v1943 = vadd.f32 %v1423, %v1942
      %v1944 = vpop.f32.mrb[0].mxu0
      %v1945 = vpop.f32.mrb[0].mxu0
      %1946 = vdwg.mxu0
      %1947 = vmatprep.subr.bf16.mxu0 %v1747
      %1948 = vmatpush1.bf16.msra.mxu0 %v1746
      %1949 = vmatprep.subr.bf16.mxu0 %v1749
      %1950 = vmatpush1.bf16.msra.mxu0 %v1748
      %1951 = vmatprep.subr.bf16.mxu0 %v1751
      %1952 = vmatpush1.bf16.msra.mxu0 %v1750
      %1953 = vmatprep.subr.bf16.mxu0 %v1753
      %1954 = vmatpush1.bf16.msra.mxu0 %v1752
      %1955 = vmatprep.subr.bf16.mxu0 %v1755
      %1956 = vmatpush1.bf16.msra.mxu0 %v1754
      %1957 = vmatprep.subr.bf16.mxu0 %v1757
      %1958 = vmatpush1.bf16.msra.mxu0 %v1756
      %1959 = vmatprep.subr.bf16.mxu0 %v1759
      %1960 = vmatpush1.bf16.msra.mxu0 %v1758
      %1961 = vmatprep.subr.bf16.mxu0 %v1761
      %1962 = vmatpush1.bf16.msra.mxu0 %v1760
      %1963 = vmatprep.subr.bf16.mxu0 %v1763
      %1964 = vmatpush1.bf16.msra.mxu0 %v1762
      %1965 = vmatprep.subr.bf16.mxu0 %v1765
      %1966 = vmatpush1.bf16.msra.mxu0 %v1764
      %1967 = vmatprep.subr.bf16.mxu0 %v1767
      %1968 = vmatpush1.bf16.msra.mxu0 %v1766
      %1969 = vmatprep.subr.bf16.mxu0 %v1769
      %1970 = vmatpush1.bf16.msra.mxu0 %v1768
      %1971 = vmatprep.subr.bf16.mxu0 %v1771
      %1972 = vmatpush1.bf16.msra.mxu0 %v1770
      %1973 = vmatprep.subr.bf16.mxu0 %v1773
      %1974 = vmatpush1.bf16.msra.mxu0 %v1772
      %1975 = vmatprep.subr.bf16.mxu0 %v1775
      %1976 = vmatpush1.bf16.msra.mxu0 %v1774
      %1977 = vmatprep.subr.bf16.mxu0 %v1777
      %1978 = vmatpush1.bf16.msra.mxu0 %v1776
      %1979 = vmatprep.mubr.bf16.mxu0 %v1269
      %1980 = vmatmul.mubr.bf16.gmra.mrb[0].mxu0 %v1268
      %v1981 = vpop.f32.mrb[0].mxu0
      %v1982 = vadd.f32 %v1941, %v1981
      %v1983 = vpop.f32.mrb[0].mxu0
      %v1984 = vadd.f32 %v1943, %v1983
      %v1985 = vpop.f32.mrb[0].mxu0
      %v1986 = vpop.f32.mrb[0].mxu0
      %1987 = vdwg.mxu0
      %1988 = vmatprep.subr.bf16.mxu0 %v1779
      %1989 = vmatpush1.bf16.msra.mxu0 %v1778
      %1990 = vmatprep.subr.bf16.mxu0 %v1781
      %1991 = vmatpush1.bf16.msra.mxu0 %v1780
      %1992 = vmatprep.subr.bf16.mxu0 %v1783
      %1993 = vmatpush1.bf16.msra.mxu0 %v1782
      %1994 = vmatprep.subr.bf16.mxu0 %v1785
      %1995 = vmatpush1.bf16.msra.mxu0 %v1784
      %1996 = vmatprep.subr.bf16.mxu0 %v1787
      %1997 = vmatpush1.bf16.msra.mxu0 %v1786
      %1998 = vmatprep.subr.bf16.mxu0 %v1789
      %1999 = vmatpush1.bf16.msra.mxu0 %v1788
      %2000 = vmatprep.subr.bf16.mxu0 %v1791
      %2001 = vmatpush1.bf16.msra.mxu0 %v1790
      %2002 = vmatprep.subr.bf16.mxu0 %v1793
      %2003 = vmatpush1.bf16.msra.mxu0 %v1792
      %2004 = vmatprep.subr.bf16.mxu0 %v1795
      %2005 = vmatpush1.bf16.msra.mxu0 %v1794
      %2006 = vmatprep.subr.bf16.mxu0 %v1797
      %2007 = vmatpush1.bf16.msra.mxu0 %v1796
      %2008 = vmatprep.subr.bf16.mxu0 %v1799
      %2009 = vmatpush1.bf16.msra.mxu0 %v1798
      %2010 = vmatprep.subr.bf16.mxu0 %v1801
      %2011 = vmatpush1.bf16.msra.mxu0 %v1800
      %2012 = vmatprep.subr.bf16.mxu0 %v1803
      %2013 = vmatpush1.bf16.msra.mxu0 %v1802
      %2014 = vmatprep.subr.bf16.mxu0 %v1805
      %2015 = vmatpush1.bf16.msra.mxu0 %v1804
      %2016 = vmatprep.subr.bf16.mxu0 %v1807
      %2017 = vmatpush1.bf16.msra.mxu0 %v1806
      %2018 = vmatprep.subr.bf16.mxu0 %v1809
      %2019 = vmatpush1.bf16.msra.mxu0 %v1808
      %2020 = vmatprep.mubr.bf16.mxu0 %v1317
      %2021 = vmatmul.mubr.bf16.gmra.mrb[0].mxu0 %v1316
      %v2022 = vpop.f32.mrb[0].mxu0
      %v2023 = vadd.f32 %v1982, %v2022
      %v2024 = vpop.f32.mrb[0].mxu0
      %v2025 = vadd.f32 %v1984, %v2024
      %v2026 = vpop.f32.mrb[0].mxu0
      %v2027 = vpop.f32.mrb[0].mxu0
      %2028 = vdwg.mxu0
      %v2029 = vmax.f32 %v2023, 0.0
      %v2030 = vmax.f32 %v2025, 0.0
      %v2031 = vpack.c.bf16 %v2029, %v2029
      %v2032 = vpack.c.bf16 %v2030, %v2030
      %v2033 = vld [vmem:[%s7] sm:$0xf]
      %vm2034 = vcmask 64512
      %v2036 = vsel %vm2034, %v2033, 0
      %vm2038 = vcmask 1043456
      %v2040 = vsel %vm2038, %v2031, 0
      %v2043 = vsel %vm2038, %v2032, 0
      %2045 = vmatprep.subr.bf16.mxu0 %v2043
      %2046 = vmatpush1.bf16.msra.mxu0 %v2040
      %2047 = vmatprep.subr.bf16.mxu0 0
      %2048 = vmatpush1.bf16.msra.mxu0 0
      %2049 = vmatprep.subr.bf16.mxu0 0
      %2050 = vmatpush1.bf16.msra.mxu0 0
      %2051 = vmatprep.subr.bf16.mxu0 0
      %2052 = vmatpush1.bf16.msra.mxu0 0
      %2053 = vmatprep.subr.bf16.mxu0 0
      %2054 = vmatpush1.bf16.msra.mxu0 0
      %2055 = vmatprep.subr.bf16.mxu0 0
      %2056 = vmatpush1.bf16.msra.mxu0 0
      %2057 = vmatprep.subr.bf16.mxu0 0
      %2058 = vmatpush1.bf16.msra.mxu0 0
      %2059 = vmatprep.subr.bf16.mxu0 0
      %2060 = vmatpush1.bf16.msra.mxu0 0
      %2061 = vmatprep.subr.bf16.mxu0 0
      %2062 = vmatpush1.bf16.msra.mxu0 0
      %2063 = vmatprep.subr.bf16.mxu0 0
      %2064 = vmatpush1.bf16.msra.mxu0 0
      %2065 = vmatprep.subr.bf16.mxu0 0
      %2066 = vmatpush1.bf16.msra.mxu0 0
      %2067 = vmatprep.subr.bf16.mxu0 0
      %2068 = vmatpush1.bf16.msra.mxu0 0
      %2069 = vmatprep.subr.bf16.mxu0 0
      %2070 = vmatpush1.bf16.msra.mxu0 0
      %2071 = vmatprep.subr.bf16.mxu0 0
      %2072 = vmatpush1.bf16.msra.mxu0 0
      %2073 = vmatprep.subr.bf16.mxu0 0
      %2074 = vmatpush1.bf16.msra.mxu0 0
      %2075 = vmatprep.subr.bf16.mxu0 0
      %2076 = vmatpush1.bf16.msra.mxu0 0
      %2077 = vmatprep.mubr.bf16.mxu0 0
      %2078 = vmatmul.mubr.bf16.gmra.mrb[0].mxu0 %v2036
      %v2079 = vpop.f32.mrb[0].mxu0
      %v2080 = vadd.f32 0.0, %v2079
      %v2081 = vpop.f32.mrb[0].mxu0
      %v2082 = vadd.f32 0.0, %v2081
      %v2083 = vpop.f32.mrb[0].mxu0
      %v2084 = vpop.f32.mrb[0].mxu0
      %2085 = vdwg.mxu0
      %v2086 = vpack.c.bf16 %v2080, %v2080
      %v2087 = vpack.c.bf16 %v2082, %v2082
      %s2088 = scalar_lea.vmem %s7, 4
      %v2089 = vld [vmem:[%s2088] sm:$0xf]
      %v2091 = vsel %vm2034, %v2089, 0
      %2093 = vmatprep.subr.bf16.mxu0 %v2043
      %2094 = vmatpush1.bf16.msra.mxu0 %v2040
      %2095 = vmatprep.subr.bf16.mxu0 0
      %2096 = vmatpush1.bf16.msra.mxu0 0
      %2097 = vmatprep.subr.bf16.mxu0 0
      %2098 = vmatpush1.bf16.msra.mxu0 0
      %2099 = vmatprep.subr.bf16.mxu0 0
      %2100 = vmatpush1.bf16.msra.mxu0 0
      %2101 = vmatprep.subr.bf16.mxu0 0
      %2102 = vmatpush1.bf16.msra.mxu0 0
      %2103 = vmatprep.subr.bf16.mxu0 0
      %2104 = vmatpush1.bf16.msra.mxu0 0
      %2105 = vmatprep.subr.bf16.mxu0 0
      %2106 = vmatpush1.bf16.msra.mxu0 0
      %2107 = vmatprep.subr.bf16.mxu0 0
      %2108 = vmatpush1.bf16.msra.mxu0 0
      %2109 = vmatprep.subr.bf16.mxu0 0
      %2110 = vmatpush1.bf16.msra.mxu0 0
      %2111 = vmatprep.subr.bf16.mxu0 0
      %2112 = vmatpush1.bf16.msra.mxu0 0
      %2113 = vmatprep.subr.bf16.mxu0 0
      %2114 = vmatpush1.bf16.msra.mxu0 0
      %2115 = vmatprep.subr.bf16.mxu0 0
      %2116 = vmatpush1.bf16.msra.mxu0 0
      %2117 = vmatprep.subr.bf16.mxu0 0
      %2118 = vmatpush1.bf16.msra.mxu0 0
      %2119 = vmatprep.subr.bf16.mxu0 0
      %2120 = vmatpush1.bf16.msra.mxu0 0
      %2121 = vmatprep.subr.bf16.mxu0 0
      %2122 = vmatpush1.bf16.msra.mxu0 0
      %2123 = vmatprep.subr.bf16.mxu0 0
      %2124 = vmatpush1.bf16.msra.mxu0 0
      %2125 = vmatprep.mubr.bf16.mxu0 0
      %2126 = vmatmul.mubr.bf16.gmra.mrb[0].mxu0 %v2091
      %v2127 = vpop.f32.mrb[0].mxu0
      %v2128 = vadd.f32 0.0, %v2127
      %v2129 = vpop.f32.mrb[0].mxu0
      %v2130 = vadd.f32 0.0, %v2129
      %v2131 = vpop.f32.mrb[0].mxu0
      %v2132 = vpop.f32.mrb[0].mxu0
      %2133 = vdwg.mxu0
      %v2134 = vpack.c.bf16 %v2128, %v2128
      %v2135 = vpack.c.bf16 %v2130, %v2130
      %s2136 = scalar_lea.vmem %s7, 8
      %v2137 = vld [vmem:[%s2136] sm:$0xf]
      %v2139 = vsel %vm2034, %v2137, 0
      %2141 = vmatprep.subr.bf16.mxu0 %v2043
      %2142 = vmatpush1.bf16.msra.mxu0 %v2040
      %2143 = vmatprep.subr.bf16.mxu0 0
      %2144 = vmatpush1.bf16.msra.mxu0 0
      %2145 = vmatprep.subr.bf16.mxu0 0
      %2146 = vmatpush1.bf16.msra.mxu0 0
      %2147 = vmatprep.subr.bf16.mxu0 0
      %2148 = vmatpush1.bf16.msra.mxu0 0
      %2149 = vmatprep.subr.bf16.mxu0 0
      %2150 = vmatpush1.bf16.msra.mxu0 0
      %2151 = vmatprep.subr.bf16.mxu0 0
      %2152 = vmatpush1.bf16.msra.mxu0 0
      %2153 = vmatprep.subr.bf16.mxu0 0
      %2154 = vmatpush1.bf16.msra.mxu0 0
      %2155 = vmatprep.subr.bf16.mxu0 0
      %2156 = vmatpush1.bf16.msra.mxu0 0
      %2157 = vmatprep.subr.bf16.mxu0 0
      %2158 = vmatpush1.bf16.msra.mxu0 0
      %2159 = vmatprep.subr.bf16.mxu0 0
      %2160 = vmatpush1.bf16.msra.mxu0 0
      %2161 = vmatprep.subr.bf16.mxu0 0
      %2162 = vmatpush1.bf16.msra.mxu0 0
      %2163 = vmatprep.subr.bf16.mxu0 0
      %2164 = vmatpush1.bf16.msra.mxu0 0
      %2165 = vmatprep.subr.bf16.mxu0 0
      %2166 = vmatpush1.bf16.msra.mxu0 0
      %2167 = vmatprep.subr.bf16.mxu0 0
      %2168 = vmatpush1.bf16.msra.mxu0 0
      %2169 = vmatprep.subr.bf16.mxu0 0
      %2170 = vmatpush1.bf16.msra.mxu0 0
      %2171 = vmatprep.subr.bf16.mxu0 0
      %2172 = vmatpush1.bf16.msra.mxu0 0
      %2173 = vmatprep.mubr.bf16.mxu0 0
      %2174 = vmatmul.mubr.bf16.gmra.mrb[0].mxu0 %v2139
      %v2175 = vpop.f32.mrb[0].mxu0
      %v2176 = vadd.f32 0.0, %v2175
      %v2177 = vpop.f32.mrb[0].mxu0
      %v2178 = vadd.f32 0.0, %v2177
      %v2179 = vpop.f32.mrb[0].mxu0
      %v2180 = vpop.f32.mrb[0].mxu0
      %2181 = vdwg.mxu0
      %v2182 = vpack.c.bf16 %v2176, %v2176
      %v2183 = vpack.c.bf16 %v2178, %v2178
      %s2184 = scalar_lea.vmem %s7, 12
      %v2185 = vld [vmem:[%s2184] sm:$0xf]
      %v2187 = vsel %vm2034, %v2185, 0
      %2189 = vmatprep.subr.bf16.mxu0 %v2043
      %2190 = vmatpush1.bf16.msra.mxu0 %v2040
      %2191 = vmatprep.subr.bf16.mxu0 0
      %2192 = vmatpush1.bf16.msra.mxu0 0
      %2193 = vmatprep.subr.bf16.mxu0 0
      %2194 = vmatpush1.bf16.msra.mxu0 0
      %2195 = vmatprep.subr.bf16.mxu0 0
      %2196 = vmatpush1.bf16.msra.mxu0 0
      %2197 = vmatprep.subr.bf16.mxu0 0
      %2198 = vmatpush1.bf16.msra.mxu0 0
      %2199 = vmatprep.subr.bf16.mxu0 0
      %2200 = vmatpush1.bf16.msra.mxu0 0
      %2201 = vmatprep.subr.bf16.mxu0 0
      %2202 = vmatpush1.bf16.msra.mxu0 0
      %2203 = vmatprep.subr.bf16.mxu0 0
      %2204 = vmatpush1.bf16.msra.mxu0 0
      %2205 = vmatprep.subr.bf16.mxu0 0
      %2206 = vmatpush1.bf16.msra.mxu0 0
      %2207 = vmatprep.subr.bf16.mxu0 0
      %2208 = vmatpush1.bf16.msra.mxu0 0
      %2209 = vmatprep.subr.bf16.mxu0 0
      %2210 = vmatpush1.bf16.msra.mxu0 0
      %2211 = vmatprep.subr.bf16.mxu0 0
      %2212 = vmatpush1.bf16.msra.mxu0 0
      %2213 = vmatprep.subr.bf16.mxu0 0
      %2214 = vmatpush1.bf16.msra.mxu0 0
      %2215 = vmatprep.subr.bf16.mxu0 0
      %2216 = vmatpush1.bf16.msra.mxu0 0
      %2217 = vmatprep.subr.bf16.mxu0 0
      %2218 = vmatpush1.bf16.msra.mxu0 0
      %2219 = vmatprep.subr.bf16.mxu0 0
      %2220 = vmatpush1.bf16.msra.mxu0 0
      %2221 = vmatprep.mubr.bf16.mxu0 0
      %2222 = vmatmul.mubr.bf16.gmra.mrb[0].mxu0 %v2187
      %v2223 = vpop.f32.mrb[0].mxu0
      %v2224 = vadd.f32 0.0, %v2223
      %v2225 = vpop.f32.mrb[0].mxu0
      %v2226 = vadd.f32 0.0, %v2225
      %v2227 = vpop.f32.mrb[0].mxu0
      %v2228 = vpop.f32.mrb[0].mxu0
      %2229 = vdwg.mxu0
      %v2230 = vpack.c.bf16 %v2224, %v2224
      %v2231 = vpack.c.bf16 %v2226, %v2226
      %s2232 = scalar_lea.vmem %s7, 16
      %v2233 = vld [vmem:[%s2232] sm:$0xf]
      %v2235 = vsel %vm2034, %v2233, 0
      %2237 = vmatprep.subr.bf16.mxu0 %v2043
      %2238 = vmatpush1.bf16.msra.mxu0 %v2040
      %2239 = vmatprep.subr.bf16.mxu0 0
      %2240 = vmatpush1.bf16.msra.mxu0 0
      %2241 = vmatprep.subr.bf16.mxu0 0
      %2242 = vmatpush1.bf16.msra.mxu0 0
      %2243 = vmatprep.subr.bf16.mxu0 0
      %2244 = vmatpush1.bf16.msra.mxu0 0
      %2245 = vmatprep.subr.bf16.mxu0 0
      %2246 = vmatpush1.bf16.msra.mxu0 0
      %2247 = vmatprep.subr.bf16.mxu0 0
      %2248 = vmatpush1.bf16.msra.mxu0 0
      %2249 = vmatprep.subr.bf16.mxu0 0
      %2250 = vmatpush1.bf16.msra.mxu0 0
      %2251 = vmatprep.subr.bf16.mxu0 0
      %2252 = vmatpush1.bf16.msra.mxu0 0
      %2253 = vmatprep.subr.bf16.mxu0 0
      %2254 = vmatpush1.bf16.msra.mxu0 0
      %2255 = vmatprep.subr.bf16.mxu0 0
      %2256 = vmatpush1.bf16.msra.mxu0 0
      %2257 = vmatprep.subr.bf16.mxu0 0
      %2258 = vmatpush1.bf16.msra.mxu0 0
      %2259 = vmatprep.subr.bf16.mxu0 0
      %2260 = vmatpush1.bf16.msra.mxu0 0
      %2261 = vmatprep.subr.bf16.mxu0 0
      %2262 = vmatpush1.bf16.msra.mxu0 0
      %2263 = vmatprep.subr.bf16.mxu0 0
      %2264 = vmatpush1.bf16.msra.mxu0 0
      %2265 = vmatprep.subr.bf16.mxu0 0
      %2266 = vmatpush1.bf16.msra.mxu0 0
      %2267 = vmatprep.subr.bf16.mxu0 0
      %2268 = vmatpush1.bf16.msra.mxu0 0
      %2269 = vmatprep.mubr.bf16.mxu0 0
      %2270 = vmatmul.mubr.bf16.gmra.mrb[0].mxu0 %v2235
      %v2271 = vpop.f32.mrb[0].mxu0
      %v2272 = vadd.f32 0.0, %v2271
      %v2273 = vpop.f32.mrb[0].mxu0
      %v2274 = vadd.f32 0.0, %v2273
      %v2275 = vpop.f32.mrb[0].mxu0
      %v2276 = vpop.f32.mrb[0].mxu0
      %2277 = vdwg.mxu0
      %v2278 = vpack.c.bf16 %v2272, %v2272
      %v2279 = vpack.c.bf16 %v2274, %v2274
      %s2280 = scalar_lea.vmem %s7, 20
      %v2281 = vld [vmem:[%s2280] sm:$0xf]
      %v2283 = vsel %vm2034, %v2281, 0
      %2285 = vmatprep.subr.bf16.mxu0 %v2043
      %2286 = vmatpush1.bf16.msra.mxu0 %v2040
      %2287 = vmatprep.subr.bf16.mxu0 0
      %2288 = vmatpush1.bf16.msra.mxu0 0
      %2289 = vmatprep.subr.bf16.mxu0 0
      %2290 = vmatpush1.bf16.msra.mxu0 0
      %2291 = vmatprep.subr.bf16.mxu0 0
      %2292 = vmatpush1.bf16.msra.mxu0 0
      %2293 = vmatprep.subr.bf16.mxu0 0
      %2294 = vmatpush1.bf16.msra.mxu0 0
      %2295 = vmatprep.subr.bf16.mxu0 0
      %2296 = vmatpush1.bf16.msra.mxu0 0
      %2297 = vmatprep.subr.bf16.mxu0 0
      %2298 = vmatpush1.bf16.msra.mxu0 0
      %2299 = vmatprep.subr.bf16.mxu0 0
      %2300 = vmatpush1.bf16.msra.mxu0 0
      %2301 = vmatprep.subr.bf16.mxu0 0
      %2302 = vmatpush1.bf16.msra.mxu0 0
      %2303 = vmatprep.subr.bf16.mxu0 0
      %2304 = vmatpush1.bf16.msra.mxu0 0
      %2305 = vmatprep.subr.bf16.mxu0 0
      %2306 = vmatpush1.bf16.msra.mxu0 0
      %2307 = vmatprep.subr.bf16.mxu0 0
      %2308 = vmatpush1.bf16.msra.mxu0 0
      %2309 = vmatprep.subr.bf16.mxu0 0
      %2310 = vmatpush1.bf16.msra.mxu0 0
      %2311 = vmatprep.subr.bf16.mxu0 0
      %2312 = vmatpush1.bf16.msra.mxu0 0
      %2313 = vmatprep.subr.bf16.mxu0 0
      %2314 = vmatpush1.bf16.msra.mxu0 0
      %2315 = vmatprep.subr.bf16.mxu0 0
      %2316 = vmatpush1.bf16.msra.mxu0 0
      %2317 = vmatprep.mubr.bf16.mxu0 0
      %2318 = vmatmul.mubr.bf16.gmra.mrb[0].mxu0 %v2283
      %v2319 = vpop.f32.mrb[0].mxu0
      %v2320 = vadd.f32 0.0, %v2319
      %v2321 = vpop.f32.mrb[0].mxu0
      %v2322 = vadd.f32 0.0, %v2321
      %v2323 = vpop.f32.mrb[0].mxu0
      %v2324 = vpop.f32.mrb[0].mxu0
      %2325 = vdwg.mxu0
      %v2326 = vpack.c.bf16 %v2320, %v2320
      %v2327 = vpack.c.bf16 %v2322, %v2322
      %s2328 = scalar_lea.vmem %s7, 24
      %v2329 = vld [vmem:[%s2328] sm:$0xf]
      %v2331 = vsel %vm2034, %v2329, 0
      %2333 = vmatprep.subr.bf16.mxu0 %v2043
      %2334 = vmatpush1.bf16.msra.mxu0 %v2040
      %2335 = vmatprep.subr.bf16.mxu0 0
      %2336 = vmatpush1.bf16.msra.mxu0 0
      %2337 = vmatprep.subr.bf16.mxu0 0
      %2338 = vmatpush1.bf16.msra.mxu0 0
      %2339 = vmatprep.subr.bf16.mxu0 0
      %2340 = vmatpush1.bf16.msra.mxu0 0
      %2341 = vmatprep.subr.bf16.mxu0 0
      %2342 = vmatpush1.bf16.msra.mxu0 0
      %2343 = vmatprep.subr.bf16.mxu0 0
      %2344 = vmatpush1.bf16.msra.mxu0 0
      %2345 = vmatprep.subr.bf16.mxu0 0
      %2346 = vmatpush1.bf16.msra.mxu0 0
      %2347 = vmatprep.subr.bf16.mxu0 0
      %2348 = vmatpush1.bf16.msra.mxu0 0
      %2349 = vmatprep.subr.bf16.mxu0 0
      %2350 = vmatpush1.bf16.msra.mxu0 0
      %2351 = vmatprep.subr.bf16.mxu0 0
      %2352 = vmatpush1.bf16.msra.mxu0 0
      %2353 = vmatprep.subr.bf16.mxu0 0
      %2354 = vmatpush1.bf16.msra.mxu0 0
      %2355 = vmatprep.subr.bf16.mxu0 0
      %2356 = vmatpush1.bf16.msra.mxu0 0
      %2357 = vmatprep.subr.bf16.mxu0 0
      %2358 = vmatpush1.bf16.msra.mxu0 0
      %2359 = vmatprep.subr.bf16.mxu0 0
      %2360 = vmatpush1.bf16.msra.mxu0 0
      %2361 = vmatprep.subr.bf16.mxu0 0
      %2362 = vmatpush1.bf16.msra.mxu0 0
      %2363 = vmatprep.subr.bf16.mxu0 0
      %2364 = vmatpush1.bf16.msra.mxu0 0
      %2365 = vmatprep.mubr.bf16.mxu0 0
      %2366 = vmatmul.mubr.bf16.gmra.mrb[0].mxu0 %v2331
      %v2367 = vpop.f32.mrb[0].mxu0
      %v2368 = vadd.f32 0.0, %v2367
      %v2369 = vpop.f32.mrb[0].mxu0
      %v2370 = vadd.f32 0.0, %v2369
      %v2371 = vpop.f32.mrb[0].mxu0
      %v2372 = vpop.f32.mrb[0].mxu0
      %2373 = vdwg.mxu0
      %v2374 = vpack.c.bf16 %v2368, %v2368
      %v2375 = vpack.c.bf16 %v2370, %v2370
      %v2376 = vld [vmem:[%s8] sm:$0xf]
      %v2377 = vld [vmem:[%s8 + $0x4] sm:$0xf]
      %v2378 = vld [vmem:[%s8 + $0x8] sm:$0xf]
      %v2379 = vld [vmem:[%s8 + $0xc] sm:$0xf]
      %v2380 = vld [vmem:[%s8 + $0x10] sm:$0xf]
      %v2381 = vld [vmem:[%s8 + $0x14] sm:$0xf]
      %v2382 = vld [vmem:[%s8 + $0x18] sm:$0xf]
      %v2383 = vld [vmem:[%s8 + $0x1c] sm:$0xf]
      %v2384 = vld [vmem:[%s8 + $0x20] sm:$0xf]
      %v2385 = vld [vmem:[%s8 + $0x24] sm:$0xf]
      %v2386 = vld [vmem:[%s8 + $0x28] sm:$0xf]
      %v2387 = vld [vmem:[%s8 + $0x2c] sm:$0xf]
      %v2388 = vld [vmem:[%s8 + $0x30] sm:$0xf]
      %v2389 = vld [vmem:[%s8 + $0x34] sm:$0xf]
      %v2390 = vld [vmem:[%s8 + $0x38] sm:$0xf]
      %v2391 = vld [vmem:[%s8 + $0x3c] sm:$0xf]
      %v2392 = vld [vmem:[%s8 + $0x40] sm:$0xf]
      %v2393 = vld [vmem:[%s8 + $0x44] sm:$0xf]
      %v2394 = vld [vmem:[%s8 + $0x48] sm:$0xf]
      %v2395 = vld [vmem:[%s8 + $0x4c] sm:$0xf]
      %v2396 = vld [vmem:[%s8 + $0x50] sm:$0xf]
      %v2397 = vld [vmem:[%s8 + $0x54] sm:$0xf]
      %v2398 = vld [vmem:[%s8 + $0x58] sm:$0xf]
      %v2399 = vld [vmem:[%s8 + $0x5c] sm:$0xf]
      %v2400 = vld [vmem:[%s8 + $0x60] sm:$0xf]
      %v2401 = vld [vmem:[%s8 + $0x64] sm:$0xf]
      %v2402 = vld [vmem:[%s8 + $0x68] sm:$0xf]
      %v2403 = vld [vmem:[%s8 + $0x6c] sm:$0xf]
      %v2404 = vld [vmem:[%s8 + $0x70] sm:$0xf]
      %v2405 = vld [vmem:[%s8 + $0x74] sm:$0xf]
      %v2406 = vld [vmem:[%s8 + $0x78] sm:$0xf]
      %v2407 = vld [vmem:[%s8 + $0x7c] sm:$0xf]
      %v2408 = vld [vmem:[%s8 + $0x80] sm:$0xf]
      %v2409 = vld [vmem:[%s8 + $0x84] sm:$0xf]
      %v2410 = vld [vmem:[%s8 + $0x88] sm:$0xf]
      %v2411 = vld [vmem:[%s8 + $0x8c] sm:$0xf]
      %v2412 = vld [vmem:[%s8 + $0x90] sm:$0xf]
      %v2413 = vld [vmem:[%s8 + $0x94] sm:$0xf]
      %v2414 = vld [vmem:[%s8 + $0x98] sm:$0xf]
      %v2415 = vld [vmem:[%s8 + $0x9c] sm:$0xf]
      %v2416 = vld [vmem:[%s8 + $0xa0] sm:$0xf]
      %v2417 = vld [vmem:[%s8 + $0xa4] sm:$0xf]
      %v2418 = vld [vmem:[%s8 + $0xa8] sm:$0xf]
      %v2419 = vld [vmem:[%s8 + $0xac] sm:$0xf]
      %v2420 = vld [vmem:[%s8 + $0xb0] sm:$0xf]
      %v2421 = vld [vmem:[%s8 + $0xb4] sm:$0xf]
      %v2422 = vld [vmem:[%s8 + $0xb8] sm:$0xf]
      %v2423 = vld [vmem:[%s8 + $0xbc] sm:$0xf]
      %v2424 = vld [vmem:[%s8 + $0xc0] sm:$0xf]
      %v2425 = vld [vmem:[%s8 + $0xc4] sm:$0xf]
      %v2426 = vld [vmem:[%s8 + $0xc8] sm:$0xf]
      %v2427 = vld [vmem:[%s8 + $0xcc] sm:$0xf]
      %v2428 = vld [vmem:[%s8 + $0xd0] sm:$0xf]
      %v2429 = vld [vmem:[%s8 + $0xd4] sm:$0xf]
      %v2430 = vld [vmem:[%s8 + $0xd8] sm:$0xf]
      %v2431 = vld [vmem:[%s8 + $0xdc] sm:$0xf]
      %v2432 = vld [vmem:[%s8 + $0xe0] sm:$0xf]
      %v2433 = vld [vmem:[%s8 + $0xe4] sm:$0xf]
      %v2434 = vld [vmem:[%s8 + $0xe8] sm:$0xf]
      %v2435 = vld [vmem:[%s8 + $0xec] sm:$0xf]
      %v2436 = vld [vmem:[%s8 + $0xf0] sm:$0xf]
      %v2437 = vld [vmem:[%s8 + $0xf4] sm:$0xf]
      %v2438 = vld [vmem:[%s8 + $0xf8] sm:$0xf]
      %v2439 = vld [vmem:[%s8 + $0xfc] sm:$0xf]
      %v2440 = vld [vmem:[%s8 + $0x100] sm:$0xf]
      %v2441 = vld [vmem:[%s8 + $0x104] sm:$0xf]
      %v2442 = vld [vmem:[%s8 + $0x108] sm:$0xf]
      %v2443 = vld [vmem:[%s8 + $0x10c] sm:$0xf]
      %v2444 = vld [vmem:[%s8 + $0x110] sm:$0xf]
      %v2445 = vld [vmem:[%s8 + $0x114] sm:$0xf]
      %v2446 = vld [vmem:[%s8 + $0x118] sm:$0xf]
      %v2447 = vld [vmem:[%s8 + $0x11c] sm:$0xf]
      %v2448 = vld [vmem:[%s8 + $0x120] sm:$0xf]
      %v2449 = vld [vmem:[%s8 + $0x124] sm:$0xf]
      %v2450 = vld [vmem:[%s8 + $0x128] sm:$0xf]
      %v2451 = vld [vmem:[%s8 + $0x12c] sm:$0xf]
      %v2452 = vld [vmem:[%s8 + $0x130] sm:$0xf]
      %v2453 = vld [vmem:[%s8 + $0x134] sm:$0xf]
      %v2454 = vld [vmem:[%s8 + $0x138] sm:$0xf]
      %v2455 = vld [vmem:[%s8 + $0x13c] sm:$0xf]
      %v2456 = vld [vmem:[%s8 + $0x140] sm:$0xf]
      %v2457 = vld [vmem:[%s8 + $0x144] sm:$0xf]
      %v2458 = vld [vmem:[%s8 + $0x148] sm:$0xf]
      %v2459 = vld [vmem:[%s8 + $0x14c] sm:$0xf]
      %v2460 = vld [vmem:[%s8 + $0x150] sm:$0xf]
      %v2461 = vld [vmem:[%s8 + $0x154] sm:$0xf]
      %v2462 = vld [vmem:[%s8 + $0x158] sm:$0xf]
      %v2463 = vld [vmem:[%s8 + $0x15c] sm:$0xf]
      %v2464 = vld [vmem:[%s8 + $0x160] sm:$0xf]
      %v2465 = vld [vmem:[%s8 + $0x164] sm:$0xf]
      %v2466 = vld [vmem:[%s8 + $0x168] sm:$0xf]
      %v2467 = vld [vmem:[%s8 + $0x16c] sm:$0xf]
      %v2468 = vld [vmem:[%s8 + $0x170] sm:$0xf]
      %v2469 = vld [vmem:[%s8 + $0x174] sm:$0xf]
      %v2470 = vld [vmem:[%s8 + $0x178] sm:$0xf]
      %v2471 = vld [vmem:[%s8 + $0x17c] sm:$0xf]
      %v2472 = vld [vmem:[%s8 + $0x180] sm:$0xf]
      %v2473 = vld [vmem:[%s8 + $0x184] sm:$0xf]
      %v2474 = vld [vmem:[%s8 + $0x188] sm:$0xf]
      %v2475 = vld [vmem:[%s8 + $0x18c] sm:$0xf]
      %v2476 = vld [vmem:[%s8 + $0x190] sm:$0xf]
      %v2477 = vld [vmem:[%s8 + $0x194] sm:$0xf]
      %v2478 = vld [vmem:[%s8 + $0x198] sm:$0xf]
      %v2479 = vld [vmem:[%s8 + $0x19c] sm:$0xf]
      %v2480 = vld [vmem:[%s8 + $0x1a0] sm:$0xf]
      %v2481 = vld [vmem:[%s8 + $0x1a4] sm:$0xf]
      %v2482 = vld [vmem:[%s8 + $0x1a8] sm:$0xf]
      %v2483 = vld [vmem:[%s8 + $0x1ac] sm:$0xf]
      %v2484 = vld [vmem:[%s8 + $0x1b0] sm:$0xf]
      %v2485 = vld [vmem:[%s8 + $0x1b4] sm:$0xf]
      %v2486 = vld [vmem:[%s8 + $0x1b8] sm:$0xf]
      %v2487 = vld [vmem:[%s8 + $0x1bc] sm:$0xf]
      %v2488 = vld [vmem:[%s8 + $0x1c0] sm:$0xf]
      %v2489 = vld [vmem:[%s8 + $0x1c4] sm:$0xf]
      %v2490 = vld [vmem:[%s8 + $0x1c8] sm:$0xf]
      %v2491 = vld [vmem:[%s8 + $0x1cc] sm:$0xf]
      %v2492 = vld [vmem:[%s8 + $0x1d0] sm:$0xf]
      %v2493 = vld [vmem:[%s8 + $0x1d4] sm:$0xf]
      %v2494 = vld [vmem:[%s8 + $0x1d8] sm:$0xf]
      %v2495 = vld [vmem:[%s8 + $0x1dc] sm:$0xf]
      %v2496 = vld [vmem:[%s8 + $0x1e0] sm:$0xf]
      %v2497 = vld [vmem:[%s8 + $0x1e4] sm:$0xf]
      %v2498 = vld [vmem:[%s8 + $0x1e8] sm:$0xf]
      %v2499 = vld [vmem:[%s8 + $0x1ec] sm:$0xf]
      %v2500 = vld [vmem:[%s8 + $0x1f0] sm:$0xf]
      %v2501 = vld [vmem:[%s8 + $0x1f4] sm:$0xf]
      %v2502 = vld [vmem:[%s8 + $0x1f8] sm:$0xf]
      %v2503 = vld [vmem:[%s8 + $0x1fc] sm:$0xf]
      %v2504 = vld [vmem:[%s8 + $0x200] sm:$0xf]
      %v2505 = vld [vmem:[%s8 + $0x204] sm:$0xf]
      %v2506 = vld [vmem:[%s8 + $0x208] sm:$0xf]
      %v2507 = vld [vmem:[%s8 + $0x20c] sm:$0xf]
      %v2508 = vld [vmem:[%s8 + $0x210] sm:$0xf]
      %v2509 = vld [vmem:[%s8 + $0x214] sm:$0xf]
      %v2510 = vld [vmem:[%s8 + $0x218] sm:$0xf]
      %v2511 = vld [vmem:[%s8 + $0x21c] sm:$0xf]
      %v2512 = vld [vmem:[%s8 + $0x220] sm:$0xf]
      %v2513 = vld [vmem:[%s8 + $0x224] sm:$0xf]
      %v2514 = vld [vmem:[%s8 + $0x228] sm:$0xf]
      %v2515 = vld [vmem:[%s8 + $0x22c] sm:$0xf]
      %v2516 = vld [vmem:[%s8 + $0x230] sm:$0xf]
      %v2517 = vld [vmem:[%s8 + $0x234] sm:$0xf]
      %v2518 = vld [vmem:[%s8 + $0x238] sm:$0xf]
      %v2519 = vld [vmem:[%s8 + $0x23c] sm:$0xf]
      %v2520 = vld [vmem:[%s8 + $0x240] sm:$0xf]
      %v2521 = vld [vmem:[%s8 + $0x244] sm:$0xf]
      %v2522 = vld [vmem:[%s8 + $0x248] sm:$0xf]
      %v2523 = vld [vmem:[%s8 + $0x24c] sm:$0xf]
      %v2524 = vld [vmem:[%s8 + $0x250] sm:$0xf]
      %v2525 = vld [vmem:[%s8 + $0x254] sm:$0xf]
      %v2526 = vld [vmem:[%s8 + $0x258] sm:$0xf]
      %v2527 = vld [vmem:[%s8 + $0x25c] sm:$0xf]
      %v2528 = vld [vmem:[%s8 + $0x260] sm:$0xf]
      %v2529 = vld [vmem:[%s8 + $0x264] sm:$0xf]
      %v2530 = vld [vmem:[%s8 + $0x268] sm:$0xf]
      %v2531 = vld [vmem:[%s8 + $0x26c] sm:$0xf]
      %v2532 = vld [vmem:[%s8 + $0x270] sm:$0xf]
      %v2533 = vld [vmem:[%s8 + $0x274] sm:$0xf]
      %v2534 = vld [vmem:[%s8 + $0x278] sm:$0xf]
      %v2535 = vld [vmem:[%s8 + $0x27c] sm:$0xf]
      %v2536 = vld [vmem:[%s8 + $0x280] sm:$0xf]
      %v2537 = vld [vmem:[%s8 + $0x284] sm:$0xf]
      %v2538 = vld [vmem:[%s8 + $0x288] sm:$0xf]
      %v2539 = vld [vmem:[%s8 + $0x28c] sm:$0xf]
      %v2540 = vld [vmem:[%s8 + $0x290] sm:$0xf]
      %v2541 = vld [vmem:[%s8 + $0x294] sm:$0xf]
      %v2542 = vld [vmem:[%s8 + $0x298] sm:$0xf]
      %v2543 = vld [vmem:[%s8 + $0x29c] sm:$0xf]
      %v2544 = vld [vmem:[%s8 + $0x2a0] sm:$0xf]
      %v2545 = vld [vmem:[%s8 + $0x2a4] sm:$0xf]
      %v2546 = vld [vmem:[%s8 + $0x2a8] sm:$0xf]
      %v2547 = vld [vmem:[%s8 + $0x2ac] sm:$0xf]
      %v2548 = vld [vmem:[%s8 + $0x2b0] sm:$0xf]
      %v2549 = vld [vmem:[%s8 + $0x2b4] sm:$0xf]
      %v2550 = vld [vmem:[%s8 + $0x2b8] sm:$0xf]
      %v2551 = vld [vmem:[%s8 + $0x2bc] sm:$0xf]
      %v2552 = vld [vmem:[%s8 + $0x2c0] sm:$0xf]
      %v2553 = vld [vmem:[%s8 + $0x2c4] sm:$0xf]
      %v2554 = vld [vmem:[%s8 + $0x2c8] sm:$0xf]
      %v2555 = vld [vmem:[%s8 + $0x2cc] sm:$0xf]
      %v2556 = vld [vmem:[%s8 + $0x2d0] sm:$0xf]
      %v2557 = vld [vmem:[%s8 + $0x2d4] sm:$0xf]
      %v2558 = vld [vmem:[%s8 + $0x2d8] sm:$0xf]
      %v2559 = vld [vmem:[%s8 + $0x2dc] sm:$0xf]
      %v2560 = vld [vmem:[%s8 + $0x2e0] sm:$0xf]
      %v2561 = vld [vmem:[%s8 + $0x2e4] sm:$0xf]
      %v2562 = vld [vmem:[%s8 + $0x2e8] sm:$0xf]
      %v2563 = vld [vmem:[%s8 + $0x2ec] sm:$0xf]
      %v2564 = vld [vmem:[%s8 + $0x2f0] sm:$0xf]
      %v2565 = vld [vmem:[%s8 + $0x2f4] sm:$0xf]
      %v2566 = vld [vmem:[%s8 + $0x2f8] sm:$0xf]
      %v2567 = vld [vmem:[%s8 + $0x2fc] sm:$0xf]
      %v2568 = vld [vmem:[%s8 + $0x300] sm:$0xf]
      %v2569 = vld [vmem:[%s8 + $0x304] sm:$0xf]
      %v2570 = vld [vmem:[%s8 + $0x308] sm:$0xf]
      %v2571 = vld [vmem:[%s8 + $0x30c] sm:$0xf]
      %v2572 = vld [vmem:[%s8 + $0x310] sm:$0xf]
      %v2573 = vld [vmem:[%s8 + $0x314] sm:$0xf]
      %v2574 = vld [vmem:[%s8 + $0x318] sm:$0xf]
      %v2575 = vld [vmem:[%s8 + $0x31c] sm:$0xf]
      %v2576 = vld [vmem:[%s8 + $0x320] sm:$0xf]
      %v2577 = vld [vmem:[%s8 + $0x324] sm:$0xf]
      %v2578 = vld [vmem:[%s8 + $0x328] sm:$0xf]
      %v2579 = vld [vmem:[%s8 + $0x32c] sm:$0xf]
      %v2580 = vld [vmem:[%s8 + $0x330] sm:$0xf]
      %v2581 = vld [vmem:[%s8 + $0x334] sm:$0xf]
      %v2582 = vld [vmem:[%s8 + $0x338] sm:$0xf]
      %v2583 = vld [vmem:[%s8 + $0x33c] sm:$0xf]
      %v2584 = vld [vmem:[%s8 + $0x340] sm:$0xf]
      %v2585 = vld [vmem:[%s8 + $0x344] sm:$0xf]
      %v2586 = vld [vmem:[%s8 + $0x348] sm:$0xf]
      %v2587 = vld [vmem:[%s8 + $0x34c] sm:$0xf]
      %v2588 = vld [vmem:[%s8 + $0x350] sm:$0xf]
      %v2589 = vld [vmem:[%s8 + $0x354] sm:$0xf]
      %v2590 = vld [vmem:[%s8 + $0x358] sm:$0xf]
      %v2591 = vld [vmem:[%s8 + $0x35c] sm:$0xf]
      %v2592 = vld [vmem:[%s8 + $0x360] sm:$0xf]
      %v2593 = vld [vmem:[%s8 + $0x364] sm:$0xf]
      %v2594 = vld [vmem:[%s8 + $0x368] sm:$0xf]
      %v2595 = vld [vmem:[%s8 + $0x36c] sm:$0xf]
      %v2596 = vld [vmem:[%s8 + $0x370] sm:$0xf]
      %v2597 = vld [vmem:[%s8 + $0x374] sm:$0xf]
      %v2598 = vld [vmem:[%s8 + $0x378] sm:$0xf]
      %v2599 = vld [vmem:[%s8 + $0x37c] sm:$0xf]
      %v2600 = vld [vmem:[%s9] sm:$0x1]
      %v2602 = vlaneseq
      %v2603 = vshrl.u32 %v2602, 7
      %v2604 = vsub.s32 0, %v2603
      %v2605 = vrot.slane %v2600, %v2604
      %v2831 = vunpack.c.l.b16 %v2376
      %v2832 = vunpack.c.l.b16 %v2377
      %v2833 = vunpack.c.l.b16 %v2378
      %v2834 = vunpack.c.l.b16 %v2379
      %v2835 = vunpack.c.l.b16 %v2380
      %v2836 = vunpack.c.l.b16 %v2381
      %v2837 = vunpack.c.l.b16 %v2382
      %v2838 = vunpack.c.l.b16 %v2383
      %v2839 = vunpack.c.l.b16 %v2384
      %v2840 = vunpack.c.l.b16 %v2385
      %v2841 = vunpack.c.l.b16 %v2386
      %v2842 = vunpack.c.l.b16 %v2387
      %v2843 = vunpack.c.l.b16 %v2388
      %v2844 = vunpack.c.l.b16 %v2389
      %v2845 = vunpack.c.l.b16 %v2390
      %v2846 = vunpack.c.l.b16 %v2391
      %v2847 = vunpack.c.l.b16 %v2392
      %v2848 = vunpack.c.l.b16 %v2393
      %v2849 = vunpack.c.l.b16 %v2394
      %v2850 = vunpack.c.l.b16 %v2395
      %v2851 = vunpack.c.l.b16 %v2396
      %v2852 = vunpack.c.l.b16 %v2397
      %v2853 = vunpack.c.l.b16 %v2398
      %v2854 = vunpack.c.l.b16 %v2399
      %v2855 = vunpack.c.l.b16 %v2400
      %v2856 = vunpack.c.l.b16 %v2401
      %v2857 = vunpack.c.l.b16 %v2402
      %v2858 = vunpack.c.l.b16 %v2403
      %v2859 = vunpack.c.l.b16 %v2404
      %v2860 = vunpack.c.l.b16 %v2405
      %v2861 = vunpack.c.l.b16 %v2406
      %v2862 = vunpack.c.l.b16 %v2407
      %v2863 = vunpack.c.l.b16 %v2408
      %v2864 = vunpack.c.l.b16 %v2409
      %v2865 = vunpack.c.l.b16 %v2410
      %v2866 = vunpack.c.l.b16 %v2411
      %v2867 = vunpack.c.l.b16 %v2412
      %v2868 = vunpack.c.l.b16 %v2413
      %v2869 = vunpack.c.l.b16 %v2414
      %v2870 = vunpack.c.l.b16 %v2415
      %v2871 = vunpack.c.l.b16 %v2416
      %v2872 = vunpack.c.l.b16 %v2417
      %v2873 = vunpack.c.l.b16 %v2418
      %v2874 = vunpack.c.l.b16 %v2419
      %v2875 = vunpack.c.l.b16 %v2420
      %v2876 = vunpack.c.l.b16 %v2421
      %v2877 = vunpack.c.l.b16 %v2422
      %v2878 = vunpack.c.l.b16 %v2423
      %v2879 = vunpack.c.l.b16 %v2424
      %v2880 = vunpack.c.l.b16 %v2425
      %v2881 = vunpack.c.l.b16 %v2426
      %v2882 = vunpack.c.l.b16 %v2427
      %v2883 = vunpack.c.l.b16 %v2428
      %v2884 = vunpack.c.l.b16 %v2429
      %v2885 = vunpack.c.l.b16 %v2430
      %v2886 = vunpack.c.l.b16 %v2431
      %v2887 = vunpack.c.l.b16 %v2432
      %v2888 = vunpack.c.l.b16 %v2433
      %v2889 = vunpack.c.l.b16 %v2434
      %v2890 = vunpack.c.l.b16 %v2435
      %v2891 = vunpack.c.l.b16 %v2436
      %v2892 = vunpack.c.l.b16 %v2437
      %v2893 = vunpack.c.l.b16 %v2438
      %v2894 = vunpack.c.l.b16 %v2439
      %v2895 = vunpack.c.l.b16 %v2440
      %v2896 = vunpack.c.l.b16 %v2441
      %v2897 = vunpack.c.l.b16 %v2442
      %v2898 = vunpack.c.l.b16 %v2443
      %v2899 = vunpack.c.l.b16 %v2444
      %v2900 = vunpack.c.l.b16 %v2445
      %v2901 = vunpack.c.l.b16 %v2446
      %v2902 = vunpack.c.l.b16 %v2447
      %v2903 = vunpack.c.l.b16 %v2448
      %v2904 = vunpack.c.l.b16 %v2449
      %v2905 = vunpack.c.l.b16 %v2450
      %v2906 = vunpack.c.l.b16 %v2451
      %v2907 = vunpack.c.l.b16 %v2452
      %v2908 = vunpack.c.l.b16 %v2453
      %v2909 = vunpack.c.l.b16 %v2454
      %v2910 = vunpack.c.l.b16 %v2455
      %v2911 = vunpack.c.l.b16 %v2456
      %v2912 = vunpack.c.l.b16 %v2457
      %v2913 = vunpack.c.l.b16 %v2458
      %v2914 = vunpack.c.l.b16 %v2459
      %v2915 = vunpack.c.l.b16 %v2460
      %v2916 = vunpack.c.l.b16 %v2461
      %v2917 = vunpack.c.l.b16 %v2462
      %v2918 = vunpack.c.l.b16 %v2463
      %v2919 = vunpack.c.l.b16 %v2464
      %v2920 = vunpack.c.l.b16 %v2465
      %v2921 = vunpack.c.l.b16 %v2466
      %v2922 = vunpack.c.l.b16 %v2467
      %v2923 = vunpack.c.l.b16 %v2468
      %v2924 = vunpack.c.l.b16 %v2469
      %v2925 = vunpack.c.l.b16 %v2470
      %v2926 = vunpack.c.l.b16 %v2471
      %v2927 = vunpack.c.l.b16 %v2472
      %v2928 = vunpack.c.l.b16 %v2473
      %v2929 = vunpack.c.l.b16 %v2474
      %v2930 = vunpack.c.l.b16 %v2475
      %v2931 = vunpack.c.l.b16 %v2476
      %v2932 = vunpack.c.l.b16 %v2477
      %v2933 = vunpack.c.l.b16 %v2478
      %v2934 = vunpack.c.l.b16 %v2479
      %v2935 = vunpack.c.l.b16 %v2480
      %v2936 = vunpack.c.l.b16 %v2481
      %v2937 = vunpack.c.l.b16 %v2482
      %v2938 = vunpack.c.l.b16 %v2483
      %v2939 = vunpack.c.l.b16 %v2484
      %v2940 = vunpack.c.l.b16 %v2485
      %v2941 = vunpack.c.l.b16 %v2486
      %v2942 = vunpack.c.l.b16 %v2487
      %v2943 = vunpack.c.l.b16 %v2488
      %v2944 = vunpack.c.l.b16 %v2489
      %v2945 = vunpack.c.l.b16 %v2490
      %v2946 = vunpack.c.l.b16 %v2491
      %v2947 = vunpack.c.l.b16 %v2492
      %v2948 = vunpack.c.l.b16 %v2493
      %v2949 = vunpack.c.l.b16 %v2494
      %v2950 = vunpack.c.l.b16 %v2495
      %v2951 = vunpack.c.l.b16 %v2496
      %v2952 = vunpack.c.l.b16 %v2497
      %v2953 = vunpack.c.l.b16 %v2498
      %v2954 = vunpack.c.l.b16 %v2499
      %v2955 = vunpack.c.l.b16 %v2500
      %v2956 = vunpack.c.l.b16 %v2501
      %v2957 = vunpack.c.l.b16 %v2502
      %v2958 = vunpack.c.l.b16 %v2503
      %v2959 = vunpack.c.l.b16 %v2504
      %v2960 = vunpack.c.l.b16 %v2505
      %v2961 = vunpack.c.l.b16 %v2506
      %v2962 = vunpack.c.l.b16 %v2507
      %v2963 = vunpack.c.l.b16 %v2508
      %v2964 = vunpack.c.l.b16 %v2509
      %v2965 = vunpack.c.l.b16 %v2510
      %v2966 = vunpack.c.l.b16 %v2511
      %v2967 = vunpack.c.l.b16 %v2512
      %v2968 = vunpack.c.l.b16 %v2513
      %v2969 = vunpack.c.l.b16 %v2514
      %v2970 = vunpack.c.l.b16 %v2515
      %v2971 = vunpack.c.l.b16 %v2516
      %v2972 = vunpack.c.l.b16 %v2517
      %v2973 = vunpack.c.l.b16 %v2518
      %v2974 = vunpack.c.l.b16 %v2519
      %v2975 = vunpack.c.l.b16 %v2520
      %v2976 = vunpack.c.l.b16 %v2521
      %v2977 = vunpack.c.l.b16 %v2522
      %v2978 = vunpack.c.l.b16 %v2523
      %v2979 = vunpack.c.l.b16 %v2524
      %v2980 = vunpack.c.l.b16 %v2525
      %v2981 = vunpack.c.l.b16 %v2526
      %v2982 = vunpack.c.l.b16 %v2527
      %v2983 = vunpack.c.l.b16 %v2528
      %v2984 = vunpack.c.l.b16 %v2529
      %v2985 = vunpack.c.l.b16 %v2530
      %v2986 = vunpack.c.l.b16 %v2531
      %v2987 = vunpack.c.l.b16 %v2532
      %v2988 = vunpack.c.l.b16 %v2533
      %v2989 = vunpack.c.l.b16 %v2534
      %v2990 = vunpack.c.l.b16 %v2535
      %v2991 = vunpack.c.l.b16 %v2536
      %v2992 = vunpack.c.l.b16 %v2537
      %v2993 = vunpack.c.l.b16 %v2538
      %v2994 = vunpack.c.l.b16 %v2539
      %v2995 = vunpack.c.l.b16 %v2540
      %v2996 = vunpack.c.l.b16 %v2541
      %v2997 = vunpack.c.l.b16 %v2542
      %v2998 = vunpack.c.l.b16 %v2543
      %v2999 = vunpack.c.l.b16 %v2544
      %v3000 = vunpack.c.l.b16 %v2545
      %v3001 = vunpack.c.l.b16 %v2546
      %v3002 = vunpack.c.l.b16 %v2547
      %v3003 = vunpack.c.l.b16 %v2548
      %v3004 = vunpack.c.l.b16 %v2549
      %v3005 = vunpack.c.l.b16 %v2550
      %v3006 = vunpack.c.l.b16 %v2551
      %v3007 = vunpack.c.l.b16 %v2552
      %v3008 = vunpack.c.l.b16 %v2553
      %v3009 = vunpack.c.l.b16 %v2554
      %v3010 = vunpack.c.l.b16 %v2555
      %v3011 = vunpack.c.l.b16 %v2556
      %v3012 = vunpack.c.l.b16 %v2557
      %v3013 = vunpack.c.l.b16 %v2558
      %v3014 = vunpack.c.l.b16 %v2559
      %v3015 = vunpack.c.l.b16 %v2560
      %v3016 = vunpack.c.l.b16 %v2561
      %v3017 = vunpack.c.l.b16 %v2562
      %v3018 = vunpack.c.l.b16 %v2563
      %v3019 = vunpack.c.l.b16 %v2564
      %v3020 = vunpack.c.l.b16 %v2565
      %v3021 = vunpack.c.l.b16 %v2566
      %v3022 = vunpack.c.l.b16 %v2567
      %v3023 = vunpack.c.l.b16 %v2568
      %v3024 = vunpack.c.l.b16 %v2569
      %v3025 = vunpack.c.l.b16 %v2570
      %v3026 = vunpack.c.l.b16 %v2571
      %v3027 = vunpack.c.l.b16 %v2572
      %v3028 = vunpack.c.l.b16 %v2573
      %v3029 = vunpack.c.l.b16 %v2574
      %v3030 = vunpack.c.l.b16 %v2575
      %v3031 = vunpack.c.l.b16 %v2576
      %v3032 = vunpack.c.l.b16 %v2577
      %v3033 = vunpack.c.l.b16 %v2578
      %v3034 = vunpack.c.l.b16 %v2579
      %v3035 = vunpack.c.l.b16 %v2580
      %v3036 = vunpack.c.l.b16 %v2581
      %v3037 = vunpack.c.l.b16 %v2582
      %v3038 = vunpack.c.l.b16 %v2583
      %v3039 = vunpack.c.l.b16 %v2584
      %v3040 = vunpack.c.l.b16 %v2585
      %v3041 = vunpack.c.l.b16 %v2586
      %v3042 = vunpack.c.l.b16 %v2587
      %v3043 = vunpack.c.l.b16 %v2588
      %v3044 = vunpack.c.l.b16 %v2589
      %v3045 = vunpack.c.l.b16 %v2590
      %v3046 = vunpack.c.l.b16 %v2591
      %v3047 = vunpack.c.l.b16 %v2592
      %v3048 = vunpack.c.l.b16 %v2593
      %v3049 = vunpack.c.l.b16 %v2594
      %v3050 = vunpack.c.l.b16 %v2595
      %v3051 = vunpack.c.l.b16 %v2596
      %v3052 = vunpack.c.l.b16 %v2597
      %v3053 = vunpack.c.l.b16 %v2598
      %v3054 = vunpack.c.l.b16 %v2599
      %v3055 = vpack.c.b16 %v2832, %v2831
      %v3056 = vpack.c.b16 %v2834, %v2833
      %v3057 = vpack.c.b16 %v2836, %v2835
      %v3058 = vpack.c.b16 %v2838, %v2837
      %v3059 = vpack.c.b16 %v2840, %v2839
      %v3060 = vpack.c.b16 %v2842, %v2841
      %v3061 = vpack.c.b16 %v2844, %v2843
      %v3062 = vpack.c.b16 %v2846, %v2845
      %v3063 = vpack.c.b16 %v2848, %v2847
      %v3064 = vpack.c.b16 %v2850, %v2849
      %v3065 = vpack.c.b16 %v2852, %v2851
      %v3066 = vpack.c.b16 %v2854, %v2853
      %v3067 = vpack.c.b16 %v2856, %v2855
      %v3068 = vpack.c.b16 %v2858, %v2857
      %v3069 = vpack.c.b16 %v2860, %v2859
      %v3070 = vpack.c.b16 %v2862, %v2861
      %v3071 = vpack.c.b16 %v2864, %v2863
      %v3072 = vpack.c.b16 %v2866, %v2865
      %v3073 = vpack.c.b16 %v2868, %v2867
      %v3074 = vpack.c.b16 %v2870, %v2869
      %v3075 = vpack.c.b16 %v2872, %v2871
      %v3076 = vpack.c.b16 %v2874, %v2873
      %v3077 = vpack.c.b16 %v2876, %v2875
      %v3078 = vpack.c.b16 %v2878, %v2877
      %v3079 = vpack.c.b16 %v2880, %v2879
      %v3080 = vpack.c.b16 %v2882, %v2881
      %v3081 = vpack.c.b16 %v2884, %v2883
      %v3082 = vpack.c.b16 %v2886, %v2885
      %v3083 = vpack.c.b16 %v2888, %v2887
      %v3084 = vpack.c.b16 %v2890, %v2889
      %v3085 = vpack.c.b16 %v2892, %v2891
      %v3086 = vpack.c.b16 %v2894, %v2893
      %v3087 = vpack.c.b16 %v2896, %v2895
      %v3088 = vpack.c.b16 %v2898, %v2897
      %v3089 = vpack.c.b16 %v2900, %v2899
      %v3090 = vpack.c.b16 %v2902, %v2901
      %v3091 = vpack.c.b16 %v2904, %v2903
      %v3092 = vpack.c.b16 %v2906, %v2905
      %v3093 = vpack.c.b16 %v2908, %v2907
      %v3094 = vpack.c.b16 %v2910, %v2909
      %v3095 = vpack.c.b16 %v2912, %v2911
      %v3096 = vpack.c.b16 %v2914, %v2913
      %v3097 = vpack.c.b16 %v2916, %v2915
      %v3098 = vpack.c.b16 %v2918, %v2917
      %v3099 = vpack.c.b16 %v2920, %v2919
      %v3100 = vpack.c.b16 %v2922, %v2921
      %v3101 = vpack.c.b16 %v2924, %v2923
      %v3102 = vpack.c.b16 %v2926, %v2925
      %v3103 = vpack.c.b16 %v2928, %v2927
      %v3104 = vpack.c.b16 %v2930, %v2929
      %v3105 = vpack.c.b16 %v2932, %v2931
      %v3106 = vpack.c.b16 %v2934, %v2933
      %v3107 = vpack.c.b16 %v2936, %v2935
      %v3108 = vpack.c.b16 %v2938, %v2937
      %v3109 = vpack.c.b16 %v2940, %v2939
      %v3110 = vpack.c.b16 %v2942, %v2941
      %v3111 = vpack.c.b16 %v2944, %v2943
      %v3112 = vpack.c.b16 %v2946, %v2945
      %v3113 = vpack.c.b16 %v2948, %v2947
      %v3114 = vpack.c.b16 %v2950, %v2949
      %v3115 = vpack.c.b16 %v2952, %v2951
      %v3116 = vpack.c.b16 %v2954, %v2953
      %v3117 = vpack.c.b16 %v2956, %v2955
      %v3118 = vpack.c.b16 %v2958, %v2957
      %v3119 = vpack.c.b16 %v2960, %v2959
      %v3120 = vpack.c.b16 %v2962, %v2961
      %v3121 = vpack.c.b16 %v2964, %v2963
      %v3122 = vpack.c.b16 %v2966, %v2965
      %v3123 = vpack.c.b16 %v2968, %v2967
      %v3124 = vpack.c.b16 %v2970, %v2969
      %v3125 = vpack.c.b16 %v2972, %v2971
      %v3126 = vpack.c.b16 %v2974, %v2973
      %v3127 = vpack.c.b16 %v2976, %v2975
      %v3128 = vpack.c.b16 %v2978, %v2977
      %v3129 = vpack.c.b16 %v2980, %v2979
      %v3130 = vpack.c.b16 %v2982, %v2981
      %v3131 = vpack.c.b16 %v2984, %v2983
      %v3132 = vpack.c.b16 %v2986, %v2985
      %v3133 = vpack.c.b16 %v2988, %v2987
      %v3134 = vpack.c.b16 %v2990, %v2989
      %v3135 = vpack.c.b16 %v2992, %v2991
      %v3136 = vpack.c.b16 %v2994, %v2993
      %v3137 = vpack.c.b16 %v2996, %v2995
      %v3138 = vpack.c.b16 %v2998, %v2997
      %v3139 = vpack.c.b16 %v3000, %v2999
      %v3140 = vpack.c.b16 %v3002, %v3001
      %v3141 = vpack.c.b16 %v3004, %v3003
      %v3142 = vpack.c.b16 %v3006, %v3005
      %v3143 = vpack.c.b16 %v3008, %v3007
      %v3144 = vpack.c.b16 %v3010, %v3009
      %v3145 = vpack.c.b16 %v3012, %v3011
      %v3146 = vpack.c.b16 %v3014, %v3013
      %v3147 = vpack.c.b16 %v3016, %v3015
      %v3148 = vpack.c.b16 %v3018, %v3017
      %v3149 = vpack.c.b16 %v3020, %v3019
      %v3150 = vpack.c.b16 %v3022, %v3021
      %v3151 = vpack.c.b16 %v3024, %v3023
      %v3152 = vpack.c.b16 %v3026, %v3025
      %v3153 = vpack.c.b16 %v3028, %v3027
      %v3154 = vpack.c.b16 %v3030, %v3029
      %v3155 = vpack.c.b16 %v3032, %v3031
      %v3156 = vpack.c.b16 %v3034, %v3033
      %v3157 = vpack.c.b16 %v3036, %v3035
      %v3158 = vpack.c.b16 %v3038, %v3037
      %v3159 = vpack.c.b16 %v3040, %v3039
      %v3160 = vpack.c.b16 %v3042, %v3041
      %v3161 = vpack.c.b16 %v3044, %v3043
      %v3162 = vpack.c.b16 %v3046, %v3045
      %v3163 = vpack.c.b16 %v3048, %v3047
      %v3164 = vpack.c.b16 %v3050, %v3049
      %v3165 = vpack.c.b16 %v3052, %v3051
      %v3166 = vpack.c.b16 %v3054, %v3053
      %3279 = vmatprep.subr.bf16.mxu0 0
      %3280 = vmatpush1.bf16.msra.mxu0 %v3055
      %3281 = vmatprep.subr.bf16.mxu0 0
      %3282 = vmatpush1.bf16.msra.mxu0 %v3056
      %3283 = vmatprep.subr.bf16.mxu0 0
      %3284 = vmatpush1.bf16.msra.mxu0 %v3057
      %3285 = vmatprep.subr.bf16.mxu0 0
      %3286 = vmatpush1.bf16.msra.mxu0 %v3058
      %3287 = vmatprep.subr.bf16.mxu0 0
      %3288 = vmatpush1.bf16.msra.mxu0 %v3059
      %3289 = vmatprep.subr.bf16.mxu0 0
      %3290 = vmatpush1.bf16.msra.mxu0 %v3060
      %3291 = vmatprep.subr.bf16.mxu0 0
      %3292 = vmatpush1.bf16.msra.mxu0 %v3061
      %3293 = vmatprep.subr.bf16.mxu0 0
      %3294 = vmatpush1.bf16.msra.mxu0 %v3062
      %3295 = vmatprep.subr.bf16.mxu0 0
      %3296 = vmatpush1.bf16.msra.mxu0 %v3063
      %3297 = vmatprep.subr.bf16.mxu0 0
      %3298 = vmatpush1.bf16.msra.mxu0 %v3064
      %3299 = vmatprep.subr.bf16.mxu0 0
      %3300 = vmatpush1.bf16.msra.mxu0 %v3065
      %3301 = vmatprep.subr.bf16.mxu0 0
      %3302 = vmatpush1.bf16.msra.mxu0 %v3066
      %3303 = vmatprep.subr.bf16.mxu0 0
      %3304 = vmatpush1.bf16.msra.mxu0 %v3067
      %3305 = vmatprep.subr.bf16.mxu0 0
      %3306 = vmatpush1.bf16.msra.mxu0 %v3068
      %3307 = vmatprep.subr.bf16.mxu0 0
      %3308 = vmatpush1.bf16.msra.mxu0 %v3069
      %3309 = vmatprep.subr.bf16.mxu0 0
      %3310 = vmatpush1.bf16.msra.mxu0 %v3070
      %3311 = vmatprep.mubr.bf16.mxu0 %v2087
      %3312 = vmatmul.mubr.bf16.gmra.mrb[0].mxu0 %v2086
      %v3313 = vpop.f32.mrb[0].mxu0
      %v3314 = vadd.f32 %v2605, %v3313
      %v3315 = vpop.f32.mrb[0].mxu0
      %v3316 = vpop.f32.mrb[0].mxu0
      %v3317 = vpop.f32.mrb[0].mxu0
      %3318 = vdwg.mxu0
      %3319 = vmatprep.subr.bf16.mxu0 0
      %3320 = vmatpush1.bf16.msra.mxu0 %v3071
      %3321 = vmatprep.subr.bf16.mxu0 0
      %3322 = vmatpush1.bf16.msra.mxu0 %v3072
      %3323 = vmatprep.subr.bf16.mxu0 0
      %3324 = vmatpush1.bf16.msra.mxu0 %v3073
      %3325 = vmatprep.subr.bf16.mxu0 0
      %3326 = vmatpush1.bf16.msra.mxu0 %v3074
      %3327 = vmatprep.subr.bf16.mxu0 0
      %3328 = vmatpush1.bf16.msra.mxu0 %v3075
      %3329 = vmatprep.subr.bf16.mxu0 0
      %3330 = vmatpush1.bf16.msra.mxu0 %v3076
      %3331 = vmatprep.subr.bf16.mxu0 0
      %3332 = vmatpush1.bf16.msra.mxu0 %v3077
      %3333 = vmatprep.subr.bf16.mxu0 0
      %3334 = vmatpush1.bf16.msra.mxu0 %v3078
      %3335 = vmatprep.subr.bf16.mxu0 0
      %3336 = vmatpush1.bf16.msra.mxu0 %v3079
      %3337 = vmatprep.subr.bf16.mxu0 0
      %3338 = vmatpush1.bf16.msra.mxu0 %v3080
      %3339 = vmatprep.subr.bf16.mxu0 0
      %3340 = vmatpush1.bf16.msra.mxu0 %v3081
      %3341 = vmatprep.subr.bf16.mxu0 0
      %3342 = vmatpush1.bf16.msra.mxu0 %v3082
      %3343 = vmatprep.subr.bf16.mxu0 0
      %3344 = vmatpush1.bf16.msra.mxu0 %v3083
      %3345 = vmatprep.subr.bf16.mxu0 0
      %3346 = vmatpush1.bf16.msra.mxu0 %v3084
      %3347 = vmatprep.subr.bf16.mxu0 0
      %3348 = vmatpush1.bf16.msra.mxu0 %v3085
      %3349 = vmatprep.subr.bf16.mxu0 0
      %3350 = vmatpush1.bf16.msra.mxu0 %v3086
      %3351 = vmatprep.mubr.bf16.mxu0 %v2135
      %3352 = vmatmul.mubr.bf16.gmra.mrb[0].mxu0 %v2134
      %v3353 = vpop.f32.mrb[0].mxu0
      %v3354 = vadd.f32 %v3314, %v3353
      %v3355 = vpop.f32.mrb[0].mxu0
      %v3356 = vpop.f32.mrb[0].mxu0
      %v3357 = vpop.f32.mrb[0].mxu0
      %3358 = vdwg.mxu0
      %3359 = vmatprep.subr.bf16.mxu0 0
      %3360 = vmatpush1.bf16.msra.mxu0 %v3087
      %3361 = vmatprep.subr.bf16.mxu0 0
      %3362 = vmatpush1.bf16.msra.mxu0 %v3088
      %3363 = vmatprep.subr.bf16.mxu0 0
      %3364 = vmatpush1.bf16.msra.mxu0 %v3089
      %3365 = vmatprep.subr.bf16.mxu0 0
      %3366 = vmatpush1.bf16.msra.mxu0 %v3090
      %3367 = vmatprep.subr.bf16.mxu0 0
      %3368 = vmatpush1.bf16.msra.mxu0 %v3091
      %3369 = vmatprep.subr.bf16.mxu0 0
      %3370 = vmatpush1.bf16.msra.mxu0 %v3092
      %3371 = vmatprep.subr.bf16.mxu0 0
      %3372 = vmatpush1.bf16.msra.mxu0 %v3093
      %3373 = vmatprep.subr.bf16.mxu0 0
      %3374 = vmatpush1.bf16.msra.mxu0 %v3094
      %3375 = vmatprep.subr.bf16.mxu0 0
      %3376 = vmatpush1.bf16.msra.mxu0 %v3095
      %3377 = vmatprep.subr.bf16.mxu0 0
      %3378 = vmatpush1.bf16.msra.mxu0 %v3096
      %3379 = vmatprep.subr.bf16.mxu0 0
      %3380 = vmatpush1.bf16.msra.mxu0 %v3097
      %3381 = vmatprep.subr.bf16.mxu0 0
      %3382 = vmatpush1.bf16.msra.mxu0 %v3098
      %3383 = vmatprep.subr.bf16.mxu0 0
      %3384 = vmatpush1.bf16.msra.mxu0 %v3099
      %3385 = vmatprep.subr.bf16.mxu0 0
      %3386 = vmatpush1.bf16.msra.mxu0 %v3100
      %3387 = vmatprep.subr.bf16.mxu0 0
      %3388 = vmatpush1.bf16.msra.mxu0 %v3101
      %3389 = vmatprep.subr.bf16.mxu0 0
      %3390 = vmatpush1.bf16.msra.mxu0 %v3102
      %3391 = vmatprep.mubr.bf16.mxu0 %v2183
      %3392 = vmatmul.mubr.bf16.gmra.mrb[0].mxu0 %v2182
      %v3393 = vpop.f32.mrb[0].mxu0
      %v3394 = vadd.f32 %v3354, %v3393
      %v3395 = vpop.f32.mrb[0].mxu0
      %v3396 = vpop.f32.mrb[0].mxu0
      %v3397 = vpop.f32.mrb[0].mxu0
      %3398 = vdwg.mxu0
      %3399 = vmatprep.subr.bf16.mxu0 0
      %3400 = vmatpush1.bf16.msra.mxu0 %v3103
      %3401 = vmatprep.subr.bf16.mxu0 0
      %3402 = vmatpush1.bf16.msra.mxu0 %v3104
      %3403 = vmatprep.subr.bf16.mxu0 0
      %3404 = vmatpush1.bf16.msra.mxu0 %v3105
      %3405 = vmatprep.subr.bf16.mxu0 0
      %3406 = vmatpush1.bf16.msra.mxu0 %v3106
      %3407 = vmatprep.subr.bf16.mxu0 0
      %3408 = vmatpush1.bf16.msra.mxu0 %v3107
      %3409 = vmatprep.subr.bf16.mxu0 0
      %3410 = vmatpush1.bf16.msra.mxu0 %v3108
      %3411 = vmatprep.subr.bf16.mxu0 0
      %3412 = vmatpush1.bf16.msra.mxu0 %v3109
      %3413 = vmatprep.subr.bf16.mxu0 0
      %3414 = vmatpush1.bf16.msra.mxu0 %v3110
      %3415 = vmatprep.subr.bf16.mxu0 0
      %3416 = vmatpush1.bf16.msra.mxu0 %v3111
      %3417 = vmatprep.subr.bf16.mxu0 0
      %3418 = vmatpush1.bf16.msra.mxu0 %v3112
      %3419 = vmatprep.subr.bf16.mxu0 0
      %3420 = vmatpush1.bf16.msra.mxu0 %v3113
      %3421 = vmatprep.subr.bf16.mxu0 0
      %3422 = vmatpush1.bf16.msra.mxu0 %v3114
      %3423 = vmatprep.subr.bf16.mxu0 0
      %3424 = vmatpush1.bf16.msra.mxu0 %v3115
      %3425 = vmatprep.subr.bf16.mxu0 0
      %3426 = vmatpush1.bf16.msra.mxu0 %v3116
      %3427 = vmatprep.subr.bf16.mxu0 0
      %3428 = vmatpush1.bf16.msra.mxu0 %v3117
      %3429 = vmatprep.subr.bf16.mxu0 0
      %3430 = vmatpush1.bf16.msra.mxu0 %v3118
      %3431 = vmatprep.mubr.bf16.mxu0 %v2231
      %3432 = vmatmul.mubr.bf16.gmra.mrb[0].mxu0 %v2230
      %v3433 = vpop.f32.mrb[0].mxu0
      %v3434 = vadd.f32 %v3394, %v3433
      %v3435 = vpop.f32.mrb[0].mxu0
      %v3436 = vpop.f32.mrb[0].mxu0
      %v3437 = vpop.f32.mrb[0].mxu0
      %3438 = vdwg.mxu0
      %3439 = vmatprep.subr.bf16.mxu0 0
      %3440 = vmatpush1.bf16.msra.mxu0 %v3119
      %3441 = vmatprep.subr.bf16.mxu0 0
      %3442 = vmatpush1.bf16.msra.mxu0 %v3120
      %3443 = vmatprep.subr.bf16.mxu0 0
      %3444 = vmatpush1.bf16.msra.mxu0 %v3121
      %3445 = vmatprep.subr.bf16.mxu0 0
      %3446 = vmatpush1.bf16.msra.mxu0 %v3122
      %3447 = vmatprep.subr.bf16.mxu0 0
      %3448 = vmatpush1.bf16.msra.mxu0 %v3123
      %3449 = vmatprep.subr.bf16.mxu0 0
      %3450 = vmatpush1.bf16.msra.mxu0 %v3124
      %3451 = vmatprep.subr.bf16.mxu0 0
      %3452 = vmatpush1.bf16.msra.mxu0 %v3125
      %3453 = vmatprep.subr.bf16.mxu0 0
      %3454 = vmatpush1.bf16.msra.mxu0 %v3126
      %3455 = vmatprep.subr.bf16.mxu0 0
      %3456 = vmatpush1.bf16.msra.mxu0 %v3127
      %3457 = vmatprep.subr.bf16.mxu0 0
      %3458 = vmatpush1.bf16.msra.mxu0 %v3128
      %3459 = vmatprep.subr.bf16.mxu0 0
      %3460 = vmatpush1.bf16.msra.mxu0 %v3129
      %3461 = vmatprep.subr.bf16.mxu0 0
      %3462 = vmatpush1.bf16.msra.mxu0 %v3130
      %3463 = vmatprep.subr.bf16.mxu0 0
      %3464 = vmatpush1.bf16.msra.mxu0 %v3131
      %3465 = vmatprep.subr.bf16.mxu0 0
      %3466 = vmatpush1.bf16.msra.mxu0 %v3132
      %3467 = vmatprep.subr.bf16.mxu0 0
      %3468 = vmatpush1.bf16.msra.mxu0 %v3133
      %3469 = vmatprep.subr.bf16.mxu0 0
      %3470 = vmatpush1.bf16.msra.mxu0 %v3134
      %3471 = vmatprep.mubr.bf16.mxu0 %v2279
      %3472 = vmatmul.mubr.bf16.gmra.mrb[0].mxu0 %v2278
      %v3473 = vpop.f32.mrb[0].mxu0
      %v3474 = vadd.f32 %v3434, %v3473
      %v3475 = vpop.f32.mrb[0].mxu0
      %v3476 = vpop.f32.mrb[0].mxu0
      %v3477 = vpop.f32.mrb[0].mxu0
      %3478 = vdwg.mxu0
      %3479 = vmatprep.subr.bf16.mxu0 0
      %3480 = vmatpush1.bf16.msra.mxu0 %v3135
      %3481 = vmatprep.subr.bf16.mxu0 0
      %3482 = vmatpush1.bf16.msra.mxu0 %v3136
      %3483 = vmatprep.subr.bf16.mxu0 0
      %3484 = vmatpush1.bf16.msra.mxu0 %v3137
      %3485 = vmatprep.subr.bf16.mxu0 0
      %3486 = vmatpush1.bf16.msra.mxu0 %v3138
      %3487 = vmatprep.subr.bf16.mxu0 0
      %3488 = vmatpush1.bf16.msra.mxu0 %v3139
      %3489 = vmatprep.subr.bf16.mxu0 0
      %3490 = vmatpush1.bf16.msra.mxu0 %v3140
      %3491 = vmatprep.subr.bf16.mxu0 0
      %3492 = vmatpush1.bf16.msra.mxu0 %v3141
      %3493 = vmatprep.subr.bf16.mxu0 0
      %3494 = vmatpush1.bf16.msra.mxu0 %v3142
      %3495 = vmatprep.subr.bf16.mxu0 0
      %3496 = vmatpush1.bf16.msra.mxu0 %v3143
      %3497 = vmatprep.subr.bf16.mxu0 0
      %3498 = vmatpush1.bf16.msra.mxu0 %v3144
      %3499 = vmatprep.subr.bf16.mxu0 0
      %3500 = vmatpush1.bf16.msra.mxu0 %v3145
      %3501 = vmatprep.subr.bf16.mxu0 0
      %3502 = vmatpush1.bf16.msra.mxu0 %v3146
      %3503 = vmatprep.subr.bf16.mxu0 0
      %3504 = vmatpush1.bf16.msra.mxu0 %v3147
      %3505 = vmatprep.subr.bf16.mxu0 0
      %3506 = vmatpush1.bf16.msra.mxu0 %v3148
      %3507 = vmatprep.subr.bf16.mxu0 0
      %3508 = vmatpush1.bf16.msra.mxu0 %v3149
      %3509 = vmatprep.subr.bf16.mxu0 0
      %3510 = vmatpush1.bf16.msra.mxu0 %v3150
      %3511 = vmatprep.mubr.bf16.mxu0 %v2327
      %3512 = vmatmul.mubr.bf16.gmra.mrb[0].mxu0 %v2326
      %v3513 = vpop.f32.mrb[0].mxu0
      %v3514 = vadd.f32 %v3474, %v3513
      %v3515 = vpop.f32.mrb[0].mxu0
      %v3516 = vpop.f32.mrb[0].mxu0
      %v3517 = vpop.f32.mrb[0].mxu0
      %3518 = vdwg.mxu0
      %3519 = vmatprep.subr.bf16.mxu0 0
      %3520 = vmatpush1.bf16.msra.mxu0 %v3151
      %3521 = vmatprep.subr.bf16.mxu0 0
      %3522 = vmatpush1.bf16.msra.mxu0 %v3152
      %3523 = vmatprep.subr.bf16.mxu0 0
      %3524 = vmatpush1.bf16.msra.mxu0 %v3153
      %3525 = vmatprep.subr.bf16.mxu0 0
      %3526 = vmatpush1.bf16.msra.mxu0 %v3154
      %3527 = vmatprep.subr.bf16.mxu0 0
      %3528 = vmatpush1.bf16.msra.mxu0 %v3155
      %3529 = vmatprep.subr.bf16.mxu0 0
      %3530 = vmatpush1.bf16.msra.mxu0 %v3156
      %3531 = vmatprep.subr.bf16.mxu0 0
      %3532 = vmatpush1.bf16.msra.mxu0 %v3157
      %3533 = vmatprep.subr.bf16.mxu0 0
      %3534 = vmatpush1.bf16.msra.mxu0 %v3158
      %3535 = vmatprep.subr.bf16.mxu0 0
      %3536 = vmatpush1.bf16.msra.mxu0 %v3159
      %3537 = vmatprep.subr.bf16.mxu0 0
      %3538 = vmatpush1.bf16.msra.mxu0 %v3160
      %3539 = vmatprep.subr.bf16.mxu0 0
      %3540 = vmatpush1.bf16.msra.mxu0 %v3161
      %3541 = vmatprep.subr.bf16.mxu0 0
      %3542 = vmatpush1.bf16.msra.mxu0 %v3162
      %3543 = vmatprep.subr.bf16.mxu0 0
      %3544 = vmatpush1.bf16.msra.mxu0 %v3163
      %3545 = vmatprep.subr.bf16.mxu0 0
      %3546 = vmatpush1.bf16.msra.mxu0 %v3164
      %3547 = vmatprep.subr.bf16.mxu0 0
      %3548 = vmatpush1.bf16.msra.mxu0 %v3165
      %3549 = vmatprep.subr.bf16.mxu0 0
      %3550 = vmatpush1.bf16.msra.mxu0 %v3166
      %3551 = vmatprep.mubr.bf16.mxu0 %v2375
      %3552 = vmatmul.mubr.bf16.gmra.mrb[0].mxu0 %v2374
      %v3553 = vpop.f32.mrb[0].mxu0
      %v3554 = vadd.f32 %v3514, %v3553
      %v3555 = vpop.f32.mrb[0].mxu0
      %v3556 = vpop.f32.mrb[0].mxu0
      %v3557 = vpop.f32.mrb[0].mxu0
      %3558 = vdwg.mxu0
      %v3559 = vpack.c.bf16 %v3554, %v3554
      %v3560 = vld [vmem:[%s10] sm:$0xf]
      %v3562 = vsel %vm2034, %v3560, 0
      %v3565 = vsel %vm2038, %v3559, 0
      %3567 = vmatprep.subr.bf16.mxu0 0
      %3568 = vmatpush1.bf16.msra.mxu0 %v3565
      %3569 = vmatprep.subr.bf16.mxu0 0
      %3570 = vmatpush1.bf16.msra.mxu0 0
      %3571 = vmatprep.subr.bf16.mxu0 0
      %3572 = vmatpush1.bf16.msra.mxu0 0
      %3573 = vmatprep.subr.bf16.mxu0 0
      %3574 = vmatpush1.bf16.msra.mxu0 0
      %3575 = vmatprep.subr.bf16.mxu0 0
      %3576 = vmatpush1.bf16.msra.mxu0 0
      %3577 = vmatprep.subr.bf16.mxu0 0
      %3578 = vmatpush1.bf16.msra.mxu0 0
      %3579 = vmatprep.subr.bf16.mxu0 0
      %3580 = vmatpush1.bf16.msra.mxu0 0
      %3581 = vmatprep.subr.bf16.mxu0 0
      %3582 = vmatpush1.bf16.msra.mxu0 0
      %3583 = vmatprep.subr.bf16.mxu0 0
      %3584 = vmatpush1.bf16.msra.mxu0 0
      %3585 = vmatprep.subr.bf16.mxu0 0
      %3586 = vmatpush1.bf16.msra.mxu0 0
      %3587 = vmatprep.subr.bf16.mxu0 0
      %3588 = vmatpush1.bf16.msra.mxu0 0
      %3589 = vmatprep.subr.bf16.mxu0 0
      %3590 = vmatpush1.bf16.msra.mxu0 0
      %3591 = vmatprep.subr.bf16.mxu0 0
      %3592 = vmatpush1.bf16.msra.mxu0 0
      %3593 = vmatprep.subr.bf16.mxu0 0
      %3594 = vmatpush1.bf16.msra.mxu0 0
      %3595 = vmatprep.subr.bf16.mxu0 0
      %3596 = vmatpush1.bf16.msra.mxu0 0
      %3597 = vmatprep.subr.bf16.mxu0 0
      %3598 = vmatpush1.bf16.msra.mxu0 0
      %3599 = vmatprep.mubr.bf16.mxu0 0
      %3600 = vmatmul.mubr.bf16.gmra.mrb[0].mxu0 %v3562
      %v3601 = vpop.f32.mrb[0].mxu0
      %v3602 = vadd.f32 0.0, %v3601
      %v3603 = vpop.f32.mrb[0].mxu0
      %v3604 = vpop.f32.mrb[0].mxu0
      %v3605 = vpop.f32.mrb[0].mxu0
      %3606 = vdwg.mxu0
      %v3607 = vpack.c.bf16 %v3602, %v3602
      %s3608 = scalar_lea.vmem %s10, 4
      %v3609 = vld [vmem:[%s3608] sm:$0xf]
      %v3611 = vsel %vm2034, %v3609, 0
      %3613 = vmatprep.subr.bf16.mxu0 0
      %3614 = vmatpush1.bf16.msra.mxu0 %v3565
      %3615 = vmatprep.subr.bf16.mxu0 0
      %3616 = vmatpush1.bf16.msra.mxu0 0
      %3617 = vmatprep.subr.bf16.mxu0 0
      %3618 = vmatpush1.bf16.msra.mxu0 0
      %3619 = vmatprep.subr.bf16.mxu0 0
      %3620 = vmatpush1.bf16.msra.mxu0 0
      %3621 = vmatprep.subr.bf16.mxu0 0
      %3622 = vmatpush1.bf16.msra.mxu0 0
      %3623 = vmatprep.subr.bf16.mxu0 0
      %3624 = vmatpush1.bf16.msra.mxu0 0
      %3625 = vmatprep.subr.bf16.mxu0 0
      %3626 = vmatpush1.bf16.msra.mxu0 0
      %3627 = vmatprep.subr.bf16.mxu0 0
      %3628 = vmatpush1.bf16.msra.mxu0 0
      %3629 = vmatprep.subr.bf16.mxu0 0
      %3630 = vmatpush1.bf16.msra.mxu0 0
      %3631 = vmatprep.subr.bf16.mxu0 0
      %3632 = vmatpush1.bf16.msra.mxu0 0
      %3633 = vmatprep.subr.bf16.mxu0 0
      %3634 = vmatpush1.bf16.msra.mxu0 0
      %3635 = vmatprep.subr.bf16.mxu0 0
      %3636 = vmatpush1.bf16.msra.mxu0 0
      %3637 = vmatprep.subr.bf16.mxu0 0
      %3638 = vmatpush1.bf16.msra.mxu0 0
      %3639 = vmatprep.subr.bf16.mxu0 0
      %3640 = vmatpush1.bf16.msra.mxu0 0
      %3641 = vmatprep.subr.bf16.mxu0 0
      %3642 = vmatpush1.bf16.msra.mxu0 0
      %3643 = vmatprep.subr.bf16.mxu0 0
      %3644 = vmatpush1.bf16.msra.mxu0 0
      %3645 = vmatprep.mubr.bf16.mxu0 0
      %3646 = vmatmul.mubr.bf16.gmra.mrb[0].mxu0 %v3611
      %v3647 = vpop.f32.mrb[0].mxu0
      %v3648 = vadd.f32 0.0, %v3647
      %v3649 = vpop.f32.mrb[0].mxu0
      %v3650 = vpop.f32.mrb[0].mxu0
      %v3651 = vpop.f32.mrb[0].mxu0
      %3652 = vdwg.mxu0
      %v3653 = vpack.c.bf16 %v3648, %v3648
      %s3654 = scalar_lea.vmem %s10, 8
      %v3655 = vld [vmem:[%s3654] sm:$0xf]
      %v3657 = vsel %vm2034, %v3655, 0
      %3659 = vmatprep.subr.bf16.mxu0 0
      %3660 = vmatpush1.bf16.msra.mxu0 %v3565
      %3661 = vmatprep.subr.bf16.mxu0 0
      %3662 = vmatpush1.bf16.msra.mxu0 0
      %3663 = vmatprep.subr.bf16.mxu0 0
      %3664 = vmatpush1.bf16.msra.mxu0 0
      %3665 = vmatprep.subr.bf16.mxu0 0
      %3666 = vmatpush1.bf16.msra.mxu0 0
      %3667 = vmatprep.subr.bf16.mxu0 0
      %3668 = vmatpush1.bf16.msra.mxu0 0
      %3669 = vmatprep.subr.bf16.mxu0 0
      %3670 = vmatpush1.bf16.msra.mxu0 0
      %3671 = vmatprep.subr.bf16.mxu0 0
      %3672 = vmatpush1.bf16.msra.mxu0 0
      %3673 = vmatprep.subr.bf16.mxu0 0
      %3674 = vmatpush1.bf16.msra.mxu0 0
      %3675 = vmatprep.subr.bf16.mxu0 0
      %3676 = vmatpush1.bf16.msra.mxu0 0
      %3677 = vmatprep.subr.bf16.mxu0 0
      %3678 = vmatpush1.bf16.msra.mxu0 0
      %3679 = vmatprep.subr.bf16.mxu0 0
      %3680 = vmatpush1.bf16.msra.mxu0 0
      %3681 = vmatprep.subr.bf16.mxu0 0
      %3682 = vmatpush1.bf16.msra.mxu0 0
      %3683 = vmatprep.subr.bf16.mxu0 0
      %3684 = vmatpush1.bf16.msra.mxu0 0
      %3685 = vmatprep.subr.bf16.mxu0 0
      %3686 = vmatpush1.bf16.msra.mxu0 0
      %3687 = vmatprep.subr.bf16.mxu0 0
      %3688 = vmatpush1.bf16.msra.mxu0 0
      %3689 = vmatprep.subr.bf16.mxu0 0
      %3690 = vmatpush1.bf16.msra.mxu0 0
      %3691 = vmatprep.mubr.bf16.mxu0 0
      %3692 = vmatmul.mubr.bf16.gmra.mrb[0].mxu0 %v3657
      %v3693 = vpop.f32.mrb[0].mxu0
      %v3694 = vadd.f32 0.0, %v3693
      %v3695 = vpop.f32.mrb[0].mxu0
      %v3696 = vpop.f32.mrb[0].mxu0
      %v3697 = vpop.f32.mrb[0].mxu0
      %3698 = vdwg.mxu0
      %v3699 = vpack.c.bf16 %v3694, %v3694
      %s3700 = scalar_lea.vmem %s10, 12
      %v3701 = vld [vmem:[%s3700] sm:$0xf]
      %v3703 = vsel %vm2034, %v3701, 0
      %3705 = vmatprep.subr.bf16.mxu0 0
      %3706 = vmatpush1.bf16.msra.mxu0 %v3565
      %3707 = vmatprep.subr.bf16.mxu0 0
      %3708 = vmatpush1.bf16.msra.mxu0 0
      %3709 = vmatprep.subr.bf16.mxu0 0
      %3710 = vmatpush1.bf16.msra.mxu0 0
      %3711 = vmatprep.subr.bf16.mxu0 0
      %3712 = vmatpush1.bf16.msra.mxu0 0
      %3713 = vmatprep.subr.bf16.mxu0 0
      %3714 = vmatpush1.bf16.msra.mxu0 0
      %3715 = vmatprep.subr.bf16.mxu0 0
      %3716 = vmatpush1.bf16.msra.mxu0 0
      %3717 = vmatprep.subr.bf16.mxu0 0
      %3718 = vmatpush1.bf16.msra.mxu0 0
      %3719 = vmatprep.subr.bf16.mxu0 0
      %3720 = vmatpush1.bf16.msra.mxu0 0
      %3721 = vmatprep.subr.bf16.mxu0 0
      %3722 = vmatpush1.bf16.msra.mxu0 0
      %3723 = vmatprep.subr.bf16.mxu0 0
      %3724 = vmatpush1.bf16.msra.mxu0 0
      %3725 = vmatprep.subr.bf16.mxu0 0
      %3726 = vmatpush1.bf16.msra.mxu0 0
      %3727 = vmatprep.subr.bf16.mxu0 0
      %3728 = vmatpush1.bf16.msra.mxu0 0
      %3729 = vmatprep.subr.bf16.mxu0 0
      %3730 = vmatpush1.bf16.msra.mxu0 0
      %3731 = vmatprep.subr.bf16.mxu0 0
      %3732 = vmatpush1.bf16.msra.mxu0 0
      %3733 = vmatprep.subr.bf16.mxu0 0
      %3734 = vmatpush1.bf16.msra.mxu0 0
      %3735 = vmatprep.subr.bf16.mxu0 0
      %3736 = vmatpush1.bf16.msra.mxu0 0
      %3737 = vmatprep.mubr.bf16.mxu0 0
      %3738 = vmatmul.mubr.bf16.gmra.mrb[0].mxu0 %v3703
      %v3739 = vpop.f32.mrb[0].mxu0
      %v3740 = vadd.f32 0.0, %v3739
      %v3741 = vpop.f32.mrb[0].mxu0
      %v3742 = vpop.f32.mrb[0].mxu0
      %v3743 = vpop.f32.mrb[0].mxu0
      %3744 = vdwg.mxu0
      %v3745 = vpack.c.bf16 %v3740, %v3740
      %s3746 = scalar_lea.vmem %s10, 16
      %v3747 = vld [vmem:[%s3746] sm:$0xf]
      %v3749 = vsel %vm2034, %v3747, 0
      %3751 = vmatprep.subr.bf16.mxu0 0
      %3752 = vmatpush1.bf16.msra.mxu0 %v3565
      %3753 = vmatprep.subr.bf16.mxu0 0
      %3754 = vmatpush1.bf16.msra.mxu0 0
      %3755 = vmatprep.subr.bf16.mxu0 0
      %3756 = vmatpush1.bf16.msra.mxu0 0
      %3757 = vmatprep.subr.bf16.mxu0 0
      %3758 = vmatpush1.bf16.msra.mxu0 0
      %3759 = vmatprep.subr.bf16.mxu0 0
      %3760 = vmatpush1.bf16.msra.mxu0 0
      %3761 = vmatprep.subr.bf16.mxu0 0
      %3762 = vmatpush1.bf16.msra.mxu0 0
      %3763 = vmatprep.subr.bf16.mxu0 0
      %3764 = vmatpush1.bf16.msra.mxu0 0
      %3765 = vmatprep.subr.bf16.mxu0 0
      %3766 = vmatpush1.bf16.msra.mxu0 0
      %3767 = vmatprep.subr.bf16.mxu0 0
      %3768 = vmatpush1.bf16.msra.mxu0 0
      %3769 = vmatprep.subr.bf16.mxu0 0
      %3770 = vmatpush1.bf16.msra.mxu0 0
      %3771 = vmatprep.subr.bf16.mxu0 0
      %3772 = vmatpush1.bf16.msra.mxu0 0
      %3773 = vmatprep.subr.bf16.mxu0 0
      %3774 = vmatpush1.bf16.msra.mxu0 0
      %3775 = vmatprep.subr.bf16.mxu0 0
      %3776 = vmatpush1.bf16.msra.mxu0 0
      %3777 = vmatprep.subr.bf16.mxu0 0
      %3778 = vmatpush1.bf16.msra.mxu0 0
      %3779 = vmatprep.subr.bf16.mxu0 0
      %3780 = vmatpush1.bf16.msra.mxu0 0
      %3781 = vmatprep.subr.bf16.mxu0 0
      %3782 = vmatpush1.bf16.msra.mxu0 0
      %3783 = vmatprep.mubr.bf16.mxu0 0
      %3784 = vmatmul.mubr.bf16.gmra.mrb[0].mxu0 %v3749
      %v3785 = vpop.f32.mrb[0].mxu0
      %v3786 = vadd.f32 0.0, %v3785
      %v3787 = vpop.f32.mrb[0].mxu0
      %v3788 = vpop.f32.mrb[0].mxu0
      %v3789 = vpop.f32.mrb[0].mxu0
      %3790 = vdwg.mxu0
      %v3791 = vpack.c.bf16 %v3786, %v3786
      %s3792 = scalar_lea.vmem %s10, 20
      %v3793 = vld [vmem:[%s3792] sm:$0xf]
      %v3795 = vsel %vm2034, %v3793, 0
      %3797 = vmatprep.subr.bf16.mxu0 0
      %3798 = vmatpush1.bf16.msra.mxu0 %v3565
      %3799 = vmatprep.subr.bf16.mxu0 0
      %3800 = vmatpush1.bf16.msra.mxu0 0
      %3801 = vmatprep.subr.bf16.mxu0 0
      %3802 = vmatpush1.bf16.msra.mxu0 0
      %3803 = vmatprep.subr.bf16.mxu0 0
      %3804 = vmatpush1.bf16.msra.mxu0 0
      %3805 = vmatprep.subr.bf16.mxu0 0
      %3806 = vmatpush1.bf16.msra.mxu0 0
      %3807 = vmatprep.subr.bf16.mxu0 0
      %3808 = vmatpush1.bf16.msra.mxu0 0
      %3809 = vmatprep.subr.bf16.mxu0 0
      %3810 = vmatpush1.bf16.msra.mxu0 0
      %3811 = vmatprep.subr.bf16.mxu0 0
      %3812 = vmatpush1.bf16.msra.mxu0 0
      %3813 = vmatprep.subr.bf16.mxu0 0
      %3814 = vmatpush1.bf16.msra.mxu0 0
      %3815 = vmatprep.subr.bf16.mxu0 0
      %3816 = vmatpush1.bf16.msra.mxu0 0
      %3817 = vmatprep.subr.bf16.mxu0 0
      %3818 = vmatpush1.bf16.msra.mxu0 0
      %3819 = vmatprep.subr.bf16.mxu0 0
      %3820 = vmatpush1.bf16.msra.mxu0 0
      %3821 = vmatprep.subr.bf16.mxu0 0
      %3822 = vmatpush1.bf16.msra.mxu0 0
      %3823 = vmatprep.subr.bf16.mxu0 0
      %3824 = vmatpush1.bf16.msra.mxu0 0
      %3825 = vmatprep.subr.bf16.mxu0 0
      %3826 = vmatpush1.bf16.msra.mxu0 0
      %3827 = vmatprep.subr.bf16.mxu0 0
      %3828 = vmatpush1.bf16.msra.mxu0 0
      %3829 = vmatprep.mubr.bf16.mxu0 0
      %3830 = vmatmul.mubr.bf16.gmra.mrb[0].mxu0 %v3795
      %v3831 = vpop.f32.mrb[0].mxu0
      %v3832 = vadd.f32 0.0, %v3831
      %v3833 = vpop.f32.mrb[0].mxu0
      %v3834 = vpop.f32.mrb[0].mxu0
      %v3835 = vpop.f32.mrb[0].mxu0
      %3836 = vdwg.mxu0
      %v3837 = vpack.c.bf16 %v3832, %v3832
      %s3838 = scalar_lea.vmem %s10, 24
      %v3839 = vld [vmem:[%s3838] sm:$0xf]
      %v3841 = vsel %vm2034, %v3839, 0
      %3843 = vmatprep.subr.bf16.mxu0 0
      %3844 = vmatpush1.bf16.msra.mxu0 %v3565
      %3845 = vmatprep.subr.bf16.mxu0 0
      %3846 = vmatpush1.bf16.msra.mxu0 0
      %3847 = vmatprep.subr.bf16.mxu0 0
      %3848 = vmatpush1.bf16.msra.mxu0 0
      %3849 = vmatprep.subr.bf16.mxu0 0
      %3850 = vmatpush1.bf16.msra.mxu0 0
      %3851 = vmatprep.subr.bf16.mxu0 0
      %3852 = vmatpush1.bf16.msra.mxu0 0
      %3853 = vmatprep.subr.bf16.mxu0 0
      %3854 = vmatpush1.bf16.msra.mxu0 0
      %3855 = vmatprep.subr.bf16.mxu0 0
      %3856 = vmatpush1.bf16.msra.mxu0 0
      %3857 = vmatprep.subr.bf16.mxu0 0
      %3858 = vmatpush1.bf16.msra.mxu0 0
      %3859 = vmatprep.subr.bf16.mxu0 0
      %3860 = vmatpush1.bf16.msra.mxu0 0
      %3861 = vmatprep.subr.bf16.mxu0 0
      %3862 = vmatpush1.bf16.msra.mxu0 0
      %3863 = vmatprep.subr.bf16.mxu0 0
      %3864 = vmatpush1.bf16.msra.mxu0 0
      %3865 = vmatprep.subr.bf16.mxu0 0
      %3866 = vmatpush1.bf16.msra.mxu0 0
      %3867 = vmatprep.subr.bf16.mxu0 0
      %3868 = vmatpush1.bf16.msra.mxu0 0
      %3869 = vmatprep.subr.bf16.mxu0 0
      %3870 = vmatpush1.bf16.msra.mxu0 0
      %3871 = vmatprep.subr.bf16.mxu0 0
      %3872 = vmatpush1.bf16.msra.mxu0 0
      %3873 = vmatprep.subr.bf16.mxu0 0
      %3874 = vmatpush1.bf16.msra.mxu0 0
      %3875 = vmatprep.mubr.bf16.mxu0 0
      %3876 = vmatmul.mubr.bf16.gmra.mrb[0].mxu0 %v3841
      %v3877 = vpop.f32.mrb[0].mxu0
      %v3878 = vadd.f32 0.0, %v3877
      %v3879 = vpop.f32.mrb[0].mxu0
      %v3880 = vpop.f32.mrb[0].mxu0
      %v3881 = vpop.f32.mrb[0].mxu0
      %3882 = vdwg.mxu0
      %v3883 = vpack.c.bf16 %v3878, %v3878
      %v3884 = vld [vmem:[%s11] sm:$0xff]
      %v3885 = vld [vmem:[%s11 + $0x8] sm:$0xff]
      %v3886 = vld [vmem:[%s11 + $0x10] sm:$0xff]
      %v3887 = vld [vmem:[%s11 + $0x18] sm:$0xff]
      %v3888 = vld [vmem:[%s11 + $0x20] sm:$0xff]
      %v3889 = vld [vmem:[%s11 + $0x28] sm:$0xff]
      %v3890 = vld [vmem:[%s11 + $0x30] sm:$0xff]
      %v3891 = vld [vmem:[%s11 + $0x38] sm:$0xff]
      %v3892 = vld [vmem:[%s11 + $0x40] sm:$0xff]
      %v3893 = vld [vmem:[%s11 + $0x48] sm:$0xff]
      %v3894 = vld [vmem:[%s11 + $0x50] sm:$0xff]
      %v3895 = vld [vmem:[%s11 + $0x58] sm:$0xff]
      %v3896 = vld [vmem:[%s11 + $0x60] sm:$0xff]
      %v3897 = vld [vmem:[%s11 + $0x68] sm:$0xff]
      %v3898 = vld [vmem:[%s11 + $0x70] sm:$0xff]
      %v3899 = vld [vmem:[%s11 + $0x78] sm:$0xff]
      %v3900 = vld [vmem:[%s11 + $0x80] sm:$0xff]
      %v3901 = vld [vmem:[%s11 + $0x88] sm:$0xff]
      %v3902 = vld [vmem:[%s11 + $0x90] sm:$0xff]
      %v3903 = vld [vmem:[%s11 + $0x98] sm:$0xff]
      %v3904 = vld [vmem:[%s11 + $0xa0] sm:$0xff]
      %v3905 = vld [vmem:[%s11 + $0xa8] sm:$0xff]
      %v3906 = vld [vmem:[%s11 + $0xb0] sm:$0xff]
      %v3907 = vld [vmem:[%s11 + $0xb8] sm:$0xff]
      %v3908 = vld [vmem:[%s11 + $0xc0] sm:$0xff]
      %v3909 = vld [vmem:[%s11 + $0xc8] sm:$0xff]
      %v3910 = vld [vmem:[%s11 + $0xd0] sm:$0xff]
      %v3911 = vld [vmem:[%s11 + $0xd8] sm:$0xff]
      %v3912 = vld [vmem:[%s11 + $0xe0] sm:$0xff]
      %v3913 = vld [vmem:[%s11 + $0xe8] sm:$0xff]
      %v3914 = vld [vmem:[%s11 + $0xf0] sm:$0xff]
      %v3915 = vld [vmem:[%s11 + $0xf8] sm:$0xff]
      %v3916 = vld [vmem:[%s11 + $0x100] sm:$0xff]
      %v3917 = vld [vmem:[%s11 + $0x108] sm:$0xff]
      %v3918 = vld [vmem:[%s11 + $0x110] sm:$0xff]
      %v3919 = vld [vmem:[%s11 + $0x118] sm:$0xff]
      %v3920 = vld [vmem:[%s11 + $0x120] sm:$0xff]
      %v3921 = vld [vmem:[%s11 + $0x128] sm:$0xff]
      %v3922 = vld [vmem:[%s11 + $0x130] sm:$0xff]
      %v3923 = vld [vmem:[%s11 + $0x138] sm:$0xff]
      %v3924 = vld [vmem:[%s11 + $0x140] sm:$0xff]
      %v3925 = vld [vmem:[%s11 + $0x148] sm:$0xff]
      %v3926 = vld [vmem:[%s11 + $0x150] sm:$0xff]
      %v3927 = vld [vmem:[%s11 + $0x158] sm:$0xff]
      %v3928 = vld [vmem:[%s11 + $0x160] sm:$0xff]
      %v3929 = vld [vmem:[%s11 + $0x168] sm:$0xff]
      %v3930 = vld [vmem:[%s11 + $0x170] sm:$0xff]
      %v3931 = vld [vmem:[%s11 + $0x178] sm:$0xff]
      %v3932 = vld [vmem:[%s11 + $0x180] sm:$0xff]
      %v3933 = vld [vmem:[%s11 + $0x188] sm:$0xff]
      %v3934 = vld [vmem:[%s11 + $0x190] sm:$0xff]
      %v3935 = vld [vmem:[%s11 + $0x198] sm:$0xff]
      %v3936 = vld [vmem:[%s11 + $0x1a0] sm:$0xff]
      %v3937 = vld [vmem:[%s11 + $0x1a8] sm:$0xff]
      %v3938 = vld [vmem:[%s11 + $0x1b0] sm:$0xff]
      %v3939 = vld [vmem:[%s11 + $0x1b8] sm:$0xff]
      %v3940 = vld [vmem:[%s11 + $0x1c0] sm:$0xff]
      %v3941 = vld [vmem:[%s11 + $0x1c8] sm:$0xff]
      %v3942 = vld [vmem:[%s11 + $0x1d0] sm:$0xff]
      %v3943 = vld [vmem:[%s11 + $0x1d8] sm:$0xff]
      %v3944 = vld [vmem:[%s11 + $0x1e0] sm:$0xff]
      %v3945 = vld [vmem:[%s11 + $0x1e8] sm:$0xff]
      %v3946 = vld [vmem:[%s11 + $0x1f0] sm:$0xff]
      %v3947 = vld [vmem:[%s11 + $0x1f8] sm:$0xff]
      %v3948 = vld [vmem:[%s11 + $0x200] sm:$0xff]
      %v3949 = vld [vmem:[%s11 + $0x208] sm:$0xff]
      %v3950 = vld [vmem:[%s11 + $0x210] sm:$0xff]
      %v3951 = vld [vmem:[%s11 + $0x218] sm:$0xff]
      %v3952 = vld [vmem:[%s11 + $0x220] sm:$0xff]
      %v3953 = vld [vmem:[%s11 + $0x228] sm:$0xff]
      %v3954 = vld [vmem:[%s11 + $0x230] sm:$0xff]
      %v3955 = vld [vmem:[%s11 + $0x238] sm:$0xff]
      %v3956 = vld [vmem:[%s11 + $0x240] sm:$0xff]
      %v3957 = vld [vmem:[%s11 + $0x248] sm:$0xff]
      %v3958 = vld [vmem:[%s11 + $0x250] sm:$0xff]
      %v3959 = vld [vmem:[%s11 + $0x258] sm:$0xff]
      %v3960 = vld [vmem:[%s11 + $0x260] sm:$0xff]
      %v3961 = vld [vmem:[%s11 + $0x268] sm:$0xff]
      %v3962 = vld [vmem:[%s11 + $0x270] sm:$0xff]
      %v3963 = vld [vmem:[%s11 + $0x278] sm:$0xff]
      %v3964 = vld [vmem:[%s11 + $0x280] sm:$0xff]
      %v3965 = vld [vmem:[%s11 + $0x288] sm:$0xff]
      %v3966 = vld [vmem:[%s11 + $0x290] sm:$0xff]
      %v3967 = vld [vmem:[%s11 + $0x298] sm:$0xff]
      %v3968 = vld [vmem:[%s11 + $0x2a0] sm:$0xff]
      %v3969 = vld [vmem:[%s11 + $0x2a8] sm:$0xff]
      %v3970 = vld [vmem:[%s11 + $0x2b0] sm:$0xff]
      %v3971 = vld [vmem:[%s11 + $0x2b8] sm:$0xff]
      %v3972 = vld [vmem:[%s11 + $0x2c0] sm:$0xff]
      %v3973 = vld [vmem:[%s11 + $0x2c8] sm:$0xff]
      %v3974 = vld [vmem:[%s11 + $0x2d0] sm:$0xff]
      %v3975 = vld [vmem:[%s11 + $0x2d8] sm:$0xff]
      %v3976 = vld [vmem:[%s11 + $0x2e0] sm:$0xff]
      %v3977 = vld [vmem:[%s11 + $0x2e8] sm:$0xff]
      %v3978 = vld [vmem:[%s11 + $0x2f0] sm:$0xff]
      %v3979 = vld [vmem:[%s11 + $0x2f8] sm:$0xff]
      %v3980 = vld [vmem:[%s11 + $0x300] sm:$0xff]
      %v3981 = vld [vmem:[%s11 + $0x308] sm:$0xff]
      %v3982 = vld [vmem:[%s11 + $0x310] sm:$0xff]
      %v3983 = vld [vmem:[%s11 + $0x318] sm:$0xff]
      %v3984 = vld [vmem:[%s11 + $0x320] sm:$0xff]
      %v3985 = vld [vmem:[%s11 + $0x328] sm:$0xff]
      %v3986 = vld [vmem:[%s11 + $0x330] sm:$0xff]
      %v3987 = vld [vmem:[%s11 + $0x338] sm:$0xff]
      %v3988 = vld [vmem:[%s11 + $0x340] sm:$0xff]
      %v3989 = vld [vmem:[%s11 + $0x348] sm:$0xff]
      %v3990 = vld [vmem:[%s11 + $0x350] sm:$0xff]
      %v3991 = vld [vmem:[%s11 + $0x358] sm:$0xff]
      %v3992 = vld [vmem:[%s11 + $0x360] sm:$0xff]
      %v3993 = vld [vmem:[%s11 + $0x368] sm:$0xff]
      %v3994 = vld [vmem:[%s11 + $0x370] sm:$0xff]
      %v3995 = vld [vmem:[%s11 + $0x378] sm:$0xff]
      %v3996 = vld [vmem:[%s12] sm:$0x3]
      %v3998 = vlaneseq
      %v3999 = vshrl.u32 %v3998, 7
      %v4000 = vsub.s32 0, %v3999
      %v4001 = vrot.slane %v3996, %v4000
      %v4002 = vlaneseq
      %v4003 = vshrl.u32 %v4002, 7
      %v4004 = vsub.s32 1, %v4003
      %v4005 = vrot.slane %v3996, %v4004
      %v4120 = vunpack.c.l.b16 %v3884
      %v4121 = vunpack.c.h.b16 %v3884
      %v4122 = vunpack.c.l.b16 %v3885
      %v4123 = vunpack.c.h.b16 %v3885
      %v4124 = vunpack.c.l.b16 %v3886
      %v4125 = vunpack.c.h.b16 %v3886
      %v4126 = vunpack.c.l.b16 %v3887
      %v4127 = vunpack.c.h.b16 %v3887
      %v4128 = vunpack.c.l.b16 %v3888
      %v4129 = vunpack.c.h.b16 %v3888
      %v4130 = vunpack.c.l.b16 %v3889
      %v4131 = vunpack.c.h.b16 %v3889
      %v4132 = vunpack.c.l.b16 %v3890
      %v4133 = vunpack.c.h.b16 %v3890
      %v4134 = vunpack.c.l.b16 %v3891
      %v4135 = vunpack.c.h.b16 %v3891
      %v4136 = vunpack.c.l.b16 %v3892
      %v4137 = vunpack.c.h.b16 %v3892
      %v4138 = vunpack.c.l.b16 %v3893
      %v4139 = vunpack.c.h.b16 %v3893
      %v4140 = vunpack.c.l.b16 %v3894
      %v4141 = vunpack.c.h.b16 %v3894
      %v4142 = vunpack.c.l.b16 %v3895
      %v4143 = vunpack.c.h.b16 %v3895
      %v4144 = vunpack.c.l.b16 %v3896
      %v4145 = vunpack.c.h.b16 %v3896
      %v4146 = vunpack.c.l.b16 %v3897
      %v4147 = vunpack.c.h.b16 %v3897
      %v4148 = vunpack.c.l.b16 %v3898
      %v4149 = vunpack.c.h.b16 %v3898
      %v4150 = vunpack.c.l.b16 %v3899
      %v4151 = vunpack.c.h.b16 %v3899
      %v4152 = vunpack.c.l.b16 %v3900
      %v4153 = vunpack.c.h.b16 %v3900
      %v4154 = vunpack.c.l.b16 %v3901
      %v4155 = vunpack.c.h.b16 %v3901
      %v4156 = vunpack.c.l.b16 %v3902
      %v4157 = vunpack.c.h.b16 %v3902
      %v4158 = vunpack.c.l.b16 %v3903
      %v4159 = vunpack.c.h.b16 %v3903
      %v4160 = vunpack.c.l.b16 %v3904
      %v4161 = vunpack.c.h.b16 %v3904
      %v4162 = vunpack.c.l.b16 %v3905
      %v4163 = vunpack.c.h.b16 %v3905
      %v4164 = vunpack.c.l.b16 %v3906
      %v4165 = vunpack.c.h.b16 %v3906
      %v4166 = vunpack.c.l.b16 %v3907
      %v4167 = vunpack.c.h.b16 %v3907
      %v4168 = vunpack.c.l.b16 %v3908
      %v4169 = vunpack.c.h.b16 %v3908
      %v4170 = vunpack.c.l.b16 %v3909
      %v4171 = vunpack.c.h.b16 %v3909
      %v4172 = vunpack.c.l.b16 %v3910
      %v4173 = vunpack.c.h.b16 %v3910
      %v4174 = vunpack.c.l.b16 %v3911
      %v4175 = vunpack.c.h.b16 %v3911
      %v4176 = vunpack.c.l.b16 %v3912
      %v4177 = vunpack.c.h.b16 %v3912
      %v4178 = vunpack.c.l.b16 %v3913
      %v4179 = vunpack.c.h.b16 %v3913
      %v4180 = vunpack.c.l.b16 %v3914
      %v4181 = vunpack.c.h.b16 %v3914
      %v4182 = vunpack.c.l.b16 %v3915
      %v4183 = vunpack.c.h.b16 %v3915
      %v4184 = vunpack.c.l.b16 %v3916
      %v4185 = vunpack.c.h.b16 %v3916
      %v4186 = vunpack.c.l.b16 %v3917
      %v4187 = vunpack.c.h.b16 %v3917
      %v4188 = vunpack.c.l.b16 %v3918
      %v4189 = vunpack.c.h.b16 %v3918
      %v4190 = vunpack.c.l.b16 %v3919
      %v4191 = vunpack.c.h.b16 %v3919
      %v4192 = vunpack.c.l.b16 %v3920
      %v4193 = vunpack.c.h.b16 %v3920
      %v4194 = vunpack.c.l.b16 %v3921
      %v4195 = vunpack.c.h.b16 %v3921
      %v4196 = vunpack.c.l.b16 %v3922
      %v4197 = vunpack.c.h.b16 %v3922
      %v4198 = vunpack.c.l.b16 %v3923
      %v4199 = vunpack.c.h.b16 %v3923
      %v4200 = vunpack.c.l.b16 %v3924
      %v4201 = vunpack.c.h.b16 %v3924
      %v4202 = vunpack.c.l.b16 %v3925
      %v4203 = vunpack.c.h.b16 %v3925
      %v4204 = vunpack.c.l.b16 %v3926
      %v4205 = vunpack.c.h.b16 %v3926
      %v4206 = vunpack.c.l.b16 %v3927
      %v4207 = vunpack.c.h.b16 %v3927
      %v4208 = vunpack.c.l.b16 %v3928
      %v4209 = vunpack.c.h.b16 %v3928
      %v4210 = vunpack.c.l.b16 %v3929
      %v4211 = vunpack.c.h.b16 %v3929
      %v4212 = vunpack.c.l.b16 %v3930
      %v4213 = vunpack.c.h.b16 %v3930
      %v4214 = vunpack.c.l.b16 %v3931
      %v4215 = vunpack.c.h.b16 %v3931
      %v4216 = vunpack.c.l.b16 %v3932
      %v4217 = vunpack.c.h.b16 %v3932
      %v4218 = vunpack.c.l.b16 %v3933
      %v4219 = vunpack.c.h.b16 %v3933
      %v4220 = vunpack.c.l.b16 %v3934
      %v4221 = vunpack.c.h.b16 %v3934
      %v4222 = vunpack.c.l.b16 %v3935
      %v4223 = vunpack.c.h.b16 %v3935
      %v4224 = vunpack.c.l.b16 %v3936
      %v4225 = vunpack.c.h.b16 %v3936
      %v4226 = vunpack.c.l.b16 %v3937
      %v4227 = vunpack.c.h.b16 %v3937
      %v4228 = vunpack.c.l.b16 %v3938
      %v4229 = vunpack.c.h.b16 %v3938
      %v4230 = vunpack.c.l.b16 %v3939
      %v4231 = vunpack.c.h.b16 %v3939
      %v4232 = vunpack.c.l.b16 %v3940
      %v4233 = vunpack.c.h.b16 %v3940
      %v4234 = vunpack.c.l.b16 %v3941
      %v4235 = vunpack.c.h.b16 %v3941
      %v4236 = vunpack.c.l.b16 %v3942
      %v4237 = vunpack.c.h.b16 %v3942
      %v4238 = vunpack.c.l.b16 %v3943
      %v4239 = vunpack.c.h.b16 %v3943
      %v4240 = vunpack.c.l.b16 %v3944
      %v4241 = vunpack.c.h.b16 %v3944
      %v4242 = vunpack.c.l.b16 %v3945
      %v4243 = vunpack.c.h.b16 %v3945
      %v4244 = vunpack.c.l.b16 %v3946
      %v4245 = vunpack.c.h.b16 %v3946
      %v4246 = vunpack.c.l.b16 %v3947
      %v4247 = vunpack.c.h.b16 %v3947
      %v4248 = vunpack.c.l.b16 %v3948
      %v4249 = vunpack.c.h.b16 %v3948
      %v4250 = vunpack.c.l.b16 %v3949
      %v4251 = vunpack.c.h.b16 %v3949
      %v4252 = vunpack.c.l.b16 %v3950
      %v4253 = vunpack.c.h.b16 %v3950
      %v4254 = vunpack.c.l.b16 %v3951
      %v4255 = vunpack.c.h.b16 %v3951
      %v4256 = vunpack.c.l.b16 %v3952
      %v4257 = vunpack.c.h.b16 %v3952
      %v4258 = vunpack.c.l.b16 %v3953
      %v4259 = vunpack.c.h.b16 %v3953
      %v4260 = vunpack.c.l.b16 %v3954
      %v4261 = vunpack.c.h.b16 %v3954
      %v4262 = vunpack.c.l.b16 %v3955
      %v4263 = vunpack.c.h.b16 %v3955
      %v4264 = vunpack.c.l.b16 %v3956
      %v4265 = vunpack.c.h.b16 %v3956
      %v4266 = vunpack.c.l.b16 %v3957
      %v4267 = vunpack.c.h.b16 %v3957
      %v4268 = vunpack.c.l.b16 %v3958
      %v4269 = vunpack.c.h.b16 %v3958
      %v4270 = vunpack.c.l.b16 %v3959
      %v4271 = vunpack.c.h.b16 %v3959
      %v4272 = vunpack.c.l.b16 %v3960
      %v4273 = vunpack.c.h.b16 %v3960
      %v4274 = vunpack.c.l.b16 %v3961
      %v4275 = vunpack.c.h.b16 %v3961
      %v4276 = vunpack.c.l.b16 %v3962
      %v4277 = vunpack.c.h.b16 %v3962
      %v4278 = vunpack.c.l.b16 %v3963
      %v4279 = vunpack.c.h.b16 %v3963
      %v4280 = vunpack.c.l.b16 %v3964
      %v4281 = vunpack.c.h.b16 %v3964
      %v4282 = vunpack.c.l.b16 %v3965
      %v4283 = vunpack.c.h.b16 %v3965
      %v4284 = vunpack.c.l.b16 %v3966
      %v4285 = vunpack.c.h.b16 %v3966
      %v4286 = vunpack.c.l.b16 %v3967
      %v4287 = vunpack.c.h.b16 %v3967
      %v4288 = vunpack.c.l.b16 %v3968
      %v4289 = vunpack.c.h.b16 %v3968
      %v4290 = vunpack.c.l.b16 %v3969
      %v4291 = vunpack.c.h.b16 %v3969
      %v4292 = vunpack.c.l.b16 %v3970
      %v4293 = vunpack.c.h.b16 %v3970
      %v4294 = vunpack.c.l.b16 %v3971
      %v4295 = vunpack.c.h.b16 %v3971
      %v4296 = vunpack.c.l.b16 %v3972
      %v4297 = vunpack.c.h.b16 %v3972
      %v4298 = vunpack.c.l.b16 %v3973
      %v4299 = vunpack.c.h.b16 %v3973
      %v4300 = vunpack.c.l.b16 %v3974
      %v4301 = vunpack.c.h.b16 %v3974
      %v4302 = vunpack.c.l.b16 %v3975
      %v4303 = vunpack.c.h.b16 %v3975
      %v4304 = vunpack.c.l.b16 %v3976
      %v4305 = vunpack.c.h.b16 %v3976
      %v4306 = vunpack.c.l.b16 %v3977
      %v4307 = vunpack.c.h.b16 %v3977
      %v4308 = vunpack.c.l.b16 %v3978
      %v4309 = vunpack.c.h.b16 %v3978
      %v4310 = vunpack.c.l.b16 %v3979
      %v4311 = vunpack.c.h.b16 %v3979
      %v4312 = vunpack.c.l.b16 %v3980
      %v4313 = vunpack.c.h.b16 %v3980
      %v4314 = vunpack.c.l.b16 %v3981
      %v4315 = vunpack.c.h.b16 %v3981
      %v4316 = vunpack.c.l.b16 %v3982
      %v4317 = vunpack.c.h.b16 %v3982
      %v4318 = vunpack.c.l.b16 %v3983
      %v4319 = vunpack.c.h.b16 %v3983
      %v4320 = vunpack.c.l.b16 %v3984
      %v4321 = vunpack.c.h.b16 %v3984
      %v4322 = vunpack.c.l.b16 %v3985
      %v4323 = vunpack.c.h.b16 %v3985
      %v4324 = vunpack.c.l.b16 %v3986
      %v4325 = vunpack.c.h.b16 %v3986
      %v4326 = vunpack.c.l.b16 %v3987
      %v4327 = vunpack.c.h.b16 %v3987
      %v4328 = vunpack.c.l.b16 %v3988
      %v4329 = vunpack.c.h.b16 %v3988
      %v4330 = vunpack.c.l.b16 %v3989
      %v4331 = vunpack.c.h.b16 %v3989
      %v4332 = vunpack.c.l.b16 %v3990
      %v4333 = vunpack.c.h.b16 %v3990
      %v4334 = vunpack.c.l.b16 %v3991
      %v4335 = vunpack.c.h.b16 %v3991
      %v4336 = vunpack.c.l.b16 %v3992
      %v4337 = vunpack.c.h.b16 %v3992
      %v4338 = vunpack.c.l.b16 %v3993
      %v4339 = vunpack.c.h.b16 %v3993
      %v4340 = vunpack.c.l.b16 %v3994
      %v4341 = vunpack.c.h.b16 %v3994
      %v4342 = vunpack.c.l.b16 %v3995
      %v4343 = vunpack.c.h.b16 %v3995
      %v4344 = vpack.c.b16 %v4122, %v4120
      %v4345 = vpack.c.b16 %v4123, %v4121
      %v4346 = vpack.c.b16 %v4126, %v4124
      %v4347 = vpack.c.b16 %v4127, %v4125
      %v4348 = vpack.c.b16 %v4130, %v4128
      %v4349 = vpack.c.b16 %v4131, %v4129
      %v4350 = vpack.c.b16 %v4134, %v4132
      %v4351 = vpack.c.b16 %v4135, %v4133
      %v4352 = vpack.c.b16 %v4138, %v4136
      %v4353 = vpack.c.b16 %v4139, %v4137
      %v4354 = vpack.c.b16 %v4142, %v4140
      %v4355 = vpack.c.b16 %v4143, %v4141
      %v4356 = vpack.c.b16 %v4146, %v4144
      %v4357 = vpack.c.b16 %v4147, %v4145
      %v4358 = vpack.c.b16 %v4150, %v4148
      %v4359 = vpack.c.b16 %v4151, %v4149
      %v4360 = vpack.c.b16 %v4154, %v4152
      %v4361 = vpack.c.b16 %v4155, %v4153
      %v4362 = vpack.c.b16 %v4158, %v4156
      %v4363 = vpack.c.b16 %v4159, %v4157
      %v4364 = vpack.c.b16 %v4162, %v4160
      %v4365 = vpack.c.b16 %v4163, %v4161
      %v4366 = vpack.c.b16 %v4166, %v4164
      %v4367 = vpack.c.b16 %v4167, %v4165
      %v4368 = vpack.c.b16 %v4170, %v4168
      %v4369 = vpack.c.b16 %v4171, %v4169
      %v4370 = vpack.c.b16 %v4174, %v4172
      %v4371 = vpack.c.b16 %v4175, %v4173
      %v4372 = vpack.c.b16 %v4178, %v4176
      %v4373 = vpack.c.b16 %v4179, %v4177
      %v4374 = vpack.c.b16 %v4182, %v4180
      %v4375 = vpack.c.b16 %v4183, %v4181
      %v4376 = vpack.c.b16 %v4186, %v4184
      %v4377 = vpack.c.b16 %v4187, %v4185
      %v4378 = vpack.c.b16 %v4190, %v4188
      %v4379 = vpack.c.b16 %v4191, %v4189
      %v4380 = vpack.c.b16 %v4194, %v4192
      %v4381 = vpack.c.b16 %v4195, %v4193
      %v4382 = vpack.c.b16 %v4198, %v4196
      %v4383 = vpack.c.b16 %v4199, %v4197
      %v4384 = vpack.c.b16 %v4202, %v4200
      %v4385 = vpack.c.b16 %v4203, %v4201
      %v4386 = vpack.c.b16 %v4206, %v4204
      %v4387 = vpack.c.b16 %v4207, %v4205
      %v4388 = vpack.c.b16 %v4210, %v4208
      %v4389 = vpack.c.b16 %v4211, %v4209
      %v4390 = vpack.c.b16 %v4214, %v4212
      %v4391 = vpack.c.b16 %v4215, %v4213
      %v4392 = vpack.c.b16 %v4218, %v4216
      %v4393 = vpack.c.b16 %v4219, %v4217
      %v4394 = vpack.c.b16 %v4222, %v4220
      %v4395 = vpack.c.b16 %v4223, %v4221
      %v4396 = vpack.c.b16 %v4226, %v4224
      %v4397 = vpack.c.b16 %v4227, %v4225
      %v4398 = vpack.c.b16 %v4230, %v4228
      %v4399 = vpack.c.b16 %v4231, %v4229
      %v4400 = vpack.c.b16 %v4234, %v4232
      %v4401 = vpack.c.b16 %v4235, %v4233
      %v4402 = vpack.c.b16 %v4238, %v4236
      %v4403 = vpack.c.b16 %v4239, %v4237
      %v4404 = vpack.c.b16 %v4242, %v4240
      %v4405 = vpack.c.b16 %v4243, %v4241
      %v4406 = vpack.c.b16 %v4246, %v4244
      %v4407 = vpack.c.b16 %v4247, %v4245
      %v4408 = vpack.c.b16 %v4250, %v4248
      %v4409 = vpack.c.b16 %v4251, %v4249
      %v4410 = vpack.c.b16 %v4254, %v4252
      %v4411 = vpack.c.b16 %v4255, %v4253
      %v4412 = vpack.c.b16 %v4258, %v4256
      %v4413 = vpack.c.b16 %v4259, %v4257
      %v4414 = vpack.c.b16 %v4262, %v4260
      %v4415 = vpack.c.b16 %v4263, %v4261
      %v4416 = vpack.c.b16 %v4266, %v4264
      %v4417 = vpack.c.b16 %v4267, %v4265
      %v4418 = vpack.c.b16 %v4270, %v4268
      %v4419 = vpack.c.b16 %v4271, %v4269
      %v4420 = vpack.c.b16 %v4274, %v4272
      %v4421 = vpack.c.b16 %v4275, %v4273
      %v4422 = vpack.c.b16 %v4278, %v4276
      %v4423 = vpack.c.b16 %v4279, %v4277
      %v4424 = vpack.c.b16 %v4282, %v4280
      %v4425 = vpack.c.b16 %v4283, %v4281
      %v4426 = vpack.c.b16 %v4286, %v4284
      %v4427 = vpack.c.b16 %v4287, %v4285
      %v4428 = vpack.c.b16 %v4290, %v4288
      %v4429 = vpack.c.b16 %v4291, %v4289
      %v4430 = vpack.c.b16 %v4294, %v4292
      %v4431 = vpack.c.b16 %v4295, %v4293
      %v4432 = vpack.c.b16 %v4298, %v4296
      %v4433 = vpack.c.b16 %v4299, %v4297
      %v4434 = vpack.c.b16 %v4302, %v4300
      %v4435 = vpack.c.b16 %v4303, %v4301
      %v4436 = vpack.c.b16 %v4306, %v4304
      %v4437 = vpack.c.b16 %v4307, %v4305
      %v4438 = vpack.c.b16 %v4310, %v4308
      %v4439 = vpack.c.b16 %v4311, %v4309
      %v4440 = vpack.c.b16 %v4314, %v4312
      %v4441 = vpack.c.b16 %v4315, %v4313
      %v4442 = vpack.c.b16 %v4318, %v4316
      %v4443 = vpack.c.b16 %v4319, %v4317
      %v4444 = vpack.c.b16 %v4322, %v4320
      %v4445 = vpack.c.b16 %v4323, %v4321
      %v4446 = vpack.c.b16 %v4326, %v4324
      %v4447 = vpack.c.b16 %v4327, %v4325
      %v4448 = vpack.c.b16 %v4330, %v4328
      %v4449 = vpack.c.b16 %v4331, %v4329
      %v4450 = vpack.c.b16 %v4334, %v4332
      %v4451 = vpack.c.b16 %v4335, %v4333
      %v4452 = vpack.c.b16 %v4338, %v4336
      %v4453 = vpack.c.b16 %v4339, %v4337
      %v4454 = vpack.c.b16 %v4342, %v4340
      %v4455 = vpack.c.b16 %v4343, %v4341
      %4568 = vmatprep.subr.bf16.mxu0 %v4345
      %4569 = vmatpush1.bf16.msra.mxu0 %v4344
      %4570 = vmatprep.subr.bf16.mxu0 %v4347
      %4571 = vmatpush1.bf16.msra.mxu0 %v4346
      %4572 = vmatprep.subr.bf16.mxu0 %v4349
      %4573 = vmatpush1.bf16.msra.mxu0 %v4348
      %4574 = vmatprep.subr.bf16.mxu0 %v4351
      %4575 = vmatpush1.bf16.msra.mxu0 %v4350
      %4576 = vmatprep.subr.bf16.mxu0 %v4353
      %4577 = vmatpush1.bf16.msra.mxu0 %v4352
      %4578 = vmatprep.subr.bf16.mxu0 %v4355
      %4579 = vmatpush1.bf16.msra.mxu0 %v4354
      %4580 = vmatprep.subr.bf16.mxu0 %v4357
      %4581 = vmatpush1.bf16.msra.mxu0 %v4356
      %4582 = vmatprep.subr.bf16.mxu0 %v4359
      %4583 = vmatpush1.bf16.msra.mxu0 %v4358
      %4584 = vmatprep.subr.bf16.mxu0 %v4361
      %4585 = vmatpush1.bf16.msra.mxu0 %v4360
      %4586 = vmatprep.subr.bf16.mxu0 %v4363
      %4587 = vmatpush1.bf16.msra.mxu0 %v4362
      %4588 = vmatprep.subr.bf16.mxu0 %v4365
      %4589 = vmatpush1.bf16.msra.mxu0 %v4364
      %4590 = vmatprep.subr.bf16.mxu0 %v4367
      %4591 = vmatpush1.bf16.msra.mxu0 %v4366
      %4592 = vmatprep.subr.bf16.mxu0 %v4369
      %4593 = vmatpush1.bf16.msra.mxu0 %v4368
      %4594 = vmatprep.subr.bf16.mxu0 %v4371
      %4595 = vmatpush1.bf16.msra.mxu0 %v4370
      %4596 = vmatprep.subr.bf16.mxu0 %v4373
      %4597 = vmatpush1.bf16.msra.mxu0 %v4372
      %4598 = vmatprep.subr.bf16.mxu0 %v4375
      %4599 = vmatpush1.bf16.msra.mxu0 %v4374
      %4600 = vmatprep.mubr.bf16.mxu0 %v3653
      %4601 = vmatmul.mubr.bf16.gmra.mrb[0].mxu0 %v3607
      %v4602 = vpop.f32.mrb[0].mxu0
      %v4603 = vadd.f32 %v4001, %v4602
      %v4604 = vpop.f32.mrb[0].mxu0
      %v4605 = vadd.f32 %v4005, %v4604
      %v4606 = vpop.f32.mrb[0].mxu0
      %v4607 = vpop.f32.mrb[0].mxu0
      %4608 = vdwg.mxu0
      %4609 = vmatprep.subr.bf16.mxu0 %v4377
      %4610 = vmatpush1.bf16.msra.mxu0 %v4376
      %4611 = vmatprep.subr.bf16.mxu0 %v4379
      %4612 = vmatpush1.bf16.msra.mxu0 %v4378
      %4613 = vmatprep.subr.bf16.mxu0 %v4381
      %4614 = vmatpush1.bf16.msra.mxu0 %v4380
      %4615 = vmatprep.subr.bf16.mxu0 %v4383
      %4616 = vmatpush1.bf16.msra.mxu0 %v4382
      %4617 = vmatprep.subr.bf16.mxu0 %v4385
      %4618 = vmatpush1.bf16.msra.mxu0 %v4384
      %4619 = vmatprep.subr.bf16.mxu0 %v4387
      %4620 = vmatpush1.bf16.msra.mxu0 %v4386
      %4621 = vmatprep.subr.bf16.mxu0 %v4389
      %4622 = vmatpush1.bf16.msra.mxu0 %v4388
      %4623 = vmatprep.subr.bf16.mxu0 %v4391
      %4624 = vmatpush1.bf16.msra.mxu0 %v4390
      %4625 = vmatprep.subr.bf16.mxu0 %v4393
      %4626 = vmatpush1.bf16.msra.mxu0 %v4392
      %4627 = vmatprep.subr.bf16.mxu0 %v4395
      %4628 = vmatpush1.bf16.msra.mxu0 %v4394
      %4629 = vmatprep.subr.bf16.mxu0 %v4397
      %4630 = vmatpush1.bf16.msra.mxu0 %v4396
      %4631 = vmatprep.subr.bf16.mxu0 %v4399
      %4632 = vmatpush1.bf16.msra.mxu0 %v4398
      %4633 = vmatprep.subr.bf16.mxu0 %v4401
      %4634 = vmatpush1.bf16.msra.mxu0 %v4400
      %4635 = vmatprep.subr.bf16.mxu0 %v4403
      %4636 = vmatpush1.bf16.msra.mxu0 %v4402
      %4637 = vmatprep.subr.bf16.mxu0 %v4405
      %4638 = vmatpush1.bf16.msra.mxu0 %v4404
      %4639 = vmatprep.subr.bf16.mxu0 %v4407
      %4640 = vmatpush1.bf16.msra.mxu0 %v4406
      %4641 = vmatprep.mubr.bf16.mxu0 %v3745
      %4642 = vmatmul.mubr.bf16.gmra.mrb[0].mxu0 %v3699
      %v4643 = vpop.f32.mrb[0].mxu0
      %v4644 = vadd.f32 %v4603, %v4643
      %v4645 = vpop.f32.mrb[0].mxu0
      %v4646 = vadd.f32 %v4605, %v4645
      %v4647 = vpop.f32.mrb[0].mxu0
      %v4648 = vpop.f32.mrb[0].mxu0
      %4649 = vdwg.mxu0
      %4650 = vmatprep.subr.bf16.mxu0 %v4409
      %4651 = vmatpush1.bf16.msra.mxu0 %v4408
      %4652 = vmatprep.subr.bf16.mxu0 %v4411
      %4653 = vmatpush1.bf16.msra.mxu0 %v4410
      %4654 = vmatprep.subr.bf16.mxu0 %v4413
      %4655 = vmatpush1.bf16.msra.mxu0 %v4412
      %4656 = vmatprep.subr.bf16.mxu0 %v4415
      %4657 = vmatpush1.bf16.msra.mxu0 %v4414
      %4658 = vmatprep.subr.bf16.mxu0 %v4417
      %4659 = vmatpush1.bf16.msra.mxu0 %v4416
      %4660 = vmatprep.subr.bf16.mxu0 %v4419
      %4661 = vmatpush1.bf16.msra.mxu0 %v4418
      %4662 = vmatprep.subr.bf16.mxu0 %v4421
      %4663 = vmatpush1.bf16.msra.mxu0 %v4420
      %4664 = vmatprep.subr.bf16.mxu0 %v4423
      %4665 = vmatpush1.bf16.msra.mxu0 %v4422
      %4666 = vmatprep.subr.bf16.mxu0 %v4425
      %4667 = vmatpush1.bf16.msra.mxu0 %v4424
      %4668 = vmatprep.subr.bf16.mxu0 %v4427
      %4669 = vmatpush1.bf16.msra.mxu0 %v4426
      %4670 = vmatprep.subr.bf16.mxu0 %v4429
      %4671 = vmatpush1.bf16.msra.mxu0 %v4428
      %4672 = vmatprep.subr.bf16.mxu0 %v4431
      %4673 = vmatpush1.bf16.msra.mxu0 %v4430
      %4674 = vmatprep.subr.bf16.mxu0 %v4433
      %4675 = vmatpush1.bf16.msra.mxu0 %v4432
      %4676 = vmatprep.subr.bf16.mxu0 %v4435
      %4677 = vmatpush1.bf16.msra.mxu0 %v4434
      %4678 = vmatprep.subr.bf16.mxu0 %v4437
      %4679 = vmatpush1.bf16.msra.mxu0 %v4436
      %4680 = vmatprep.subr.bf16.mxu0 %v4439
      %4681 = vmatpush1.bf16.msra.mxu0 %v4438
      %4682 = vmatprep.mubr.bf16.mxu0 %v3837
      %4683 = vmatmul.mubr.bf16.gmra.mrb[0].mxu0 %v3791
      %v4684 = vpop.f32.mrb[0].mxu0
      %v4685 = vadd.f32 %v4644, %v4684
      %v4686 = vpop.f32.mrb[0].mxu0
      %v4687 = vadd.f32 %v4646, %v4686
      %v4688 = vpop.f32.mrb[0].mxu0
      %v4689 = vpop.f32.mrb[0].mxu0
      %4690 = vdwg.mxu0
      %4691 = vmatprep.subr.bf16.mxu0 %v4441
      %4692 = vmatpush1.bf16.msra.mxu0 %v4440
      %4693 = vmatprep.subr.bf16.mxu0 %v4443
      %4694 = vmatpush1.bf16.msra.mxu0 %v4442
      %4695 = vmatprep.subr.bf16.mxu0 %v4445
      %4696 = vmatpush1.bf16.msra.mxu0 %v4444
      %4697 = vmatprep.subr.bf16.mxu0 %v4447
      %4698 = vmatpush1.bf16.msra.mxu0 %v4446
      %4699 = vmatprep.subr.bf16.mxu0 %v4449
      %4700 = vmatpush1.bf16.msra.mxu0 %v4448
      %4701 = vmatprep.subr.bf16.mxu0 %v4451
      %4702 = vmatpush1.bf16.msra.mxu0 %v4450
      %4703 = vmatprep.subr.bf16.mxu0 %v4453
      %4704 = vmatpush1.bf16.msra.mxu0 %v4452
      %4705 = vmatprep.subr.bf16.mxu0 %v4455
      %4706 = vmatpush1.bf16.msra.mxu0 %v4454
      %4707 = vmatprep.subr.bf16.mxu0 0
      %4708 = vmatpush1.bf16.msra.mxu0 0
      %4709 = vmatprep.subr.bf16.mxu0 0
      %4710 = vmatpush1.bf16.msra.mxu0 0
      %4711 = vmatprep.subr.bf16.mxu0 0
      %4712 = vmatpush1.bf16.msra.mxu0 0
      %4713 = vmatprep.subr.bf16.mxu0 0
      %4714 = vmatpush1.bf16.msra.mxu0 0
      %4715 = vmatprep.subr.bf16.mxu0 0
      %4716 = vmatpush1.bf16.msra.mxu0 0
      %4717 = vmatprep.subr.bf16.mxu0 0
      %4718 = vmatpush1.bf16.msra.mxu0 0
      %4719 = vmatprep.subr.bf16.mxu0 0
      %4720 = vmatpush1.bf16.msra.mxu0 0
      %4721 = vmatprep.subr.bf16.mxu0 0
      %4722 = vmatpush1.bf16.msra.mxu0 0
      %4723 = vmatprep.mubr.bf16.mxu0 0
      %4724 = vmatmul.mubr.bf16.gmra.mrb[0].mxu0 %v3883
      %v4725 = vpop.f32.mrb[0].mxu0
      %v4726 = vadd.f32 %v4685, %v4725
      %v4727 = vpop.f32.mrb[0].mxu0
      %v4728 = vadd.f32 %v4687, %v4727
      %v4729 = vpop.f32.mrb[0].mxu0
      %v4730 = vpop.f32.mrb[0].mxu0
      %4731 = vdwg.mxu0
      %v4732 = vmax.f32 %v4726, 0.0
      %v4733 = vmax.f32 %v4728, 0.0
      %v4734 = vpack.c.bf16 %v4732, %v4732
      %v4735 = vpack.c.bf16 %v4733, %v4733
      %v4736 = vld [vmem:[%s13] sm:$0xf]
      %v4737 = vld [vmem:[%s13 + $0x4] sm:$0xf]
      %v4740 = vunpack.c.l.b16 %v4736
      %v4741 = vunpack.c.l.b16 %v4737
      %v4742 = vpack.c.b16 %v4741, %v4740
      %v4744 = vsel %vm2034, %v4742, 0
      %v4747 = vsel %vm2038, %v4734, 0
      %v4750 = vsel %vm2038, %v4735, 0
      %4752 = vmatprep.subr.bf16.mxu0 %v4750
      %4753 = vmatpush1.bf16.msra.mxu0 %v4747
      %4754 = vmatprep.subr.bf16.mxu0 0
      %4755 = vmatpush1.bf16.msra.mxu0 0
      %4756 = vmatprep.subr.bf16.mxu0 0
      %4757 = vmatpush1.bf16.msra.mxu0 0
      %4758 = vmatprep.subr.bf16.mxu0 0
      %4759 = vmatpush1.bf16.msra.mxu0 0
      %4760 = vmatprep.subr.bf16.mxu0 0
      %4761 = vmatpush1.bf16.msra.mxu0 0
      %4762 = vmatprep.subr.bf16.mxu0 0
      %4763 = vmatpush1.bf16.msra.mxu0 0
      %4764 = vmatprep.subr.bf16.mxu0 0
      %4765 = vmatpush1.bf16.msra.mxu0 0
      %4766 = vmatprep.subr.bf16.mxu0 0
      %4767 = vmatpush1.bf16.msra.mxu0 0
      %4768 = vmatprep.subr.bf16.mxu0 0
      %4769 = vmatpush1.bf16.msra.mxu0 0
      %4770 = vmatprep.subr.bf16.mxu0 0
      %4771 = vmatpush1.bf16.msra.mxu0 0
      %4772 = vmatprep.subr.bf16.mxu0 0
      %4773 = vmatpush1.bf16.msra.mxu0 0
      %4774 = vmatprep.subr.bf16.mxu0 0
      %4775 = vmatpush1.bf16.msra.mxu0 0
      %4776 = vmatprep.subr.bf16.mxu0 0
      %4777 = vmatpush1.bf16.msra.mxu0 0
      %4778 = vmatprep.subr.bf16.mxu0 0
      %4779 = vmatpush1.bf16.msra.mxu0 0
      %4780 = vmatprep.subr.bf16.mxu0 0
      %4781 = vmatpush1.bf16.msra.mxu0 0
      %4782 = vmatprep.subr.bf16.mxu0 0
      %4783 = vmatpush1.bf16.msra.mxu0 0
      %4784 = vmatprep.mubr.bf16.mxu0 0
      %4785 = vmatmul.mubr.bf16.gmra.mrb[0].mxu0 %v4744
      %v4786 = vpop.f32.mrb[0].mxu0
      %v4787 = vadd.f32 0.0, %v4786
      %v4788 = vpop.f32.mrb[0].mxu0
      %v4789 = vadd.f32 0.0, %v4788
      %v4790 = vpop.f32.mrb[0].mxu0
      %v4791 = vadd.f32 0.0, %v4790
      %v4792 = vpop.f32.mrb[0].mxu0
      %v4793 = vadd.f32 0.0, %v4792
      %4794 = vdwg.mxu0
      %v4795 = vpack.c.bf16 %v4791, %v4787
      %v4796 = vpack.c.bf16 %v4793, %v4789
      %s4797 = scalar_lea.vmem %s13, 8
      %v4798 = vld [vmem:[%s4797] sm:$0xf]
      %v4799 = vld [vmem:[%s4797 + $0x4] sm:$0xf]
      %v4802 = vunpack.c.l.b16 %v4798
      %v4803 = vunpack.c.l.b16 %v4799
      %v4804 = vpack.c.b16 %v4803, %v4802
      %v4806 = vsel %vm2034, %v4804, 0
      %4808 = vmatprep.subr.bf16.mxu0 %v4750
      %4809 = vmatpush1.bf16.msra.mxu0 %v4747
      %4810 = vmatprep.subr.bf16.mxu0 0
      %4811 = vmatpush1.bf16.msra.mxu0 0
      %4812 = vmatprep.subr.bf16.mxu0 0
      %4813 = vmatpush1.bf16.msra.mxu0 0
      %4814 = vmatprep.subr.bf16.mxu0 0
      %4815 = vmatpush1.bf16.msra.mxu0 0
      %4816 = vmatprep.subr.bf16.mxu0 0
      %4817 = vmatpush1.bf16.msra.mxu0 0
      %4818 = vmatprep.subr.bf16.mxu0 0
      %4819 = vmatpush1.bf16.msra.mxu0 0
      %4820 = vmatprep.subr.bf16.mxu0 0
      %4821 = vmatpush1.bf16.msra.mxu0 0
      %4822 = vmatprep.subr.bf16.mxu0 0
      %4823 = vmatpush1.bf16.msra.mxu0 0
      %4824 = vmatprep.subr.bf16.mxu0 0
      %4825 = vmatpush1.bf16.msra.mxu0 0
      %4826 = vmatprep.subr.bf16.mxu0 0
      %4827 = vmatpush1.bf16.msra.mxu0 0
      %4828 = vmatprep.subr.bf16.mxu0 0
      %4829 = vmatpush1.bf16.msra.mxu0 0
      %4830 = vmatprep.subr.bf16.mxu0 0
      %4831 = vmatpush1.bf16.msra.mxu0 0
      %4832 = vmatprep.subr.bf16.mxu0 0
      %4833 = vmatpush1.bf16.msra.mxu0 0
      %4834 = vmatprep.subr.bf16.mxu0 0
      %4835 = vmatpush1.bf16.msra.mxu0 0
      %4836 = vmatprep.subr.bf16.mxu0 0
      %4837 = vmatpush1.bf16.msra.mxu0 0
      %4838 = vmatprep.subr.bf16.mxu0 0
      %4839 = vmatpush1.bf16.msra.mxu0 0
      %4840 = vmatprep.mubr.bf16.mxu0 0
      %4841 = vmatmul.mubr.bf16.gmra.mrb[0].mxu0 %v4806
      %v4842 = vpop.f32.mrb[0].mxu0
      %v4843 = vadd.f32 0.0, %v4842
      %v4844 = vpop.f32.mrb[0].mxu0
      %v4845 = vadd.f32 0.0, %v4844
      %v4846 = vpop.f32.mrb[0].mxu0
      %v4847 = vadd.f32 0.0, %v4846
      %v4848 = vpop.f32.mrb[0].mxu0
      %v4849 = vadd.f32 0.0, %v4848
      %4850 = vdwg.mxu0
      %v4851 = vpack.c.bf16 %v4847, %v4843
      %v4852 = vpack.c.bf16 %v4849, %v4845
      %s4853 = scalar_lea.vmem %s13, 16
      %v4854 = vld [vmem:[%s4853] sm:$0xf]
      %v4855 = vld [vmem:[%s4853 + $0x4] sm:$0xf]
      %v4858 = vunpack.c.l.b16 %v4854
      %v4859 = vunpack.c.l.b16 %v4855
      %v4860 = vpack.c.b16 %v4859, %v4858
      %v4862 = vsel %vm2034, %v4860, 0
      %4864 = vmatprep.subr.bf16.mxu0 %v4750
      %4865 = vmatpush1.bf16.msra.mxu0 %v4747
      %4866 = vmatprep.subr.bf16.mxu0 0
      %4867 = vmatpush1.bf16.msra.mxu0 0
      %4868 = vmatprep.subr.bf16.mxu0 0
      %4869 = vmatpush1.bf16.msra.mxu0 0
      %4870 = vmatprep.subr.bf16.mxu0 0
      %4871 = vmatpush1.bf16.msra.mxu0 0
      %4872 = vmatprep.subr.bf16.mxu0 0
      %4873 = vmatpush1.bf16.msra.mxu0 0
      %4874 = vmatprep.subr.bf16.mxu0 0
      %4875 = vmatpush1.bf16.msra.mxu0 0
      %4876 = vmatprep.subr.bf16.mxu0 0
      %4877 = vmatpush1.bf16.msra.mxu0 0
      %4878 = vmatprep.subr.bf16.mxu0 0
      %4879 = vmatpush1.bf16.msra.mxu0 0
      %4880 = vmatprep.subr.bf16.mxu0 0
      %4881 = vmatpush1.bf16.msra.mxu0 0
      %4882 = vmatprep.subr.bf16.mxu0 0
      %4883 = vmatpush1.bf16.msra.mxu0 0
      %4884 = vmatprep.subr.bf16.mxu0 0
      %4885 = vmatpush1.bf16.msra.mxu0 0
      %4886 = vmatprep.subr.bf16.mxu0 0
      %4887 = vmatpush1.bf16.msra.mxu0 0
      %4888 = vmatprep.subr.bf16.mxu0 0
      %4889 = vmatpush1.bf16.msra.mxu0 0
      %4890 = vmatprep.subr.bf16.mxu0 0
      %4891 = vmatpush1.bf16.msra.mxu0 0
      %4892 = vmatprep.subr.bf16.mxu0 0
      %4893 = vmatpush1.bf16.msra.mxu0 0
      %4894 = vmatprep.subr.bf16.mxu0 0
      %4895 = vmatpush1.bf16.msra.mxu0 0
      %4896 = vmatprep.mubr.bf16.mxu0 0
      %4897 = vmatmul.mubr.bf16.gmra.mrb[0].mxu0 %v4862
      %v4898 = vpop.f32.mrb[0].mxu0
      %v4899 = vadd.f32 0.0, %v4898
      %v4900 = vpop.f32.mrb[0].mxu0
      %v4901 = vadd.f32 0.0, %v4900
      %v4902 = vpop.f32.mrb[0].mxu0
      %v4903 = vadd.f32 0.0, %v4902
      %v4904 = vpop.f32.mrb[0].mxu0
      %v4905 = vadd.f32 0.0, %v4904
      %4906 = vdwg.mxu0
      %v4907 = vpack.c.bf16 %v4903, %v4899
      %v4908 = vpack.c.bf16 %v4905, %v4901
      %v4909 = vld [vmem:[%s14] sm:$0xff]
      %v4910 = vld [vmem:[%s14 + $0x8] sm:$0xff]
      %v4911 = vld [vmem:[%s14 + $0x10] sm:$0xff]
      %v4912 = vld [vmem:[%s14 + $0x18] sm:$0xff]
      %v4913 = vld [vmem:[%s14 + $0x20] sm:$0xff]
      %v4914 = vld [vmem:[%s14 + $0x28] sm:$0xff]
      %v4915 = vld [vmem:[%s14 + $0x30] sm:$0xff]
      %v4916 = vld [vmem:[%s14 + $0x38] sm:$0xff]
      %v4917 = vld [vmem:[%s14 + $0x40] sm:$0xff]
      %v4918 = vld [vmem:[%s14 + $0x48] sm:$0xff]
      %v4919 = vld [vmem:[%s14 + $0x50] sm:$0xff]
      %v4920 = vld [vmem:[%s14 + $0x58] sm:$0xff]
      %v4921 = vld [vmem:[%s14 + $0x60] sm:$0xff]
      %v4922 = vld [vmem:[%s14 + $0x68] sm:$0xff]
      %v4923 = vld [vmem:[%s14 + $0x70] sm:$0xff]
      %v4924 = vld [vmem:[%s14 + $0x78] sm:$0xff]
      %v4925 = vld [vmem:[%s14 + $0x80] sm:$0xff]
      %v4926 = vld [vmem:[%s14 + $0x88] sm:$0xff]
      %v4927 = vld [vmem:[%s14 + $0x90] sm:$0xff]
      %v4928 = vld [vmem:[%s14 + $0x98] sm:$0xff]
      %v4929 = vld [vmem:[%s14 + $0xa0] sm:$0xff]
      %v4930 = vld [vmem:[%s14 + $0xa8] sm:$0xff]
      %v4931 = vld [vmem:[%s14 + $0xb0] sm:$0xff]
      %v4932 = vld [vmem:[%s14 + $0xb8] sm:$0xff]
      %v4933 = vld [vmem:[%s14 + $0xc0] sm:$0xff]
      %v4934 = vld [vmem:[%s14 + $0xc8] sm:$0xff]
      %v4935 = vld [vmem:[%s14 + $0xd0] sm:$0xff]
      %v4936 = vld [vmem:[%s14 + $0xd8] sm:$0xff]
      %v4937 = vld [vmem:[%s14 + $0xe0] sm:$0xff]
      %v4938 = vld [vmem:[%s14 + $0xe8] sm:$0xff]
      %v4939 = vld [vmem:[%s14 + $0xf0] sm:$0xff]
      %v4940 = vld [vmem:[%s14 + $0xf8] sm:$0xff]
      %v4941 = vld [vmem:[%s14 + $0x100] sm:$0xff]
      %v4942 = vld [vmem:[%s14 + $0x108] sm:$0xff]
      %v4943 = vld [vmem:[%s14 + $0x110] sm:$0xff]
      %v4944 = vld [vmem:[%s14 + $0x118] sm:$0xff]
      %v4945 = vld [vmem:[%s14 + $0x120] sm:$0xff]
      %v4946 = vld [vmem:[%s14 + $0x128] sm:$0xff]
      %v4947 = vld [vmem:[%s14 + $0x130] sm:$0xff]
      %v4948 = vld [vmem:[%s14 + $0x138] sm:$0xff]
      %v4949 = vld [vmem:[%s14 + $0x140] sm:$0xff]
      %v4950 = vld [vmem:[%s14 + $0x148] sm:$0xff]
      %v4951 = vld [vmem:[%s14 + $0x150] sm:$0xff]
      %v4952 = vld [vmem:[%s14 + $0x158] sm:$0xff]
      %v4953 = vld [vmem:[%s14 + $0x160] sm:$0xff]
      %v4954 = vld [vmem:[%s14 + $0x168] sm:$0xff]
      %v4955 = vld [vmem:[%s14 + $0x170] sm:$0xff]
      %v4956 = vld [vmem:[%s14 + $0x178] sm:$0xff]
      %v4957 = vld [vmem:[%s14 + $0x180] sm:$0xff]
      %v4958 = vld [vmem:[%s14 + $0x188] sm:$0xff]
      %v4959 = vld [vmem:[%s14 + $0x190] sm:$0xff]
      %v4960 = vld [vmem:[%s14 + $0x198] sm:$0xff]
      %v4961 = vld [vmem:[%s14 + $0x1a0] sm:$0xff]
      %v4962 = vld [vmem:[%s14 + $0x1a8] sm:$0xff]
      %v4963 = vld [vmem:[%s14 + $0x1b0] sm:$0xff]
      %v4964 = vld [vmem:[%s14 + $0x1b8] sm:$0xff]
      %v4965 = vld [vmem:[%s14 + $0x1c0] sm:$0xff]
      %v4966 = vld [vmem:[%s14 + $0x1c8] sm:$0xff]
      %v4967 = vld [vmem:[%s14 + $0x1d0] sm:$0xff]
      %v4968 = vld [vmem:[%s14 + $0x1d8] sm:$0xff]
      %v4969 = vld [vmem:[%s14 + $0x1e0] sm:$0xff]
      %v4970 = vld [vmem:[%s14 + $0x1e8] sm:$0xff]
      %v4971 = vld [vmem:[%s14 + $0x1f0] sm:$0xff]
      %v4972 = vld [vmem:[%s14 + $0x1f8] sm:$0xff]
      %v4973 = vld [vmem:[%s14 + $0x200] sm:$0xff]
      %v4974 = vld [vmem:[%s14 + $0x208] sm:$0xff]
      %v4975 = vld [vmem:[%s14 + $0x210] sm:$0xff]
      %v4976 = vld [vmem:[%s14 + $0x218] sm:$0xff]
      %v4977 = vld [vmem:[%s14 + $0x220] sm:$0xff]
      %v4978 = vld [vmem:[%s14 + $0x228] sm:$0xff]
      %v4979 = vld [vmem:[%s14 + $0x230] sm:$0xff]
      %v4980 = vld [vmem:[%s14 + $0x238] sm:$0xff]
      %v4981 = vld [vmem:[%s14 + $0x240] sm:$0xff]
      %v4982 = vld [vmem:[%s14 + $0x248] sm:$0xff]
      %v4983 = vld [vmem:[%s14 + $0x250] sm:$0xff]
      %v4984 = vld [vmem:[%s14 + $0x258] sm:$0xff]
      %v4985 = vld [vmem:[%s14 + $0x260] sm:$0xff]
      %v4986 = vld [vmem:[%s14 + $0x268] sm:$0xff]
      %v4987 = vld [vmem:[%s14 + $0x270] sm:$0xff]
      %v4988 = vld [vmem:[%s14 + $0x278] sm:$0xff]
      %v4989 = vld [vmem:[%s14 + $0x280] sm:$0xff]
      %v4990 = vld [vmem:[%s14 + $0x288] sm:$0xff]
      %v4991 = vld [vmem:[%s14 + $0x290] sm:$0xff]
      %v4992 = vld [vmem:[%s14 + $0x298] sm:$0xff]
      %v4993 = vld [vmem:[%s14 + $0x2a0] sm:$0xff]
      %v4994 = vld [vmem:[%s14 + $0x2a8] sm:$0xff]
      %v4995 = vld [vmem:[%s14 + $0x2b0] sm:$0xff]
      %v4996 = vld [vmem:[%s14 + $0x2b8] sm:$0xff]
      %v4997 = vld [vmem:[%s14 + $0x2c0] sm:$0xff]
      %v4998 = vld [vmem:[%s14 + $0x2c8] sm:$0xff]
      %v4999 = vld [vmem:[%s14 + $0x2d0] sm:$0xff]
      %v5000 = vld [vmem:[%s14 + $0x2d8] sm:$0xff]
      %v5001 = vld [vmem:[%s14 + $0x2e0] sm:$0xff]
      %v5002 = vld [vmem:[%s14 + $0x2e8] sm:$0xff]
      %v5003 = vld [vmem:[%s14 + $0x2f0] sm:$0xff]
      %v5004 = vld [vmem:[%s14 + $0x2f8] sm:$0xff]
      %v5005 = vld [vmem:[%s15] sm:$0x3]
      %v5007 = vlaneseq
      %v5008 = vshrl.u32 %v5007, 7
      %v5009 = vsub.s32 0, %v5008
      %v5010 = vrot.slane %v5005, %v5009
      %v5011 = vlaneseq
      %v5012 = vshrl.u32 %v5011, 7
      %v5013 = vsub.s32 1, %v5012
      %v5014 = vrot.slane %v5005, %v5013
      %v5113 = vunpack.c.l.b16 %v4909
      %v5114 = vunpack.c.h.b16 %v4909
      %v5115 = vunpack.c.l.b16 %v4910
      %v5116 = vunpack.c.h.b16 %v4910
      %v5117 = vunpack.c.l.b16 %v4911
      %v5118 = vunpack.c.h.b16 %v4911
      %v5119 = vunpack.c.l.b16 %v4912
      %v5120 = vunpack.c.h.b16 %v4912
      %v5121 = vunpack.c.l.b16 %v4913
      %v5122 = vunpack.c.h.b16 %v4913
      %v5123 = vunpack.c.l.b16 %v4914
      %v5124 = vunpack.c.h.b16 %v4914
      %v5125 = vunpack.c.l.b16 %v4915
      %v5126 = vunpack.c.h.b16 %v4915
      %v5127 = vunpack.c.l.b16 %v4916
      %v5128 = vunpack.c.h.b16 %v4916
      %v5129 = vunpack.c.l.b16 %v4917
      %v5130 = vunpack.c.h.b16 %v4917
      %v5131 = vunpack.c.l.b16 %v4918
      %v5132 = vunpack.c.h.b16 %v4918
      %v5133 = vunpack.c.l.b16 %v4919
      %v5134 = vunpack.c.h.b16 %v4919
      %v5135 = vunpack.c.l.b16 %v4920
      %v5136 = vunpack.c.h.b16 %v4920
      %v5137 = vunpack.c.l.b16 %v4921
      %v5138 = vunpack.c.h.b16 %v4921
      %v5139 = vunpack.c.l.b16 %v4922
      %v5140 = vunpack.c.h.b16 %v4922
      %v5141 = vunpack.c.l.b16 %v4923
      %v5142 = vunpack.c.h.b16 %v4923
      %v5143 = vunpack.c.l.b16 %v4924
      %v5144 = vunpack.c.h.b16 %v4924
      %v5145 = vunpack.c.l.b16 %v4925
      %v5146 = vunpack.c.h.b16 %v4925
      %v5147 = vunpack.c.l.b16 %v4926
      %v5148 = vunpack.c.h.b16 %v4926
      %v5149 = vunpack.c.l.b16 %v4927
      %v5150 = vunpack.c.h.b16 %v4927
      %v5151 = vunpack.c.l.b16 %v4928
      %v5152 = vunpack.c.h.b16 %v4928
      %v5153 = vunpack.c.l.b16 %v4929
      %v5154 = vunpack.c.h.b16 %v4929
      %v5155 = vunpack.c.l.b16 %v4930
      %v5156 = vunpack.c.h.b16 %v4930
      %v5157 = vunpack.c.l.b16 %v4931
      %v5158 = vunpack.c.h.b16 %v4931
      %v5159 = vunpack.c.l.b16 %v4932
      %v5160 = vunpack.c.h.b16 %v4932
      %v5161 = vunpack.c.l.b16 %v4933
      %v5162 = vunpack.c.h.b16 %v4933
      %v5163 = vunpack.c.l.b16 %v4934
      %v5164 = vunpack.c.h.b16 %v4934
      %v5165 = vunpack.c.l.b16 %v4935
      %v5166 = vunpack.c.h.b16 %v4935
      %v5167 = vunpack.c.l.b16 %v4936
      %v5168 = vunpack.c.h.b16 %v4936
      %v5169 = vunpack.c.l.b16 %v4937
      %v5170 = vunpack.c.h.b16 %v4937
      %v5171 = vunpack.c.l.b16 %v4938
      %v5172 = vunpack.c.h.b16 %v4938
      %v5173 = vunpack.c.l.b16 %v4939
      %v5174 = vunpack.c.h.b16 %v4939
      %v5175 = vunpack.c.l.b16 %v4940
      %v5176 = vunpack.c.h.b16 %v4940
      %v5177 = vunpack.c.l.b16 %v4941
      %v5178 = vunpack.c.h.b16 %v4941
      %v5179 = vunpack.c.l.b16 %v4942
      %v5180 = vunpack.c.h.b16 %v4942
      %v5181 = vunpack.c.l.b16 %v4943
      %v5182 = vunpack.c.h.b16 %v4943
      %v5183 = vunpack.c.l.b16 %v4944
      %v5184 = vunpack.c.h.b16 %v4944
      %v5185 = vunpack.c.l.b16 %v4945
      %v5186 = vunpack.c.h.b16 %v4945
      %v5187 = vunpack.c.l.b16 %v4946
      %v5188 = vunpack.c.h.b16 %v4946
      %v5189 = vunpack.c.l.b16 %v4947
      %v5190 = vunpack.c.h.b16 %v4947
      %v5191 = vunpack.c.l.b16 %v4948
      %v5192 = vunpack.c.h.b16 %v4948
      %v5193 = vunpack.c.l.b16 %v4949
      %v5194 = vunpack.c.h.b16 %v4949
      %v5195 = vunpack.c.l.b16 %v4950
      %v5196 = vunpack.c.h.b16 %v4950
      %v5197 = vunpack.c.l.b16 %v4951
      %v5198 = vunpack.c.h.b16 %v4951
      %v5199 = vunpack.c.l.b16 %v4952
      %v5200 = vunpack.c.h.b16 %v4952
      %v5201 = vunpack.c.l.b16 %v4953
      %v5202 = vunpack.c.h.b16 %v4953
      %v5203 = vunpack.c.l.b16 %v4954
      %v5204 = vunpack.c.h.b16 %v4954
      %v5205 = vunpack.c.l.b16 %v4955
      %v5206 = vunpack.c.h.b16 %v4955
      %v5207 = vunpack.c.l.b16 %v4956
      %v5208 = vunpack.c.h.b16 %v4956
      %v5209 = vunpack.c.l.b16 %v4957
      %v5210 = vunpack.c.h.b16 %v4957
      %v5211 = vunpack.c.l.b16 %v4958
      %v5212 = vunpack.c.h.b16 %v4958
      %v5213 = vunpack.c.l.b16 %v4959
      %v5214 = vunpack.c.h.b16 %v4959
      %v5215 = vunpack.c.l.b16 %v4960
      %v5216 = vunpack.c.h.b16 %v4960
      %v5217 = vunpack.c.l.b16 %v4961
      %v5218 = vunpack.c.h.b16 %v4961
      %v5219 = vunpack.c.l.b16 %v4962
      %v5220 = vunpack.c.h.b16 %v4962
      %v5221 = vunpack.c.l.b16 %v4963
      %v5222 = vunpack.c.h.b16 %v4963
      %v5223 = vunpack.c.l.b16 %v4964
      %v5224 = vunpack.c.h.b16 %v4964
      %v5225 = vunpack.c.l.b16 %v4965
      %v5226 = vunpack.c.h.b16 %v4965
      %v5227 = vunpack.c.l.b16 %v4966
      %v5228 = vunpack.c.h.b16 %v4966
      %v5229 = vunpack.c.l.b16 %v4967
      %v5230 = vunpack.c.h.b16 %v4967
      %v5231 = vunpack.c.l.b16 %v4968
      %v5232 = vunpack.c.h.b16 %v4968
      %v5233 = vunpack.c.l.b16 %v4969
      %v5234 = vunpack.c.h.b16 %v4969
      %v5235 = vunpack.c.l.b16 %v4970
      %v5236 = vunpack.c.h.b16 %v4970
      %v5237 = vunpack.c.l.b16 %v4971
      %v5238 = vunpack.c.h.b16 %v4971
      %v5239 = vunpack.c.l.b16 %v4972
      %v5240 = vunpack.c.h.b16 %v4972
      %v5241 = vunpack.c.l.b16 %v4973
      %v5242 = vunpack.c.h.b16 %v4973
      %v5243 = vunpack.c.l.b16 %v4974
      %v5244 = vunpack.c.h.b16 %v4974
      %v5245 = vunpack.c.l.b16 %v4975
      %v5246 = vunpack.c.h.b16 %v4975
      %v5247 = vunpack.c.l.b16 %v4976
      %v5248 = vunpack.c.h.b16 %v4976
      %v5249 = vunpack.c.l.b16 %v4977
      %v5250 = vunpack.c.h.b16 %v4977
      %v5251 = vunpack.c.l.b16 %v4978
      %v5252 = vunpack.c.h.b16 %v4978
      %v5253 = vunpack.c.l.b16 %v4979
      %v5254 = vunpack.c.h.b16 %v4979
      %v5255 = vunpack.c.l.b16 %v4980
      %v5256 = vunpack.c.h.b16 %v4980
      %v5257 = vunpack.c.l.b16 %v4981
      %v5258 = vunpack.c.h.b16 %v4981
      %v5259 = vunpack.c.l.b16 %v4982
      %v5260 = vunpack.c.h.b16 %v4982
      %v5261 = vunpack.c.l.b16 %v4983
      %v5262 = vunpack.c.h.b16 %v4983
      %v5263 = vunpack.c.l.b16 %v4984
      %v5264 = vunpack.c.h.b16 %v4984
      %v5265 = vunpack.c.l.b16 %v4985
      %v5266 = vunpack.c.h.b16 %v4985
      %v5267 = vunpack.c.l.b16 %v4986
      %v5268 = vunpack.c.h.b16 %v4986
      %v5269 = vunpack.c.l.b16 %v4987
      %v5270 = vunpack.c.h.b16 %v4987
      %v5271 = vunpack.c.l.b16 %v4988
      %v5272 = vunpack.c.h.b16 %v4988
      %v5273 = vunpack.c.l.b16 %v4989
      %v5274 = vunpack.c.h.b16 %v4989
      %v5275 = vunpack.c.l.b16 %v4990
      %v5276 = vunpack.c.h.b16 %v4990
      %v5277 = vunpack.c.l.b16 %v4991
      %v5278 = vunpack.c.h.b16 %v4991
      %v5279 = vunpack.c.l.b16 %v4992
      %v5280 = vunpack.c.h.b16 %v4992
      %v5281 = vunpack.c.l.b16 %v4993
      %v5282 = vunpack.c.h.b16 %v4993
      %v5283 = vunpack.c.l.b16 %v4994
      %v5284 = vunpack.c.h.b16 %v4994
      %v5285 = vunpack.c.l.b16 %v4995
      %v5286 = vunpack.c.h.b16 %v4995
      %v5287 = vunpack.c.l.b16 %v4996
      %v5288 = vunpack.c.h.b16 %v4996
      %v5289 = vunpack.c.l.b16 %v4997
      %v5290 = vunpack.c.h.b16 %v4997
      %v5291 = vunpack.c.l.b16 %v4998
      %v5292 = vunpack.c.h.b16 %v4998
      %v5293 = vunpack.c.l.b16 %v4999
      %v5294 = vunpack.c.h.b16 %v4999
      %v5295 = vunpack.c.l.b16 %v5000
      %v5296 = vunpack.c.h.b16 %v5000
      %v5297 = vunpack.c.l.b16 %v5001
      %v5298 = vunpack.c.h.b16 %v5001
      %v5299 = vunpack.c.l.b16 %v5002
      %v5300 = vunpack.c.h.b16 %v5002
      %v5301 = vunpack.c.l.b16 %v5003
      %v5302 = vunpack.c.h.b16 %v5003
      %v5303 = vunpack.c.l.b16 %v5004
      %v5304 = vunpack.c.h.b16 %v5004
      %v5305 = vpack.c.b16 %v5115, %v5113
      %v5306 = vpack.c.b16 %v5116, %v5114
      %v5307 = vpack.c.b16 %v5119, %v5117
      %v5308 = vpack.c.b16 %v5120, %v5118
      %v5309 = vpack.c.b16 %v5123, %v5121
      %v5310 = vpack.c.b16 %v5124, %v5122
      %v5311 = vpack.c.b16 %v5127, %v5125
      %v5312 = vpack.c.b16 %v5128, %v5126
      %v5313 = vpack.c.b16 %v5131, %v5129
      %v5314 = vpack.c.b16 %v5132, %v5130
      %v5315 = vpack.c.b16 %v5135, %v5133
      %v5316 = vpack.c.b16 %v5136, %v5134
      %v5317 = vpack.c.b16 %v5139, %v5137
      %v5318 = vpack.c.b16 %v5140, %v5138
      %v5319 = vpack.c.b16 %v5143, %v5141
      %v5320 = vpack.c.b16 %v5144, %v5142
      %v5321 = vpack.c.b16 %v5147, %v5145
      %v5322 = vpack.c.b16 %v5148, %v5146
      %v5323 = vpack.c.b16 %v5151, %v5149
      %v5324 = vpack.c.b16 %v5152, %v5150
      %v5325 = vpack.c.b16 %v5155, %v5153
      %v5326 = vpack.c.b16 %v5156, %v5154
      %v5327 = vpack.c.b16 %v5159, %v5157
      %v5328 = vpack.c.b16 %v5160, %v5158
      %v5329 = vpack.c.b16 %v5163, %v5161
      %v5330 = vpack.c.b16 %v5164, %v5162
      %v5331 = vpack.c.b16 %v5167, %v5165
      %v5332 = vpack.c.b16 %v5168, %v5166
      %v5333 = vpack.c.b16 %v5171, %v5169
      %v5334 = vpack.c.b16 %v5172, %v5170
      %v5335 = vpack.c.b16 %v5175, %v5173
      %v5336 = vpack.c.b16 %v5176, %v5174
      %v5337 = vpack.c.b16 %v5179, %v5177
      %v5338 = vpack.c.b16 %v5180, %v5178
      %v5339 = vpack.c.b16 %v5183, %v5181
      %v5340 = vpack.c.b16 %v5184, %v5182
      %v5341 = vpack.c.b16 %v5187, %v5185
      %v5342 = vpack.c.b16 %v5188, %v5186
      %v5343 = vpack.c.b16 %v5191, %v5189
      %v5344 = vpack.c.b16 %v5192, %v5190
      %v5345 = vpack.c.b16 %v5195, %v5193
      %v5346 = vpack.c.b16 %v5196, %v5194
      %v5347 = vpack.c.b16 %v5199, %v5197
      %v5348 = vpack.c.b16 %v5200, %v5198
      %v5349 = vpack.c.b16 %v5203, %v5201
      %v5350 = vpack.c.b16 %v5204, %v5202
      %v5351 = vpack.c.b16 %v5207, %v5205
      %v5352 = vpack.c.b16 %v5208, %v5206
      %v5353 = vpack.c.b16 %v5211, %v5209
      %v5354 = vpack.c.b16 %v5212, %v5210
      %v5355 = vpack.c.b16 %v5215, %v5213
      %v5356 = vpack.c.b16 %v5216, %v5214
      %v5357 = vpack.c.b16 %v5219, %v5217
      %v5358 = vpack.c.b16 %v5220, %v5218
      %v5359 = vpack.c.b16 %v5223, %v5221
      %v5360 = vpack.c.b16 %v5224, %v5222
      %v5361 = vpack.c.b16 %v5227, %v5225
      %v5362 = vpack.c.b16 %v5228, %v5226
      %v5363 = vpack.c.b16 %v5231, %v5229
      %v5364 = vpack.c.b16 %v5232, %v5230
      %v5365 = vpack.c.b16 %v5235, %v5233
      %v5366 = vpack.c.b16 %v5236, %v5234
      %v5367 = vpack.c.b16 %v5239, %v5237
      %v5368 = vpack.c.b16 %v5240, %v5238
      %v5369 = vpack.c.b16 %v5243, %v5241
      %v5370 = vpack.c.b16 %v5244, %v5242
      %v5371 = vpack.c.b16 %v5247, %v5245
      %v5372 = vpack.c.b16 %v5248, %v5246
      %v5373 = vpack.c.b16 %v5251, %v5249
      %v5374 = vpack.c.b16 %v5252, %v5250
      %v5375 = vpack.c.b16 %v5255, %v5253
      %v5376 = vpack.c.b16 %v5256, %v5254
      %v5377 = vpack.c.b16 %v5259, %v5257
      %v5378 = vpack.c.b16 %v5260, %v5258
      %v5379 = vpack.c.b16 %v5263, %v5261
      %v5380 = vpack.c.b16 %v5264, %v5262
      %v5381 = vpack.c.b16 %v5267, %v5265
      %v5382 = vpack.c.b16 %v5268, %v5266
      %v5383 = vpack.c.b16 %v5271, %v5269
      %v5384 = vpack.c.b16 %v5272, %v5270
      %v5385 = vpack.c.b16 %v5275, %v5273
      %v5386 = vpack.c.b16 %v5276, %v5274
      %v5387 = vpack.c.b16 %v5279, %v5277
      %v5388 = vpack.c.b16 %v5280, %v5278
      %v5389 = vpack.c.b16 %v5283, %v5281
      %v5390 = vpack.c.b16 %v5284, %v5282
      %v5391 = vpack.c.b16 %v5287, %v5285
      %v5392 = vpack.c.b16 %v5288, %v5286
      %v5393 = vpack.c.b16 %v5291, %v5289
      %v5394 = vpack.c.b16 %v5292, %v5290
      %v5395 = vpack.c.b16 %v5295, %v5293
      %v5396 = vpack.c.b16 %v5296, %v5294
      %v5397 = vpack.c.b16 %v5299, %v5297
      %v5398 = vpack.c.b16 %v5300, %v5298
      %v5399 = vpack.c.b16 %v5303, %v5301
      %v5400 = vpack.c.b16 %v5304, %v5302
      %5497 = vmatprep.subr.bf16.mxu0 %v5306
      %5498 = vmatpush1.bf16.msra.mxu0 %v5305
      %5499 = vmatprep.subr.bf16.mxu0 %v5308
      %5500 = vmatpush1.bf16.msra.mxu0 %v5307
      %5501 = vmatprep.subr.bf16.mxu0 %v5310
      %5502 = vmatpush1.bf16.msra.mxu0 %v5309
      %5503 = vmatprep.subr.bf16.mxu0 %v5312
      %5504 = vmatpush1.bf16.msra.mxu0 %v5311
      %5505 = vmatprep.subr.bf16.mxu0 %v5314
      %5506 = vmatpush1.bf16.msra.mxu0 %v5313
      %5507 = vmatprep.subr.bf16.mxu0 %v5316
      %5508 = vmatpush1.bf16.msra.mxu0 %v5315
      %5509 = vmatprep.subr.bf16.mxu0 %v5318
      %5510 = vmatpush1.bf16.msra.mxu0 %v5317
      %5511 = vmatprep.subr.bf16.mxu0 %v5320
      %5512 = vmatpush1.bf16.msra.mxu0 %v5319
      %5513 = vmatprep.subr.bf16.mxu0 %v5322
      %5514 = vmatpush1.bf16.msra.mxu0 %v5321
      %5515 = vmatprep.subr.bf16.mxu0 %v5324
      %5516 = vmatpush1.bf16.msra.mxu0 %v5323
      %5517 = vmatprep.subr.bf16.mxu0 %v5326
      %5518 = vmatpush1.bf16.msra.mxu0 %v5325
      %5519 = vmatprep.subr.bf16.mxu0 %v5328
      %5520 = vmatpush1.bf16.msra.mxu0 %v5327
      %5521 = vmatprep.subr.bf16.mxu0 %v5330
      %5522 = vmatpush1.bf16.msra.mxu0 %v5329
      %5523 = vmatprep.subr.bf16.mxu0 %v5332
      %5524 = vmatpush1.bf16.msra.mxu0 %v5331
      %5525 = vmatprep.subr.bf16.mxu0 %v5334
      %5526 = vmatpush1.bf16.msra.mxu0 %v5333
      %5527 = vmatprep.subr.bf16.mxu0 %v5336
      %5528 = vmatpush1.bf16.msra.mxu0 %v5335
      %5529 = vmatprep.mubr.bf16.mxu0 %v4796
      %5530 = vmatmul.mubr.bf16.gmra.mrb[0].mxu0 %v4795
      %v5531 = vpop.f32.mrb[0].mxu0
      %v5532 = vadd.f32 %v5010, %v5531
      %v5533 = vpop.f32.mrb[0].mxu0
      %v5534 = vadd.f32 %v5014, %v5533
      %v5535 = vpop.f32.mrb[0].mxu0
      %v5536 = vadd.f32 %v5010, %v5535
      %v5537 = vpop.f32.mrb[0].mxu0
      %v5538 = vadd.f32 %v5014, %v5537
      %5539 = vdwg.mxu0
      %5540 = vmatprep.subr.bf16.mxu0 %v5338
      %5541 = vmatpush1.bf16.msra.mxu0 %v5337
      %5542 = vmatprep.subr.bf16.mxu0 %v5340
      %5543 = vmatpush1.bf16.msra.mxu0 %v5339
      %5544 = vmatprep.subr.bf16.mxu0 %v5342
      %5545 = vmatpush1.bf16.msra.mxu0 %v5341
      %5546 = vmatprep.subr.bf16.mxu0 %v5344
      %5547 = vmatpush1.bf16.msra.mxu0 %v5343
      %5548 = vmatprep.subr.bf16.mxu0 %v5346
      %5549 = vmatpush1.bf16.msra.mxu0 %v5345
      %5550 = vmatprep.subr.bf16.mxu0 %v5348
      %5551 = vmatpush1.bf16.msra.mxu0 %v5347
      %5552 = vmatprep.subr.bf16.mxu0 %v5350
      %5553 = vmatpush1.bf16.msra.mxu0 %v5349
      %5554 = vmatprep.subr.bf16.mxu0 %v5352
      %5555 = vmatpush1.bf16.msra.mxu0 %v5351
      %5556 = vmatprep.subr.bf16.mxu0 %v5354
      %5557 = vmatpush1.bf16.msra.mxu0 %v5353
      %5558 = vmatprep.subr.bf16.mxu0 %v5356
      %5559 = vmatpush1.bf16.msra.mxu0 %v5355
      %5560 = vmatprep.subr.bf16.mxu0 %v5358
      %5561 = vmatpush1.bf16.msra.mxu0 %v5357
      %5562 = vmatprep.subr.bf16.mxu0 %v5360
      %5563 = vmatpush1.bf16.msra.mxu0 %v5359
      %5564 = vmatprep.subr.bf16.mxu0 %v5362
      %5565 = vmatpush1.bf16.msra.mxu0 %v5361
      %5566 = vmatprep.subr.bf16.mxu0 %v5364
      %5567 = vmatpush1.bf16.msra.mxu0 %v5363
      %5568 = vmatprep.subr.bf16.mxu0 %v5366
      %5569 = vmatpush1.bf16.msra.mxu0 %v5365
      %5570 = vmatprep.subr.bf16.mxu0 %v5368
      %5571 = vmatpush1.bf16.msra.mxu0 %v5367
      %5572 = vmatprep.mubr.bf16.mxu0 %v4852
      %5573 = vmatmul.mubr.bf16.gmra.mrb[0].mxu0 %v4851
      %v5574 = vpop.f32.mrb[0].mxu0
      %v5575 = vadd.f32 %v5532, %v5574
      %v5576 = vpop.f32.mrb[0].mxu0
      %v5577 = vadd.f32 %v5534, %v5576
      %v5578 = vpop.f32.mrb[0].mxu0
      %v5579 = vadd.f32 %v5536, %v5578
      %v5580 = vpop.f32.mrb[0].mxu0
      %v5581 = vadd.f32 %v5538, %v5580
      %5582 = vdwg.mxu0
      %5583 = vmatprep.subr.bf16.mxu0 %v5370
      %5584 = vmatpush1.bf16.msra.mxu0 %v5369
      %5585 = vmatprep.subr.bf16.mxu0 %v5372
      %5586 = vmatpush1.bf16.msra.mxu0 %v5371
      %5587 = vmatprep.subr.bf16.mxu0 %v5374
      %5588 = vmatpush1.bf16.msra.mxu0 %v5373
      %5589 = vmatprep.subr.bf16.mxu0 %v5376
      %5590 = vmatpush1.bf16.msra.mxu0 %v5375
      %5591 = vmatprep.subr.bf16.mxu0 %v5378
      %5592 = vmatpush1.bf16.msra.mxu0 %v5377
      %5593 = vmatprep.subr.bf16.mxu0 %v5380
      %5594 = vmatpush1.bf16.msra.mxu0 %v5379
      %5595 = vmatprep.subr.bf16.mxu0 %v5382
      %5596 = vmatpush1.bf16.msra.mxu0 %v5381
      %5597 = vmatprep.subr.bf16.mxu0 %v5384
      %5598 = vmatpush1.bf16.msra.mxu0 %v5383
      %5599 = vmatprep.subr.bf16.mxu0 %v5386
      %5600 = vmatpush1.bf16.msra.mxu0 %v5385
      %5601 = vmatprep.subr.bf16.mxu0 %v5388
      %5602 = vmatpush1.bf16.msra.mxu0 %v5387
      %5603 = vmatprep.subr.bf16.mxu0 %v5390
      %5604 = vmatpush1.bf16.msra.mxu0 %v5389
      %5605 = vmatprep.subr.bf16.mxu0 %v5392
      %5606 = vmatpush1.bf16.msra.mxu0 %v5391
      %5607 = vmatprep.subr.bf16.mxu0 %v5394
      %5608 = vmatpush1.bf16.msra.mxu0 %v5393
      %5609 = vmatprep.subr.bf16.mxu0 %v5396
      %5610 = vmatpush1.bf16.msra.mxu0 %v5395
      %5611 = vmatprep.subr.bf16.mxu0 %v5398
      %5612 = vmatpush1.bf16.msra.mxu0 %v5397
      %5613 = vmatprep.subr.bf16.mxu0 %v5400
      %5614 = vmatpush1.bf16.msra.mxu0 %v5399
      %5615 = vmatprep.mubr.bf16.mxu0 %v4908
      %5616 = vmatmul.mubr.bf16.gmra.mrb[0].mxu0 %v4907
      %v5617 = vpop.f32.mrb[0].mxu0
      %v5618 = vadd.f32 %v5575, %v5617
      %v5619 = vpop.f32.mrb[0].mxu0
      %v5620 = vadd.f32 %v5577, %v5619
      %v5621 = vpop.f32.mrb[0].mxu0
      %v5622 = vadd.f32 %v5579, %v5621
      %v5623 = vpop.f32.mrb[0].mxu0
      %v5624 = vadd.f32 %v5581, %v5623
      %5625 = vdwg.mxu0
      %v5626 = vmax.f32 %v5618, 0.0
      %v5627 = vmax.f32 %v5620, 0.0
      %v5628 = vmax.f32 %v5622, 0.0
      %v5629 = vmax.f32 %v5624, 0.0
      %v5630 = vpack.c.bf16 %v5628, %v5626
      %v5631 = vpack.c.bf16 %v5629, %v5627
      %v5632 = vld [vmem:[%s16] sm:$0xf]
      %v5633 = vld [vmem:[%s16 + $0x4] sm:$0xf]
      %v5634 = vld [vmem:[%s16 + $0x8] sm:$0xf]
      %v5635 = vld [vmem:[%s16 + $0xc] sm:$0xf]
      %v5640 = vunpack.c.l.b16 %v5632
      %v5641 = vunpack.c.l.b16 %v5633
      %v5642 = vunpack.c.l.b16 %v5634
      %v5643 = vunpack.c.l.b16 %v5635
      %v5644 = vpack.c.b16 %v5641, %v5640
      %v5645 = vpack.c.b16 %v5643, %v5642
      %v5647 = vsel %vm1175, %v5644, 0
      %v5650 = vsel %vm1175, %v5645, 0
      %5652 = vmatprep.subr.bf16.mxu0 %v5631
      %5653 = vmatpush1.bf16.msra.mxu0 %v5630
      %5654 = vmatprep.subr.bf16.mxu0 0
      %5655 = vmatpush1.bf16.msra.mxu0 0
      %5656 = vmatprep.subr.bf16.mxu0 0
      %5657 = vmatpush1.bf16.msra.mxu0 0
      %5658 = vmatprep.subr.bf16.mxu0 0
      %5659 = vmatpush1.bf16.msra.mxu0 0
      %5660 = vmatprep.subr.bf16.mxu0 0
      %5661 = vmatpush1.bf16.msra.mxu0 0
      %5662 = vmatprep.subr.bf16.mxu0 0
      %5663 = vmatpush1.bf16.msra.mxu0 0
      %5664 = vmatprep.subr.bf16.mxu0 0
      %5665 = vmatpush1.bf16.msra.mxu0 0
      %5666 = vmatprep.subr.bf16.mxu0 0
      %5667 = vmatpush1.bf16.msra.mxu0 0
      %5668 = vmatprep.subr.bf16.mxu0 0
      %5669 = vmatpush1.bf16.msra.mxu0 0
      %5670 = vmatprep.subr.bf16.mxu0 0
      %5671 = vmatpush1.bf16.msra.mxu0 0
      %5672 = vmatprep.subr.bf16.mxu0 0
      %5673 = vmatpush1.bf16.msra.mxu0 0
      %5674 = vmatprep.subr.bf16.mxu0 0
      %5675 = vmatpush1.bf16.msra.mxu0 0
      %5676 = vmatprep.subr.bf16.mxu0 0
      %5677 = vmatpush1.bf16.msra.mxu0 0
      %5678 = vmatprep.subr.bf16.mxu0 0
      %5679 = vmatpush1.bf16.msra.mxu0 0
      %5680 = vmatprep.subr.bf16.mxu0 0
      %5681 = vmatpush1.bf16.msra.mxu0 0
      %5682 = vmatprep.subr.bf16.mxu0 0
      %5683 = vmatpush1.bf16.msra.mxu0 0
      %5684 = vmatprep.mubr.bf16.mxu0 0
      %5685 = vmatmul.mubr.bf16.gmra.mrb[0].mxu0 %v5647
      %v5686 = vpop.f32.mrb[0].mxu0
      %v5687 = vadd.f32 0.0, %v5686
      %v5688 = vpop.f32.mrb[0].mxu0
      %v5689 = vadd.f32 0.0, %v5688
      %v5690 = vpop.f32.mrb[0].mxu0
      %v5691 = vadd.f32 0.0, %v5690
      %v5692 = vpop.f32.mrb[0].mxu0
      %v5693 = vadd.f32 0.0, %v5692
      %5694 = vmatprep.mubr.bf16.mxu0 0
      %5695 = vmatmul.mubr.bf16.gmra.mrb[0].mxu0 %v5650
      %v5696 = vpop.f32.mrb[0].mxu0
      %v5697 = vadd.f32 0.0, %v5696
      %v5698 = vpop.f32.mrb[0].mxu0
      %v5699 = vadd.f32 0.0, %v5698
      %v5700 = vpop.f32.mrb[0].mxu0
      %v5701 = vadd.f32 0.0, %v5700
      %v5702 = vpop.f32.mrb[0].mxu0
      %v5703 = vadd.f32 0.0, %v5702
      %5704 = vdwg.mxu0
      %v5705 = vpack.c.bf16 %v5691, %v5687
      %v5706 = vpack.c.bf16 %v5693, %v5689
      %v5707 = vpack.c.bf16 %v5701, %v5697
      %v5708 = vpack.c.bf16 %v5703, %v5699
      %s5709 = scalar_lea.vmem %s16, 16
      %v5710 = vld [vmem:[%s5709] sm:$0xf]
      %v5711 = vld [vmem:[%s5709 + $0x4] sm:$0xf]
      %v5712 = vld [vmem:[%s5709 + $0x8] sm:$0xf]
      %v5713 = vld [vmem:[%s5709 + $0xc] sm:$0xf]
      %v5718 = vunpack.c.l.b16 %v5710
      %v5719 = vunpack.c.l.b16 %v5711
      %v5720 = vunpack.c.l.b16 %v5712
      %v5721 = vunpack.c.l.b16 %v5713
      %v5722 = vpack.c.b16 %v5719, %v5718
      %v5723 = vpack.c.b16 %v5721, %v5720
      %v5725 = vsel %vm1175, %v5722, 0
      %v5728 = vsel %vm1175, %v5723, 0
      %5730 = vmatprep.subr.bf16.mxu0 %v5631
      %5731 = vmatpush1.bf16.msra.mxu0 %v5630
      %5732 = vmatprep.subr.bf16.mxu0 0
      %5733 = vmatpush1.bf16.msra.mxu0 0
      %5734 = vmatprep.subr.bf16.mxu0 0
      %5735 = vmatpush1.bf16.msra.mxu0 0
      %5736 = vmatprep.subr.bf16.mxu0 0
      %5737 = vmatpush1.bf16.msra.mxu0 0
      %5738 = vmatprep.subr.bf16.mxu0 0
      %5739 = vmatpush1.bf16.msra.mxu0 0
      %5740 = vmatprep.subr.bf16.mxu0 0
      %5741 = vmatpush1.bf16.msra.mxu0 0
      %5742 = vmatprep.subr.bf16.mxu0 0
      %5743 = vmatpush1.bf16.msra.mxu0 0
      %5744 = vmatprep.subr.bf16.mxu0 0
      %5745 = vmatpush1.bf16.msra.mxu0 0
      %5746 = vmatprep.subr.bf16.mxu0 0
      %5747 = vmatpush1.bf16.msra.mxu0 0
      %5748 = vmatprep.subr.bf16.mxu0 0
      %5749 = vmatpush1.bf16.msra.mxu0 0
      %5750 = vmatprep.subr.bf16.mxu0 0
      %5751 = vmatpush1.bf16.msra.mxu0 0
      %5752 = vmatprep.subr.bf16.mxu0 0
      %5753 = vmatpush1.bf16.msra.mxu0 0
      %5754 = vmatprep.subr.bf16.mxu0 0
      %5755 = vmatpush1.bf16.msra.mxu0 0
      %5756 = vmatprep.subr.bf16.mxu0 0
      %5757 = vmatpush1.bf16.msra.mxu0 0
      %5758 = vmatprep.subr.bf16.mxu0 0
      %5759 = vmatpush1.bf16.msra.mxu0 0
      %5760 = vmatprep.subr.bf16.mxu0 0
      %5761 = vmatpush1.bf16.msra.mxu0 0
      %5762 = vmatprep.mubr.bf16.mxu0 0
      %5763 = vmatmul.mubr.bf16.gmra.mrb[0].mxu0 %v5725
      %v5764 = vpop.f32.mrb[0].mxu0
      %v5765 = vadd.f32 0.0, %v5764
      %v5766 = vpop.f32.mrb[0].mxu0
      %v5767 = vadd.f32 0.0, %v5766
      %v5768 = vpop.f32.mrb[0].mxu0
      %v5769 = vadd.f32 0.0, %v5768
      %v5770 = vpop.f32.mrb[0].mxu0
      %v5771 = vadd.f32 0.0, %v5770
      %5772 = vmatprep.mubr.bf16.mxu0 0
      %5773 = vmatmul.mubr.bf16.gmra.mrb[0].mxu0 %v5728
      %v5774 = vpop.f32.mrb[0].mxu0
      %v5775 = vadd.f32 0.0, %v5774
      %v5776 = vpop.f32.mrb[0].mxu0
      %v5777 = vadd.f32 0.0, %v5776
      %v5778 = vpop.f32.mrb[0].mxu0
      %v5779 = vadd.f32 0.0, %v5778
      %v5780 = vpop.f32.mrb[0].mxu0
      %v5781 = vadd.f32 0.0, %v5780
      %5782 = vdwg.mxu0
      %v5783 = vpack.c.bf16 %v5769, %v5765
      %v5784 = vpack.c.bf16 %v5771, %v5767
      %v5785 = vpack.c.bf16 %v5779, %v5775
      %v5786 = vpack.c.bf16 %v5781, %v5777
      %s5787 = scalar_lea.vmem %s16, 32
      %v5788 = vld [vmem:[%s5787] sm:$0xf]
      %v5789 = vld [vmem:[%s5787 + $0x4] sm:$0xf]
      %v5790 = vld [vmem:[%s5787 + $0x8] sm:$0xf]
      %v5791 = vld [vmem:[%s5787 + $0xc] sm:$0xf]
      %v5796 = vunpack.c.l.b16 %v5788
      %v5797 = vunpack.c.l.b16 %v5789
      %v5798 = vunpack.c.l.b16 %v5790
      %v5799 = vunpack.c.l.b16 %v5791
      %v5800 = vpack.c.b16 %v5797, %v5796
      %v5801 = vpack.c.b16 %v5799, %v5798
      %v5803 = vsel %vm1175, %v5800, 0
      %v5806 = vsel %vm1175, %v5801, 0
      %5808 = vmatprep.subr.bf16.mxu0 %v5631
      %5809 = vmatpush1.bf16.msra.mxu0 %v5630
      %5810 = vmatprep.subr.bf16.mxu0 0
      %5811 = vmatpush1.bf16.msra.mxu0 0
      %5812 = vmatprep.subr.bf16.mxu0 0
      %5813 = vmatpush1.bf16.msra.mxu0 0
      %5814 = vmatprep.subr.bf16.mxu0 0
      %5815 = vmatpush1.bf16.msra.mxu0 0
      %5816 = vmatprep.subr.bf16.mxu0 0
      %5817 = vmatpush1.bf16.msra.mxu0 0
      %5818 = vmatprep.subr.bf16.mxu0 0
      %5819 = vmatpush1.bf16.msra.mxu0 0
      %5820 = vmatprep.subr.bf16.mxu0 0
      %5821 = vmatpush1.bf16.msra.mxu0 0
      %5822 = vmatprep.subr.bf16.mxu0 0
      %5823 = vmatpush1.bf16.msra.mxu0 0
      %5824 = vmatprep.subr.bf16.mxu0 0
      %5825 = vmatpush1.bf16.msra.mxu0 0
      %5826 = vmatprep.subr.bf16.mxu0 0
      %5827 = vmatpush1.bf16.msra.mxu0 0
      %5828 = vmatprep.subr.bf16.mxu0 0
      %5829 = vmatpush1.bf16.msra.mxu0 0
      %5830 = vmatprep.subr.bf16.mxu0 0
      %5831 = vmatpush1.bf16.msra.mxu0 0
      %5832 = vmatprep.subr.bf16.mxu0 0
      %5833 = vmatpush1.bf16.msra.mxu0 0
      %5834 = vmatprep.subr.bf16.mxu0 0
      %5835 = vmatpush1.bf16.msra.mxu0 0
      %5836 = vmatprep.subr.bf16.mxu0 0
      %5837 = vmatpush1.bf16.msra.mxu0 0
      %5838 = vmatprep.subr.bf16.mxu0 0
      %5839 = vmatpush1.bf16.msra.mxu0 0
      %5840 = vmatprep.mubr.bf16.mxu0 0
      %5841 = vmatmul.mubr.bf16.gmra.mrb[0].mxu0 %v5803
      %v5842 = vpop.f32.mrb[0].mxu0
      %v5843 = vadd.f32 0.0, %v5842
      %v5844 = vpop.f32.mrb[0].mxu0
      %v5845 = vadd.f32 0.0, %v5844
      %v5846 = vpop.f32.mrb[0].mxu0
      %v5847 = vadd.f32 0.0, %v5846
      %v5848 = vpop.f32.mrb[0].mxu0
      %v5849 = vadd.f32 0.0, %v5848
      %5850 = vmatprep.mubr.bf16.mxu0 0
      %5851 = vmatmul.mubr.bf16.gmra.mrb[0].mxu0 %v5806
      %v5852 = vpop.f32.mrb[0].mxu0
      %v5853 = vadd.f32 0.0, %v5852
      %v5854 = vpop.f32.mrb[0].mxu0
      %v5855 = vadd.f32 0.0, %v5854
      %v5856 = vpop.f32.mrb[0].mxu0
      %v5857 = vadd.f32 0.0, %v5856
      %v5858 = vpop.f32.mrb[0].mxu0
      %v5859 = vadd.f32 0.0, %v5858
      %5860 = vdwg.mxu0
      %v5861 = vpack.c.bf16 %v5847, %v5843
      %v5862 = vpack.c.bf16 %v5849, %v5845
      %v5863 = vpack.c.bf16 %v5857, %v5853
      %v5864 = vpack.c.bf16 %v5859, %v5855
      %v5865 = vld [vmem:[%s17] sm:$0xf]
      %v5866 = vld [vmem:[%s17 + $0x4] sm:$0xf]
      %v5867 = vld [vmem:[%s17 + $0x8] sm:$0xf]
      %v5868 = vld [vmem:[%s17 + $0xc] sm:$0xf]
      %v5869 = vld [vmem:[%s17 + $0x10] sm:$0xf]
      %v5870 = vld [vmem:[%s17 + $0x14] sm:$0xf]
      %v5871 = vld [vmem:[%s17 + $0x18] sm:$0xf]
      %v5872 = vld [vmem:[%s17 + $0x1c] sm:$0xf]
      %v5873 = vld [vmem:[%s17 + $0x20] sm:$0xf]
      %v5874 = vld [vmem:[%s17 + $0x24] sm:$0xf]
      %v5875 = vld [vmem:[%s17 + $0x28] sm:$0xf]
      %v5876 = vld [vmem:[%s17 + $0x2c] sm:$0xf]
      %v5877 = vld [vmem:[%s17 + $0x30] sm:$0xf]
      %v5878 = vld [vmem:[%s17 + $0x34] sm:$0xf]
      %v5879 = vld [vmem:[%s17 + $0x38] sm:$0xf]
      %v5880 = vld [vmem:[%s17 + $0x3c] sm:$0xf]
      %v5881 = vld [vmem:[%s17 + $0x40] sm:$0xf]
      %v5882 = vld [vmem:[%s17 + $0x44] sm:$0xf]
      %v5883 = vld [vmem:[%s17 + $0x48] sm:$0xf]
      %v5884 = vld [vmem:[%s17 + $0x4c] sm:$0xf]
      %v5885 = vld [vmem:[%s17 + $0x50] sm:$0xf]
      %v5886 = vld [vmem:[%s17 + $0x54] sm:$0xf]
      %v5887 = vld [vmem:[%s17 + $0x58] sm:$0xf]
      %v5888 = vld [vmem:[%s17 + $0x5c] sm:$0xf]
      %v5889 = vld [vmem:[%s17 + $0x60] sm:$0xf]
      %v5890 = vld [vmem:[%s17 + $0x64] sm:$0xf]
      %v5891 = vld [vmem:[%s17 + $0x68] sm:$0xf]
      %v5892 = vld [vmem:[%s17 + $0x6c] sm:$0xf]
      %v5893 = vld [vmem:[%s17 + $0x70] sm:$0xf]
      %v5894 = vld [vmem:[%s17 + $0x74] sm:$0xf]
      %v5895 = vld [vmem:[%s17 + $0x78] sm:$0xf]
      %v5896 = vld [vmem:[%s17 + $0x7c] sm:$0xf]
      %v5897 = vld [vmem:[%s17 + $0x80] sm:$0xf]
      %v5898 = vld [vmem:[%s17 + $0x84] sm:$0xf]
      %v5899 = vld [vmem:[%s17 + $0x88] sm:$0xf]
      %v5900 = vld [vmem:[%s17 + $0x8c] sm:$0xf]
      %v5901 = vld [vmem:[%s17 + $0x90] sm:$0xf]
      %v5902 = vld [vmem:[%s17 + $0x94] sm:$0xf]
      %v5903 = vld [vmem:[%s17 + $0x98] sm:$0xf]
      %v5904 = vld [vmem:[%s17 + $0x9c] sm:$0xf]
      %v5905 = vld [vmem:[%s17 + $0xa0] sm:$0xf]
      %v5906 = vld [vmem:[%s17 + $0xa4] sm:$0xf]
      %v5907 = vld [vmem:[%s17 + $0xa8] sm:$0xf]
      %v5908 = vld [vmem:[%s17 + $0xac] sm:$0xf]
      %v5909 = vld [vmem:[%s17 + $0xb0] sm:$0xf]
      %v5910 = vld [vmem:[%s17 + $0xb4] sm:$0xf]
      %v5911 = vld [vmem:[%s17 + $0xb8] sm:$0xf]
      %v5912 = vld [vmem:[%s17 + $0xbc] sm:$0xf]
      %v5913 = vld [vmem:[%s17 + $0xc0] sm:$0xf]
      %v5914 = vld [vmem:[%s17 + $0xc4] sm:$0xf]
      %v5915 = vld [vmem:[%s17 + $0xc8] sm:$0xf]
      %v5916 = vld [vmem:[%s17 + $0xcc] sm:$0xf]
      %v5917 = vld [vmem:[%s17 + $0xd0] sm:$0xf]
      %v5918 = vld [vmem:[%s17 + $0xd4] sm:$0xf]
      %v5919 = vld [vmem:[%s17 + $0xd8] sm:$0xf]
      %v5920 = vld [vmem:[%s17 + $0xdc] sm:$0xf]
      %v5921 = vld [vmem:[%s17 + $0xe0] sm:$0xf]
      %v5922 = vld [vmem:[%s17 + $0xe4] sm:$0xf]
      %v5923 = vld [vmem:[%s17 + $0xe8] sm:$0xf]
      %v5924 = vld [vmem:[%s17 + $0xec] sm:$0xf]
      %v5925 = vld [vmem:[%s17 + $0xf0] sm:$0xf]
      %v5926 = vld [vmem:[%s17 + $0xf4] sm:$0xf]
      %v5927 = vld [vmem:[%s17 + $0xf8] sm:$0xf]
      %v5928 = vld [vmem:[%s17 + $0xfc] sm:$0xf]
      %v5929 = vld [vmem:[%s17 + $0x100] sm:$0xf]
      %v5930 = vld [vmem:[%s17 + $0x104] sm:$0xf]
      %v5931 = vld [vmem:[%s17 + $0x108] sm:$0xf]
      %v5932 = vld [vmem:[%s17 + $0x10c] sm:$0xf]
      %v5933 = vld [vmem:[%s17 + $0x110] sm:$0xf]
      %v5934 = vld [vmem:[%s17 + $0x114] sm:$0xf]
      %v5935 = vld [vmem:[%s17 + $0x118] sm:$0xf]
      %v5936 = vld [vmem:[%s17 + $0x11c] sm:$0xf]
      %v5937 = vld [vmem:[%s17 + $0x120] sm:$0xf]
      %v5938 = vld [vmem:[%s17 + $0x124] sm:$0xf]
      %v5939 = vld [vmem:[%s17 + $0x128] sm:$0xf]
      %v5940 = vld [vmem:[%s17 + $0x12c] sm:$0xf]
      %v5941 = vld [vmem:[%s17 + $0x130] sm:$0xf]
      %v5942 = vld [vmem:[%s17 + $0x134] sm:$0xf]
      %v5943 = vld [vmem:[%s17 + $0x138] sm:$0xf]
      %v5944 = vld [vmem:[%s17 + $0x13c] sm:$0xf]
      %v5945 = vld [vmem:[%s17 + $0x140] sm:$0xf]
      %v5946 = vld [vmem:[%s17 + $0x144] sm:$0xf]
      %v5947 = vld [vmem:[%s17 + $0x148] sm:$0xf]
      %v5948 = vld [vmem:[%s17 + $0x14c] sm:$0xf]
      %v5949 = vld [vmem:[%s17 + $0x150] sm:$0xf]
      %v5950 = vld [vmem:[%s17 + $0x154] sm:$0xf]
      %v5951 = vld [vmem:[%s17 + $0x158] sm:$0xf]
      %v5952 = vld [vmem:[%s17 + $0x15c] sm:$0xf]
      %v5953 = vld [vmem:[%s17 + $0x160] sm:$0xf]
      %v5954 = vld [vmem:[%s17 + $0x164] sm:$0xf]
      %v5955 = vld [vmem:[%s17 + $0x168] sm:$0xf]
      %v5956 = vld [vmem:[%s17 + $0x16c] sm:$0xf]
      %v5957 = vld [vmem:[%s17 + $0x170] sm:$0xf]
      %v5958 = vld [vmem:[%s17 + $0x174] sm:$0xf]
      %v5959 = vld [vmem:[%s17 + $0x178] sm:$0xf]
      %v5960 = vld [vmem:[%s17 + $0x17c] sm:$0xf]
      %v5961 = vld [vmem:[%s18] sm:$0x1]
      %v5963 = vlaneseq
      %v5964 = vshrl.u32 %v5963, 7
      %v5965 = vsub.s32 0, %v5964
      %v5966 = vrot.slane %v5961, %v5965
      %v6064 = vunpack.c.l.b16 %v5865
      %v6065 = vunpack.c.l.b16 %v5866
      %v6066 = vunpack.c.l.b16 %v5867
      %v6067 = vunpack.c.l.b16 %v5868
      %v6068 = vunpack.c.l.b16 %v5869
      %v6069 = vunpack.c.l.b16 %v5870
      %v6070 = vunpack.c.l.b16 %v5871
      %v6071 = vunpack.c.l.b16 %v5872
      %v6072 = vunpack.c.l.b16 %v5873
      %v6073 = vunpack.c.l.b16 %v5874
      %v6074 = vunpack.c.l.b16 %v5875
      %v6075 = vunpack.c.l.b16 %v5876
      %v6076 = vunpack.c.l.b16 %v5877
      %v6077 = vunpack.c.l.b16 %v5878
      %v6078 = vunpack.c.l.b16 %v5879
      %v6079 = vunpack.c.l.b16 %v5880
      %v6080 = vunpack.c.l.b16 %v5881
      %v6081 = vunpack.c.l.b16 %v5882
      %v6082 = vunpack.c.l.b16 %v5883
      %v6083 = vunpack.c.l.b16 %v5884
      %v6084 = vunpack.c.l.b16 %v5885
      %v6085 = vunpack.c.l.b16 %v5886
      %v6086 = vunpack.c.l.b16 %v5887
      %v6087 = vunpack.c.l.b16 %v5888
      %v6088 = vunpack.c.l.b16 %v5889
      %v6089 = vunpack.c.l.b16 %v5890
      %v6090 = vunpack.c.l.b16 %v5891
      %v6091 = vunpack.c.l.b16 %v5892
      %v6092 = vunpack.c.l.b16 %v5893
      %v6093 = vunpack.c.l.b16 %v5894
      %v6094 = vunpack.c.l.b16 %v5895
      %v6095 = vunpack.c.l.b16 %v5896
      %v6096 = vunpack.c.l.b16 %v5897
      %v6097 = vunpack.c.l.b16 %v5898
      %v6098 = vunpack.c.l.b16 %v5899
      %v6099 = vunpack.c.l.b16 %v5900
      %v6100 = vunpack.c.l.b16 %v5901
      %v6101 = vunpack.c.l.b16 %v5902
      %v6102 = vunpack.c.l.b16 %v5903
      %v6103 = vunpack.c.l.b16 %v5904
      %v6104 = vunpack.c.l.b16 %v5905
      %v6105 = vunpack.c.l.b16 %v5906
      %v6106 = vunpack.c.l.b16 %v5907
      %v6107 = vunpack.c.l.b16 %v5908
      %v6108 = vunpack.c.l.b16 %v5909
      %v6109 = vunpack.c.l.b16 %v5910
      %v6110 = vunpack.c.l.b16 %v5911
      %v6111 = vunpack.c.l.b16 %v5912
      %v6112 = vunpack.c.l.b16 %v5913
      %v6113 = vunpack.c.l.b16 %v5914
      %v6114 = vunpack.c.l.b16 %v5915
      %v6115 = vunpack.c.l.b16 %v5916
      %v6116 = vunpack.c.l.b16 %v5917
      %v6117 = vunpack.c.l.b16 %v5918
      %v6118 = vunpack.c.l.b16 %v5919
      %v6119 = vunpack.c.l.b16 %v5920
      %v6120 = vunpack.c.l.b16 %v5921
      %v6121 = vunpack.c.l.b16 %v5922
      %v6122 = vunpack.c.l.b16 %v5923
      %v6123 = vunpack.c.l.b16 %v5924
      %v6124 = vunpack.c.l.b16 %v5925
      %v6125 = vunpack.c.l.b16 %v5926
      %v6126 = vunpack.c.l.b16 %v5927
      %v6127 = vunpack.c.l.b16 %v5928
      %v6128 = vunpack.c.l.b16 %v5929
      %v6129 = vunpack.c.l.b16 %v5930
      %v6130 = vunpack.c.l.b16 %v5931
      %v6131 = vunpack.c.l.b16 %v5932
      %v6132 = vunpack.c.l.b16 %v5933
      %v6133 = vunpack.c.l.b16 %v5934
      %v6134 = vunpack.c.l.b16 %v5935
      %v6135 = vunpack.c.l.b16 %v5936
      %v6136 = vunpack.c.l.b16 %v5937
      %v6137 = vunpack.c.l.b16 %v5938
      %v6138 = vunpack.c.l.b16 %v5939
      %v6139 = vunpack.c.l.b16 %v5940
      %v6140 = vunpack.c.l.b16 %v5941
      %v6141 = vunpack.c.l.b16 %v5942
      %v6142 = vunpack.c.l.b16 %v5943
      %v6143 = vunpack.c.l.b16 %v5944
      %v6144 = vunpack.c.l.b16 %v5945
      %v6145 = vunpack.c.l.b16 %v5946
      %v6146 = vunpack.c.l.b16 %v5947
      %v6147 = vunpack.c.l.b16 %v5948
      %v6148 = vunpack.c.l.b16 %v5949
      %v6149 = vunpack.c.l.b16 %v5950
      %v6150 = vunpack.c.l.b16 %v5951
      %v6151 = vunpack.c.l.b16 %v5952
      %v6152 = vunpack.c.l.b16 %v5953
      %v6153 = vunpack.c.l.b16 %v5954
      %v6154 = vunpack.c.l.b16 %v5955
      %v6155 = vunpack.c.l.b16 %v5956
      %v6156 = vunpack.c.l.b16 %v5957
      %v6157 = vunpack.c.l.b16 %v5958
      %v6158 = vunpack.c.l.b16 %v5959
      %v6159 = vunpack.c.l.b16 %v5960
      %v6160 = vpack.c.b16 %v6065, %v6064
      %v6161 = vpack.c.b16 %v6067, %v6066
      %v6162 = vpack.c.b16 %v6069, %v6068
      %v6163 = vpack.c.b16 %v6071, %v6070
      %v6164 = vpack.c.b16 %v6073, %v6072
      %v6165 = vpack.c.b16 %v6075, %v6074
      %v6166 = vpack.c.b16 %v6077, %v6076
      %v6167 = vpack.c.b16 %v6079, %v6078
      %v6168 = vpack.c.b16 %v6081, %v6080
      %v6169 = vpack.c.b16 %v6083, %v6082
      %v6170 = vpack.c.b16 %v6085, %v6084
      %v6171 = vpack.c.b16 %v6087, %v6086
      %v6172 = vpack.c.b16 %v6089, %v6088
      %v6173 = vpack.c.b16 %v6091, %v6090
      %v6174 = vpack.c.b16 %v6093, %v6092
      %v6175 = vpack.c.b16 %v6095, %v6094
      %v6176 = vpack.c.b16 %v6097, %v6096
      %v6177 = vpack.c.b16 %v6099, %v6098
      %v6178 = vpack.c.b16 %v6101, %v6100
      %v6179 = vpack.c.b16 %v6103, %v6102
      %v6180 = vpack.c.b16 %v6105, %v6104
      %v6181 = vpack.c.b16 %v6107, %v6106
      %v6182 = vpack.c.b16 %v6109, %v6108
      %v6183 = vpack.c.b16 %v6111, %v6110
      %v6184 = vpack.c.b16 %v6113, %v6112
      %v6185 = vpack.c.b16 %v6115, %v6114
      %v6186 = vpack.c.b16 %v6117, %v6116
      %v6187 = vpack.c.b16 %v6119, %v6118
      %v6188 = vpack.c.b16 %v6121, %v6120
      %v6189 = vpack.c.b16 %v6123, %v6122
      %v6190 = vpack.c.b16 %v6125, %v6124
      %v6191 = vpack.c.b16 %v6127, %v6126
      %v6192 = vpack.c.b16 %v6129, %v6128
      %v6193 = vpack.c.b16 %v6131, %v6130
      %v6194 = vpack.c.b16 %v6133, %v6132
      %v6195 = vpack.c.b16 %v6135, %v6134
      %v6196 = vpack.c.b16 %v6137, %v6136
      %v6197 = vpack.c.b16 %v6139, %v6138
      %v6198 = vpack.c.b16 %v6141, %v6140
      %v6199 = vpack.c.b16 %v6143, %v6142
      %v6200 = vpack.c.b16 %v6145, %v6144
      %v6201 = vpack.c.b16 %v6147, %v6146
      %v6202 = vpack.c.b16 %v6149, %v6148
      %v6203 = vpack.c.b16 %v6151, %v6150
      %v6204 = vpack.c.b16 %v6153, %v6152
      %v6205 = vpack.c.b16 %v6155, %v6154
      %v6206 = vpack.c.b16 %v6157, %v6156
      %v6207 = vpack.c.b16 %v6159, %v6158
      %6256 = vmatprep.subr.bf16.mxu0 0
      %6257 = vmatpush1.bf16.msra.mxu0 %v6160
      %6258 = vmatprep.subr.bf16.mxu0 0
      %6259 = vmatpush1.bf16.msra.mxu0 %v6161
      %6260 = vmatprep.subr.bf16.mxu0 0
      %6261 = vmatpush1.bf16.msra.mxu0 %v6162
      %6262 = vmatprep.subr.bf16.mxu0 0
      %6263 = vmatpush1.bf16.msra.mxu0 %v6163
      %6264 = vmatprep.subr.bf16.mxu0 0
      %6265 = vmatpush1.bf16.msra.mxu0 %v6164
      %6266 = vmatprep.subr.bf16.mxu0 0
      %6267 = vmatpush1.bf16.msra.mxu0 %v6165
      %6268 = vmatprep.subr.bf16.mxu0 0
      %6269 = vmatpush1.bf16.msra.mxu0 %v6166
      %6270 = vmatprep.subr.bf16.mxu0 0
      %6271 = vmatpush1.bf16.msra.mxu0 %v6167
      %6272 = vmatprep.subr.bf16.mxu0 0
      %6273 = vmatpush1.bf16.msra.mxu0 %v6168
      %6274 = vmatprep.subr.bf16.mxu0 0
      %6275 = vmatpush1.bf16.msra.mxu0 %v6169
      %6276 = vmatprep.subr.bf16.mxu0 0
      %6277 = vmatpush1.bf16.msra.mxu0 %v6170
      %6278 = vmatprep.subr.bf16.mxu0 0
      %6279 = vmatpush1.bf16.msra.mxu0 %v6171
      %6280 = vmatprep.subr.bf16.mxu0 0
      %6281 = vmatpush1.bf16.msra.mxu0 %v6172
      %6282 = vmatprep.subr.bf16.mxu0 0
      %6283 = vmatpush1.bf16.msra.mxu0 %v6173
      %6284 = vmatprep.subr.bf16.mxu0 0
      %6285 = vmatpush1.bf16.msra.mxu0 %v6174
      %6286 = vmatprep.subr.bf16.mxu0 0
      %6287 = vmatpush1.bf16.msra.mxu0 %v6175
      %6288 = vmatprep.mubr.bf16.mxu0 %v5706
      %6289 = vmatmul.mubr.bf16.gmra.mrb[0].mxu0 %v5705
      %v6290 = vpop.f32.mrb[0].mxu0
      %v6291 = vadd.f32 %v5966, %v6290
      %v6292 = vpop.f32.mrb[0].mxu0
      %v6293 = vpop.f32.mrb[0].mxu0
      %v6294 = vadd.f32 %v5966, %v6293
      %v6295 = vpop.f32.mrb[0].mxu0
      %6296 = vmatprep.mubr.bf16.mxu0 %v5708
      %6297 = vmatmul.mubr.bf16.gmra.mrb[0].mxu0 %v5707
      %v6298 = vpop.f32.mrb[0].mxu0
      %v6299 = vadd.f32 %v5966, %v6298
      %v6300 = vpop.f32.mrb[0].mxu0
      %v6301 = vpop.f32.mrb[0].mxu0
      %v6302 = vadd.f32 %v5966, %v6301
      %v6303 = vpop.f32.mrb[0].mxu0
      %6304 = vdwg.mxu0
      %6305 = vmatprep.subr.bf16.mxu0 0
      %6306 = vmatpush1.bf16.msra.mxu0 %v6176
      %6307 = vmatprep.subr.bf16.mxu0 0
      %6308 = vmatpush1.bf16.msra.mxu0 %v6177
      %6309 = vmatprep.subr.bf16.mxu0 0
      %6310 = vmatpush1.bf16.msra.mxu0 %v6178
      %6311 = vmatprep.subr.bf16.mxu0 0
      %6312 = vmatpush1.bf16.msra.mxu0 %v6179
      %6313 = vmatprep.subr.bf16.mxu0 0
      %6314 = vmatpush1.bf16.msra.mxu0 %v6180
      %6315 = vmatprep.subr.bf16.mxu0 0
      %6316 = vmatpush1.bf16.msra.mxu0 %v6181
      %6317 = vmatprep.subr.bf16.mxu0 0
      %6318 = vmatpush1.bf16.msra.mxu0 %v6182
      %6319 = vmatprep.subr.bf16.mxu0 0
      %6320 = vmatpush1.bf16.msra.mxu0 %v6183
      %6321 = vmatprep.subr.bf16.mxu0 0
      %6322 = vmatpush1.bf16.msra.mxu0 %v6184
      %6323 = vmatprep.subr.bf16.mxu0 0
      %6324 = vmatpush1.bf16.msra.mxu0 %v6185
      %6325 = vmatprep.subr.bf16.mxu0 0
      %6326 = vmatpush1.bf16.msra.mxu0 %v6186
      %6327 = vmatprep.subr.bf16.mxu0 0
      %6328 = vmatpush1.bf16.msra.mxu0 %v6187
      %6329 = vmatprep.subr.bf16.mxu0 0
      %6330 = vmatpush1.bf16.msra.mxu0 %v6188
      %6331 = vmatprep.subr.bf16.mxu0 0
      %6332 = vmatpush1.bf16.msra.mxu0 %v6189
      %6333 = vmatprep.subr.bf16.mxu0 0
      %6334 = vmatpush1.bf16.msra.mxu0 %v6190
      %6335 = vmatprep.subr.bf16.mxu0 0
      %6336 = vmatpush1.bf16.msra.mxu0 %v6191
      %6337 = vmatprep.mubr.bf16.mxu0 %v5784
      %6338 = vmatmul.mubr.bf16.gmra.mrb[0].mxu0 %v5783
      %v6339 = vpop.f32.mrb[0].mxu0
      %v6340 = vadd.f32 %v6291, %v6339
      %v6341 = vpop.f32.mrb[0].mxu0
      %v6342 = vpop.f32.mrb[0].mxu0
      %v6343 = vadd.f32 %v6294, %v6342
      %v6344 = vpop.f32.mrb[0].mxu0
      %6345 = vmatprep.mubr.bf16.mxu0 %v5786
      %6346 = vmatmul.mubr.bf16.gmra.mrb[0].mxu0 %v5785
      %v6347 = vpop.f32.mrb[0].mxu0
      %v6348 = vadd.f32 %v6299, %v6347
      %v6349 = vpop.f32.mrb[0].mxu0
      %v6350 = vpop.f32.mrb[0].mxu0
      %v6351 = vadd.f32 %v6302, %v6350
      %v6352 = vpop.f32.mrb[0].mxu0
      %6353 = vdwg.mxu0
      %6354 = vmatprep.subr.bf16.mxu0 0
      %6355 = vmatpush1.bf16.msra.mxu0 %v6192
      %6356 = vmatprep.subr.bf16.mxu0 0
      %6357 = vmatpush1.bf16.msra.mxu0 %v6193
      %6358 = vmatprep.subr.bf16.mxu0 0
      %6359 = vmatpush1.bf16.msra.mxu0 %v6194
      %6360 = vmatprep.subr.bf16.mxu0 0
      %6361 = vmatpush1.bf16.msra.mxu0 %v6195
      %6362 = vmatprep.subr.bf16.mxu0 0
      %6363 = vmatpush1.bf16.msra.mxu0 %v6196
      %6364 = vmatprep.subr.bf16.mxu0 0
      %6365 = vmatpush1.bf16.msra.mxu0 %v6197
      %6366 = vmatprep.subr.bf16.mxu0 0
      %6367 = vmatpush1.bf16.msra.mxu0 %v6198
      %6368 = vmatprep.subr.bf16.mxu0 0
      %6369 = vmatpush1.bf16.msra.mxu0 %v6199
      %6370 = vmatprep.subr.bf16.mxu0 0
      %6371 = vmatpush1.bf16.msra.mxu0 %v6200
      %6372 = vmatprep.subr.bf16.mxu0 0
      %6373 = vmatpush1.bf16.msra.mxu0 %v6201
      %6374 = vmatprep.subr.bf16.mxu0 0
      %6375 = vmatpush1.bf16.msra.mxu0 %v6202
      %6376 = vmatprep.subr.bf16.mxu0 0
      %6377 = vmatpush1.bf16.msra.mxu0 %v6203
      %6378 = vmatprep.subr.bf16.mxu0 0
      %6379 = vmatpush1.bf16.msra.mxu0 %v6204
      %6380 = vmatprep.subr.bf16.mxu0 0
      %6381 = vmatpush1.bf16.msra.mxu0 %v6205
      %6382 = vmatprep.subr.bf16.mxu0 0
      %6383 = vmatpush1.bf16.msra.mxu0 %v6206
      %6384 = vmatprep.subr.bf16.mxu0 0
      %6385 = vmatpush1.bf16.msra.mxu0 %v6207
      %6386 = vmatprep.mubr.bf16.mxu0 %v5862
      %6387 = vmatmul.mubr.bf16.gmra.mrb[0].mxu0 %v5861
      %v6388 = vpop.f32.mrb[0].mxu0
      %v6389 = vadd.f32 %v6340, %v6388
      %v6390 = vpop.f32.mrb[0].mxu0
      %v6391 = vpop.f32.mrb[0].mxu0
      %v6392 = vadd.f32 %v6343, %v6391
      %v6393 = vpop.f32.mrb[0].mxu0
      %6394 = vmatprep.mubr.bf16.mxu0 %v5864
      %6395 = vmatmul.mubr.bf16.gmra.mrb[0].mxu0 %v5863
      %v6396 = vpop.f32.mrb[0].mxu0
      %v6397 = vadd.f32 %v6348, %v6396
      %v6398 = vpop.f32.mrb[0].mxu0
      %v6399 = vpop.f32.mrb[0].mxu0
      %v6400 = vadd.f32 %v6351, %v6399
      %v6401 = vpop.f32.mrb[0].mxu0
      %6402 = vdwg.mxu0
      %v6403 = vtanh.pop %v6389
      %v6404 = vtanh.pop %v6392
      %v6405 = vtanh.pop %v6397
      %v6406 = vtanh.pop %v6400
      %6407 = vst [vmem:[%s604] sm:$0xff] %v6403
      %6408 = vst [vmem:[%s604 + $0x8] sm:$0xff] %v6404
      %6409 = vst [vmem:[%s604 + $0x10] sm:$0xff] %v6405
      %6410 = vst [vmem:[%s604 + $0x18] sm:$0xff] %v6406
      %s6411 = smul.u32 4, %s30
      %p6412 = scmp.lt.s32.totalorder %s6411, 7
      %s6413 = scalar_select %p6412, %s6411, 7
      %s6414 = smul.addr %s6413, 8
      %s6415 = scalar_lea.vmem %s19, %s6414
      // Predicated region
      $region97: #{forward.1} parent=95 // pred_check
        %p6416 = pneg %p452
      $region98: #{forward.1} parent=95 // pred_check_branch
        %6418 = sbr.rel (%p6416) target = $region100
      $region99: #{forward.1} parent=95 // pred_region
        %s6419 = smul.u32 4, %s30
      $region100: #{forward.1} parent=95 // pred_fallthru
        _
    $region96: #{forward.1} parent=5 // pred_fallthru
      _
    %p6420 = scmp.le.s32.totalorder 2, %s25
    // Predicated region
    $region101: #{forward.1} parent=5 // pred_check
      %p6421 = pneg %p6420
    $region102: #{forward.1} parent=5 // pred_check_branch
      %6423 = sbr.rel (%p6421) target = $region104
    $region103: #{forward.1} parent=5 // pred_region
      %s6424 = ssub.s32 %s25, 2
      // Predicated region
      $region105: #{forward.1} parent=103 // pred_check
        %p6425 = pneg %p458
      $region106: #{forward.1} parent=103 // pred_check_branch
        %6427 = sbr.rel (%p6425) target = $region108
      $region107: #{forward.1} parent=103 // pred_region
        %s6428 = smul.u32 4, %s31
        %p6429 = scmp.lt.s32.totalorder %s6428, 7
        %s6430 = scalar_select %p6429, %s6428, 7
        %s6431 = smul.addr %s6430, 8
        %s6432 = scalar_lea.vmem %s19, %s6431
      $region108: #{forward.1} parent=103 // pred_fallthru
        _
    $region104: #{forward.1} parent=5 // pred_fallthru
      _
  $region6: #{forward.1} parent=0 // loop_footer
    %s29 = sadd.s32 1, %s25
  $region7: #{forward.1} parent=0 // loop_footer_branch
    %24 = sbr.rel target = $region3
  $region8: #{forward.1} parent=0 // loop_exit
    _

</llo_original>
